<compile_context>
chip_gen: v7x
topology: tpu7x:2x2x1
jax: 0.10.0
libtpu: 0.0.40
codegen_flags: <defaults>
</compile_context>

<pallas_src>
import functools

import jax
import jax.numpy as jnp
from jax.experimental import pallas as pl
from jax.experimental.pallas import tpu as pltpu

EPS = 1e-5
PAD_NEG = -1e9      # spatial pad for the fused bn1+relu conv2 input -> relu -> 0
LANE = 128


# ---------------------------------------------------------------------------
# small helpers (wrapper side)
# ---------------------------------------------------------------------------
def _round_up(x, m):
    return (x + m - 1) // m * m


def _pad_dim(a, axis, size):
    if a.shape[axis] == size:
        return a
    pad = [(0, 0)] * a.ndim
    pad[axis] = (0, size - a.shape[axis])
    return jnp.pad(a, pad)


def _vmem_limit_bytes():
    """Generation-aware VMEM budget (3/4 of capacity, capped at 96 MiB)."""
    cap = 64 * 1024 * 1024            # conservative default (v7x per-core VMEM)
    try:
        cap = int(pltpu.get_tpu_info().vmem_capacity_bytes)
    except Exception:
        pass
    return min(cap * 3 // 4, 96 * 1024 * 1024)


def _split_planes(xp, s, Hn, Wn):
    """Stride-parity plane split (pure layout, ~1x bytes -- NOT im2col).

    Returns (N, s*s*Hc, Wc, C) where rows [p*Hc:(p+1)*Hc] hold parity plane
    p = a*s + b, i.e. xp[:, a::s, b::s, :].  Every 3x3 tap of a stride-s conv
    then becomes a *contiguous* (Hn, Wn) slice of one plane inside the kernel.
    """
    N, Hp, Wp, C = xp.shape
    off = (3 - 1) // s                               # max in-plane tap offset
    Hc, Wc = Hn + off, Wn + off
    xp = jnp.pad(xp, ((0, 0), (0, s * Hc - Hp), (0, s * Wc - Wp), (0, 0)))
    x6 = xp.reshape(N, Hc, s, Wc, s, C).transpose(0, 2, 4, 1, 3, 5)
    return x6.reshape(N, s * s * Hc, Wc, C), Hc, Wc


# ---------------------------------------------------------------------------
# kernel bodies
# ---------------------------------------------------------------------------
def _bn_from_stats(y, ssum, ssq, inv_m):
    """Training-mode BN (gamma=1, beta=0) from accumulated sum / sum-of-squares."""
    mean = ssum * inv_m
    var = jnp.maximum(ssq * inv_m - mean * mean, 0.0)   # guard E[x^2]-mean^2
    return (y - mean) * jax.lax.rsqrt(var + EPS)


def _make_conv_kernel(*, s, Hn, Wn, Hc, Cin_k, Cp, inv_m, cdt,
                      pre_act, use_norm, proj, with_bias):
    """3x3 conv as 9 shifted MXU matmuls over in-VMEM stride-parity planes.

    pre_act  : apply BN (from finalized sum/sumsq inputs) + ReLU to the input
               image on the fly (conv2); the PAD_NEG spatial pad maps to 0.
    proj     : additionally emit the fused 1x1 stride-s projection shortcut,
               reusing the already-loaded centre tap.
    use_norm : accumulate per-channel sum / sum-of-squares across the batch
               grid ("arbitrary" axis, pl.when init on step 0).
    """
    HW = Hn * Wn

    def kernel(*refs):
        i = 0
        x_ref = refs[i]; i += 1
        if pre_act and use_norm:
            sin_ref, qin_ref = refs[i], refs[i + 1]; i += 2
        w_ref = refs[i]; i += 1
        if proj:
            wsc_ref = refs[i]; i += 1
        if with_bias:
            b_ref = refs[i]; i += 1
            if proj:
                bsc_ref = refs[i]; i += 1
        y_ref = refs[i]; i += 1
        if proj:
            sc_ref = refs[i]; i += 1
        if use_norm:
            s_ref, q_ref = refs[i], refs[i + 1]; i += 2
            if proj:
                ssc_ref, qsc_ref = refs[i], refs[i + 1]; i += 2

        if use_norm:
            @pl.when(pl.program_id(0) == 0)
            def _init():
                s_ref[...] = jnp.zeros_like(s_ref)
                q_ref[...] = jnp.zeros_like(q_ref)
                if proj:
                    ssc_ref[...] = jnp.zeros_like(ssc_ref)
                    qsc_ref[...] = jnp.zeros_like(qsc_ref)

        if pre_act:
            img = x_ref[0].astype(jnp.float32)                 # (Hc, Wc, Cp)
            if use_norm:
                mean = sin_ref[...] * inv_m
                var = jnp.maximum(qin_ref[...] * inv_m - mean * mean, 0.0)
                img = (img - mean) * jax.lax.rsqrt(var + EPS)
            img = jnp.maximum(img, 0.0).astype(cdt)            # PAD_NEG -> 0

            def tap(kh, kw):
                return img[kh:kh + Hn, kw:kw + Wn, :].reshape(HW, Cin_k)
        else:
            def tap(kh, kw):
                r0 = ((kh % s) * s + (kw % s)) * Hc + kh // s
                c0 = kw // s
                return x_ref[0, r0:r0 + Hn, c0:c0 + Wn, :].reshape(HW, Cin_k)

        acc = jnp.zeros((HW, Cp), jnp.float32)
        ctr = None
        for kh in range(3):
            for kw in range(3):
                sl = tap(kh, kw)
                if proj and kh == 1 and kw == 1:
                    ctr = sl                                   # centre tap reuse
                acc = acc + jnp.dot(sl, w_ref[kh * 3 + kw],
                                    preferred_element_type=jnp.float32)
        if with_bias:
            acc = acc + b_ref[...]
        y_ref[0] = acc.astype(y_ref.dtype)
        if use_norm:
            s_ref[...] += jnp.sum(acc, axis=0, keepdims=True)
            q_ref[...] += jnp.sum(acc * acc, axis=0, keepdims=True)

        if proj:
            scv = jnp.dot(ctr, wsc_ref[...], preferred_element_type=jnp.float32)
            if with_bias:
                scv = scv + bsc_ref[...]
            sc_ref[0] = scv.astype(sc_ref.dtype)
            if use_norm:
                ssc_ref[...] += jnp.sum(scv, axis=0, keepdims=True)
                qsc_ref[...] += jnp.sum(scv * scv, axis=0, keepdims=True)

    return kernel


def _make_final_kernel(inv_m, use_norm, proj):
    """bn2 + (bn_sc | identity) shortcut add + ReLU."""
    if use_norm and proj:
        def kernel(y2_ref, s2_ref, q2_ref, sc_ref, ssc_ref, qsc_ref, o_ref):
            y2 = _bn_from_stats(y2_ref[0], s2_ref[...], q2_ref[...], inv_m)
            sc = _bn_from_stats(sc_ref[0], ssc_ref[...], qsc_ref[...], inv_m)
            o_ref[0] = jnp.maximum(y2 + sc, 0.0)
    elif use_norm:
        def kernel(y2_ref, s2_ref, q2_ref, sc_ref, o_ref):
            y2 = _bn_from_stats(y2_ref[0], s2_ref[...], q2_ref[...], inv_m)
            o_ref[0] = jnp.maximum(y2 + sc_ref[0], 0.0)
    else:
        def kernel(y2_ref, sc_ref, o_ref):
            o_ref[0] = jnp.maximum(y2_ref[0] + sc_ref[0], 0.0)
    return kernel


# ---------------------------------------------------------------------------
# public forward pass
# ---------------------------------------------------------------------------
@functools.partial(jax.jit, static_argnames=("stride", "use_norm", "compute_dtype"))
def residual_block(x_nchw, params, stride, use_norm=True,
                   compute_dtype=jnp.bfloat16):
    """Pallas implementation. x_nchw: (N, Cin, H, W) f32 -> (N, Cout, H', W')."""
    w1, b1 = params["w1"], params["b1"]
    w2, b2 = params["w2"], params["b2"]
    wsc, bsc = params["wsc"], params["bsc"]
    N, Cin, H, W = x_nchw.shape
    Cout = w1.shape[-1]
    s = int(stride)
    if s not in (1, 2):
        raise ValueError("stride must be 1 or 2")
    has_proj = (Cin != Cout)
    if not has_proj and s != 1:
        raise ValueError("identity shortcut requires stride == 1")

    cdt = compute_dtype
    with_bias = not use_norm          # pre-BN conv bias is a mathematical no-op
    Cp = _round_up(Cout, LANE)        # lane-dense output channels
    Hn = (H + 2 - 3) // s + 1
    Wn = (W + 2 - 3) // s + 1
    HW = Hn * Wn
    inv_m = 1.0 / float(N * HW)
    vmem = _vmem_limit_bytes()
    sem_acc = ("arbitrary",) if use_norm else ("parallel",)

    row_spec = pl.BlockSpec((1, HW, Cp), lambda n: (n, 0, 0))
    stat_spec = pl.BlockSpec((1, Cp), lambda n: (0, 0))
    stat_shape = jax.ShapeDtypeStruct((1, Cp), jnp.float32)
    y_cdt_shape = jax.ShapeDtypeStruct((N, HW, Cp), cdt)
    y_f32_shape = jax.ShapeDtypeStruct((N, HW, Cp), jnp.float32)

    # ---- wrapper layout glue (no FLOPs, ~1x input bytes) --------------------
    x = jnp.transpose(x_nchw, (0, 2, 3, 1)).astype(jnp.float32)   # NCHW -> NHWC
    xp = jnp.pad(x, ((0, 0), (1, 1), (1, 1), (0, 0))).astype(cdt)
    xpl, Hc1, Wc1 = _split_planes(xp, s, Hn, Wn)     # (N, s*s*Hc1, Wc1, Cin)

    w1k = _pad_dim(w1, 3, Cp).reshape(9, Cin, Cp).astype(cdt)
    w2k = _pad_dim(_pad_dim(w2, 2, Cp), 3, Cp).reshape(9, Cp, Cp).astype(cdt)
    wsck = _pad_dim(wsc, 3, Cp).reshape(Cin, Cp).astype(cdt)
    b1k = _pad_dim(b1.reshape(1, -1), 1, Cp).astype(jnp.float32)
    b2k = _pad_dim(b2.reshape(1, -1), 1, Cp).astype(jnp.float32)
    bsck = _pad_dim(bsc.reshape(1, -1), 1, Cp).astype(jnp.float32)

    # ---- kernel A: conv1 (3x3, stride s) + fused 1x1 projection + BN stats --
    in_specs = [pl.BlockSpec((1, s * s * Hc1, Wc1, Cin), lambda n: (n, 0, 0, 0)),
                pl.BlockSpec((9, Cin, Cp), lambda n: (0, 0, 0))]
    args = [xpl, w1k]
    if has_proj:
        in_specs.append(pl.BlockSpec((Cin, Cp), lambda n: (0, 0)))
        args.append(wsck)
    if with_bias:
        in_specs.append(stat_spec); args.append(b1k)
        if has_proj:
            in_specs.append(stat_spec); args.append(bsck)
    out_specs, out_shapes = [row_spec], [y_cdt_shape]
    if has_proj:
        out_specs.append(row_spec); out_shapes.append(y_f32_shape)
    if use_norm:
        n_stats = 4 if has_proj else 2
        out_specs += [stat_spec] * n_stats
        out_shapes += [stat_shape] * n_stats

    outs = pl.pallas_call(
        _make_conv_kernel(s=s, Hn=Hn, Wn=Wn, Hc=Hc1, Cin_k=Cin, Cp=Cp,
                          inv_m=inv_m, cdt=cdt, pre_act=False,
                          use_norm=use_norm, proj=has_proj, with_bias=with_bias),
        grid=(N,),
        in_specs=in_specs,
        out_specs=tuple(out_specs),
        out_shape=tuple(out_shapes),
        compiler_params=pltpu.CompilerParams(
            dimension_semantics=sem_acc, vmem_limit_bytes=vmem),
    )(*args)
    outs = outs if isinstance(outs, (tuple, list)) else (outs,)
    i = 0
    y1 = outs[i]; i += 1
    if has_proj:
        sc = outs[i]; i += 1
    if use_norm:
        s1, q1 = outs[i], outs[i + 1]; i += 2
        if has_proj:
            ssc, qsc = outs[i], outs[i + 1]; i += 2
    if not has_proj:
        # identity shortcut: x itself, channel-padded to the lane-dense width
        sc = _pad_dim(x.reshape(N, HW, Cin), 2, Cp)

    # ---- kernel C: conv2 (3x3, stride 1) with fused bn1 + ReLU + BN stats ---
    # y1 is spatially padded with PAD_NEG: relu(bn1(PAD_NEG)) == 0 reproduces
    # h1's zero padding with no extra elementwise pass / HBM round trip.
    y1p = jnp.pad(y1.reshape(N, Hn, Wn, Cp),
                  ((0, 0), (1, 1), (1, 1), (0, 0)), constant_values=PAD_NEG)

    in_specs = [pl.BlockSpec((1, Hn + 2, Wn + 2, Cp), lambda n: (n, 0, 0, 0))]
    args = [y1p]
    if use_norm:
        in_specs += [stat_spec, stat_spec]; args += [s1, q1]
    in_specs.append(pl.BlockSpec((9, Cp, Cp), lambda n: (0, 0, 0)))
    args.append(w2k)
    if with_bias:
        in_specs.append(stat_spec); args.append(b2k)
    out_specs, out_shapes = [row_spec], [y_f32_shape]
    if use_norm:
        out_specs += [stat_spec, stat_spec]
        out_shapes += [stat_shape, stat_shape]

    outs = pl.pallas_call(
        _make_conv_kernel(s=1, Hn=Hn, Wn=Wn, Hc=Hn + 2, Cin_k=Cp, Cp=Cp,
                          inv_m=inv_m, cdt=cdt, pre_act=True,
                          use_norm=use_norm, proj=False, with_bias=with_bias),
        grid=(N,),
        in_specs=in_specs,
        out_specs=tuple(out_specs),
        out_shape=tuple(out_shapes),
        compiler_params=pltpu.CompilerParams(
            dimension_semantics=sem_acc, vmem_limit_bytes=vmem),
    )(*args)
    outs = outs if isinstance(outs, (tuple, list)) else (outs,)
    y2 = outs[0]
    if use_norm:
        s2, q2 = outs[1], outs[2]

    # ---- kernel D: bn2 + (bn_sc | identity) shortcut add + ReLU -------------
    in_specs, args = [row_spec], [y2]
    if use_norm:
        in_specs += [stat_spec, stat_spec]; args += [s2, q2]
    in_specs.append(row_spec); args.append(sc)
    if use_norm and has_proj:
        in_specs += [stat_spec, stat_spec]; args += [ssc, qsc]

    out = pl.pallas_call(
        _make_final_kernel(inv_m, use_norm, has_proj),
        grid=(N,),
        in_specs=in_specs,
        out_specs=row_spec,
        out_shape=y_f32_shape,
        compiler_params=pltpu.CompilerParams(
            dimension_semantics=("parallel",), vmem_limit_bytes=vmem),
    )(*args)

    out = out[:, :, :Cout].reshape(N, Hn, Wn, Cout)
    return jnp.transpose(out, (0, 3, 1, 2))                       # -> NCHW


# ---------------------------------------------------------------------------
# pure-JAX reference (mirrors the PyTorch forward)
# ---------------------------------------------------------------------------
def ref_residual_block(x_nchw, params, stride, use_norm=True):
    w1, b1 = params["w1"], params["b1"]
    w2, b2 = params["w2"], params["b2"]
    wsc, bsc = params["wsc"], params["bsc"]
    Cin = x_nchw.shape[1]
    Cout = w1.shape[-1]
    x = jnp.transpose(x_nchw, (0, 2, 3, 1)).astype(jnp.float32)

    def conv(h, w, b, s, pad):
        y = jax.lax.conv_general_dilated(
            h, w, window_strides=(s, s), padding=((pad, pad), (pad, pad)),
            dimension_numbers=("NHWC", "HWIO", "NHWC"))
        return y + b

    def bn(y):
        if not use_norm:
            return y
        mu = jnp.mean(y, axis=(0, 1, 2), keepdims=True)
        var = jnp.mean(jnp.square(y - mu), axis=(0, 1, 2), keepdims=True)
        return (y - mu) * jax.lax.rsqrt(var + EPS)

    h = jax.nn.relu(bn(conv(x, w1, b1, stride, 1)))
    h = bn(conv(h, w2, b2, 1, 1))
    sc = bn(conv(x, wsc, bsc, stride, 0)) if Cin != Cout else x
    return jnp.transpose(jax.nn.relu(h + sc), (0, 3, 1, 2))


def _init_params(key, Cin, Cout):
    ks = jax.random.split(key, 6)
    return dict(
        w1=0.2 * jax.random.normal(ks[0], (3, 3, Cin, Cout), jnp.float32),
        b1=0.1 * jax.random.normal(ks[1], (Cout,), jnp.float32),
        w2=0.2 * jax.random.normal(ks[2], (3, 3, Cout, Cout), jnp.float32),
        b2=0.1 * jax.random.normal(ks[3], (Cout,), jnp.float32),
        wsc=0.2 * jax.random.normal(ks[4], (1, 1, Cin, Cout), jnp.float32),
        bsc=0.1 * jax.random.normal(ks[5], (Cout,), jnp.float32),
    )


if __name__ == "__main__":
    key = jax.random.PRNGKey(0)
    kp1, kp2, kx1, kx2 = jax.random.split(key, 4)

    # projection shortcut (Cin != Cout, stride 2)
    x1 = jax.random.normal(kx1, (2, 4, 16, 16), jnp.float32)
    prm1 = _init_params(kp1, 4, 8)
    # identity shortcut (Cin == Cout, stride 1)
    x2 = jax.random.normal(kx2, (2, 8, 16, 16), jnp.float32)
    prm2 = _init_params(kp2, 8, 8)

    # (name, x, params, stride, use_norm, compute_dtype, tolerance)
    cases = [
        ("proj/s2/bn/f32",     x1, prm1, 2, True,  jnp.float32,  1e-4),
        ("proj/s2/bn/bf16",    x1, prm1, 2, True,  jnp.bfloat16, 3e-2),
        ("id/s1/bn/f32",       x2, prm2, 1, True,  jnp.float32,  1e-4),
        ("id/s1/bn/bf16",      x2, prm2, 1, True,  jnp.bfloat16, 3e-2),
        ("proj/s2/nonorm/f32", x1, prm1, 2, False, jnp.float32,  1e-4),
        ("id/s1/nonorm/f32",   x2, prm2, 1, False, jnp.float32,  1e-4),
    ]
    for name, x, prm, s, un, dt, tol in cases:
        out = jax.block_until_ready(
            residual_block(x, prm, stride=s, use_norm=un, compute_dtype=dt))
        ref = ref_residual_block(x, prm, stride=s, use_norm=un)
        assert out.shape == ref.shape, (name, out.shape, ref.shape)
        assert jnp.allclose(out, ref, rtol=tol, atol=tol), \
            (name, float(jnp.max(jnp.abs(out - ref))))

    print("KERNEL_OK")
</pallas_src>

<mosaic_0001>
module attributes {stable_mosaic.version = 11 : i64} {
  func.func @kernel(%arg0: i32, %arg1: memref<1x36x9x4xf32, #tpu.memory_space<vmem>>, %arg2: memref<9x4x128xf32, #tpu.memory_space<vmem>>, %arg3: memref<4x128xf32, #tpu.memory_space<vmem>>, %arg4: memref<1x64x128xf32, #tpu.memory_space<vmem>>, %arg5: memref<1x64x128xf32, #tpu.memory_space<vmem>>, %arg6: memref<1x128xf32, #tpu.memory_space<vmem>>, %arg7: memref<1x128xf32, #tpu.memory_space<vmem>>, %arg8: memref<1x128xf32, #tpu.memory_space<vmem>>, %arg9: memref<1x128xf32, #tpu.memory_space<vmem>>) attributes {dimension_semantics = [#tpu.dimension_semantics<arbitrary>], iteration_bounds = array<i64: 2>, scalar_prefetch = 0 : i64, scratch_operands = 0 : i64, tpu.core_type = #tpu.core_type<tc>, window_params = [{transform_indices = @transform_0, window_bounds = array<i64: 1, 36, 9, 4>}, {pipeline_mode = #tpu.pipeline_mode<synchronous>, transform_indices = @transform_1, window_bounds = array<i64: 9, 4, 128>}, {pipeline_mode = #tpu.pipeline_mode<synchronous>, transform_indices = @transform_2, window_bounds = array<i64: 4, 128>}, {transform_indices = @transform_3, window_bounds = array<i64: 1, 64, 128>}, {transform_indices = @transform_4, window_bounds = array<i64: 1, 64, 128>}, {pipeline_mode = #tpu.pipeline_mode<synchronous>, transform_indices = @transform_5, window_bounds = array<i64: 1, 128>}, {pipeline_mode = #tpu.pipeline_mode<synchronous>, transform_indices = @transform_6, window_bounds = array<i64: 1, 128>}, {pipeline_mode = #tpu.pipeline_mode<synchronous>, transform_indices = @transform_7, window_bounds = array<i64: 1, 128>}, {pipeline_mode = #tpu.pipeline_mode<synchronous>, transform_indices = @transform_8, window_bounds = array<i64: 1, 128>}]} {
    %c0_i32 = arith.constant 0 : i32
    %0 = arith.cmpi eq, %arg0, %c0_i32 : i32
    %1 = arith.extui %0 : i1 to i32
    %c0_i32_0 = arith.constant 0 : i32
    %2 = arith.cmpi ne, %1, %c0_i32_0 : i32
    scf.if %2 {
      %cst_89 = arith.constant 0.000000e+00 : f32
      %97 = vector.broadcast %cst_89 : f32 to vector<1x128xf32>
      %c0_90 = arith.constant 0 : index
      %c0_91 = arith.constant 0 : index
      %98 = vector.load %arg6[%c0_90, %c0_91] : memref<1x128xf32, #tpu.memory_space<vmem>>, vector<1x128xf32>
      tpu.vector_store %arg6[%c0_90, %c0_91], %97 {strides = array<i32>} : memref<1x128xf32, #tpu.memory_space<vmem>>, vector<1x128xf32>,
      %cst_92 = arith.constant 0.000000e+00 : f32
      %99 = vector.broadcast %cst_92 : f32 to vector<1x128xf32>
      %c0_93 = arith.constant 0 : index
      %c0_94 = arith.constant 0 : index
      %100 = vector.load %arg7[%c0_93, %c0_94] : memref<1x128xf32, #tpu.memory_space<vmem>>, vector<1x128xf32>
      tpu.vector_store %arg7[%c0_93, %c0_94], %99 {strides = array<i32>} : memref<1x128xf32, #tpu.memory_space<vmem>>, vector<1x128xf32>,
      %cst_95 = arith.constant 0.000000e+00 : f32
      %101 = vector.broadcast %cst_95 : f32 to vector<1x128xf32>
      %c0_96 = arith.constant 0 : index
      %c0_97 = arith.constant 0 : index
      %102 = vector.load %arg8[%c0_96, %c0_97] : memref<1x128xf32, #tpu.memory_space<vmem>>, vector<1x128xf32>
      tpu.vector_store %arg8[%c0_96, %c0_97], %101 {strides = array<i32>} : memref<1x128xf32, #tpu.memory_space<vmem>>, vector<1x128xf32>,
      %cst_98 = arith.constant 0.000000e+00 : f32
      %103 = vector.broadcast %cst_98 : f32 to vector<1x128xf32>
      %c0_99 = arith.constant 0 : index
      %c0_100 = arith.constant 0 : index
      %104 = vector.load %arg9[%c0_99, %c0_100] : memref<1x128xf32, #tpu.memory_space<vmem>>, vector<1x128xf32>
      tpu.vector_store %arg9[%c0_99, %c0_100], %103 {strides = array<i32>} : memref<1x128xf32, #tpu.memory_space<vmem>>, vector<1x128xf32>,
    } else {
    }
    %cst = arith.constant 0.000000e+00 : f32
    %3 = vector.broadcast %cst : f32 to vector<64x128xf32>
    %c0 = arith.constant 0 : index
    %c0_1 = arith.constant 0 : index
    %c0_2 = arith.constant 0 : index
    %c0_3 = arith.constant 0 : index
    %4 = vector.load %arg1[%c0, %c0_1, %c0_2, %c0_3] : memref<1x36x9x4xf32, #tpu.memory_space<vmem>>, vector<1x8x8x4xf32>
    %5 = vector.shape_cast %4 : vector<1x8x8x4xf32> to vector<8x8x4xf32>
    %6 = vector.shape_cast %5 : vector<8x8x4xf32> to vector<64x4xf32>
    %c0_4 = arith.constant 0 : index
    %c0_5 = arith.constant 0 : index
    %c0_6 = arith.constant 0 : index
    %7 = vector.load %arg2[%c0_4, %c0_5, %c0_6] : memref<9x4x128xf32, #tpu.memory_space<vmem>>, vector<1x4x128xf32>
    %8 = vector.shape_cast %7 : vector<1x4x128xf32> to vector<4x128xf32>
    %cst_7 = arith.constant dense<0.000000e+00> : vector<64x128xf32>
    %9 = tpu.matmul %6, %8, %cst_7 {dimension_numbers = #tpu.dot_dimension_numbers<[1], [0], [0], [1], [0, 0, 1, 1], [], []>} : vector<64x4xf32>, vector<4x128xf32>, vector<64x128xf32> -> vector<64x128xf32>
    %10 = arith.addf %3, %9 : vector<64x128xf32>
    %c0_8 = arith.constant 0 : index
    %c9 = arith.constant 9 : index
    %c0_9 = arith.constant 0 : index
    %c0_10 = arith.constant 0 : index
    %11 = vector.load %arg1[%c0_8, %c9, %c0_9, %c0_10] : memref<1x36x9x4xf32, #tpu.memory_space<vmem>>, vector<1x8x8x4xf32>
    %12 = vector.shape_cast %11 : vector<1x8x8x4xf32> to vector<8x8x4xf32>
    %13 = vector.shape_cast %12 : vector<8x8x4xf32> to vector<64x4xf32>
    %c1 = arith.constant 1 : index
    %c0_11 = arith.constant 0 : index
    %c0_12 = arith.constant 0 : index
    %14 = vector.load %arg2[%c1, %c0_11, %c0_12] : memref<9x4x128xf32, #tpu.memory_space<vmem>>, vector<1x4x128xf32>
    %15 = vector.shape_cast %14 : vector<1x4x128xf32> to vector<4x128xf32>
    %cst_13 = arith.constant dense<0.000000e+00> : vector<64x128xf32>
    %16 = tpu.matmul %13, %15, %cst_13 {dimension_numbers = #tpu.dot_dimension_numbers<[1], [0], [0], [1], [0, 0, 1, 1], [], []>} : vector<64x4xf32>, vector<4x128xf32>, vector<64x128xf32> -> vector<64x128xf32>
    %17 = arith.addf %10, %16 : vector<64x128xf32>
    %c0_14 = arith.constant 0 : index
    %c0_15 = arith.constant 0 : index
    %c1_16 = arith.constant 1 : index
    %c0_17 = arith.constant 0 : index
    %18 = vector.load %arg1[%c0_14, %c0_15, %c1_16, %c0_17] : memref<1x36x9x4xf32, #tpu.memory_space<vmem>>, vector<1x8x8x4xf32>
    %19 = vector.shape_cast %18 : vector<1x8x8x4xf32> to vector<8x8x4xf32>
    %20 = vector.shape_cast %19 : vector<8x8x4xf32> to vector<64x4xf32>
    %c2 = arith.constant 2 : index
    %c0_18 = arith.constant 0 : index
    %c0_19 = arith.constant 0 : index
    %21 = vector.load %arg2[%c2, %c0_18, %c0_19] : memref<9x4x128xf32, #tpu.memory_space<vmem>>, vector<1x4x128xf32>
    %22 = vector.shape_cast %21 : vector<1x4x128xf32> to vector<4x128xf32>
    %cst_20 = arith.constant dense<0.000000e+00> : vector<64x128xf32>
    %23 = tpu.matmul %20, %22, %cst_20 {dimension_numbers = #tpu.dot_dimension_numbers<[1], [0], [0], [1], [0, 0, 1, 1], [], []>} : vector<64x4xf32>, vector<4x128xf32>, vector<64x128xf32> -> vector<64x128xf32>
    %24 = arith.addf %17, %23 : vector<64x128xf32>
    %c0_21 = arith.constant 0 : index
    %c18 = arith.constant 18 : index
    %c0_22 = arith.constant 0 : index
    %c0_23 = arith.constant 0 : index
    %25 = vector.load %arg1[%c0_21, %c18, %c0_22, %c0_23] : memref<1x36x9x4xf32, #tpu.memory_space<vmem>>, vector<1x8x8x4xf32>
    %26 = vector.shape_cast %25 : vector<1x8x8x4xf32> to vector<8x8x4xf32>
    %27 = vector.shape_cast %26 : vector<8x8x4xf32> to vector<64x4xf32>
    %c3 = arith.constant 3 : index
    %c0_24 = arith.constant 0 : index
    %c0_25 = arith.constant 0 : index
    %28 = vector.load %arg2[%c3, %c0_24, %c0_25] : memref<9x4x128xf32, #tpu.memory_space<vmem>>, vector<1x4x128xf32>
    %29 = vector.shape_cast %28 : vector<1x4x128xf32> to vector<4x128xf32>
    %cst_26 = arith.constant dense<0.000000e+00> : vector<64x128xf32>
    %30 = tpu.matmul %27, %29, %cst_26 {dimension_numbers = #tpu.dot_dimension_numbers<[1], [0], [0], [1], [0, 0, 1, 1], [], []>} : vector<64x4xf32>, vector<4x128xf32>, vector<64x128xf32> -> vector<64x128xf32>
    %31 = arith.addf %24, %30 : vector<64x128xf32>
    %c0_27 = arith.constant 0 : index
    %c27 = arith.constant 27 : index
    %c0_28 = arith.constant 0 : index
    %c0_29 = arith.constant 0 : index
    %32 = vector.load %arg1[%c0_27, %c27, %c0_28, %c0_29] : memref<1x36x9x4xf32, #tpu.memory_space<vmem>>, vector<1x8x8x4xf32>
    %33 = vector.shape_cast %32 : vector<1x8x8x4xf32> to vector<8x8x4xf32>
    %34 = vector.shape_cast %33 : vector<8x8x4xf32> to vector<64x4xf32>
    %c4 = arith.constant 4 : index
    %c0_30 = arith.constant 0 : index
    %c0_31 = arith.constant 0 : index
    %35 = vector.load %arg2[%c4, %c0_30, %c0_31] : memref<9x4x128xf32, #tpu.memory_space<vmem>>, vector<1x4x128xf32>
    %36 = vector.shape_cast %35 : vector<1x4x128xf32> to vector<4x128xf32>
    %cst_32 = arith.constant dense<0.000000e+00> : vector<64x128xf32>
    %37 = tpu.matmul %34, %36, %cst_32 {dimension_numbers = #tpu.dot_dimension_numbers<[1], [0], [0], [1], [0, 0, 1, 1], [], []>} : vector<64x4xf32>, vector<4x128xf32>, vector<64x128xf32> -> vector<64x128xf32>
    %38 = arith.addf %31, %37 : vector<64x128xf32>
    %c0_33 = arith.constant 0 : index
    %c18_34 = arith.constant 18 : index
    %c1_35 = arith.constant 1 : index
    %c0_36 = arith.constant 0 : index
    %39 = vector.load %arg1[%c0_33, %c18_34, %c1_35, %c0_36] : memref<1x36x9x4xf32, #tpu.memory_space<vmem>>, vector<1x8x8x4xf32>
    %40 = vector.shape_cast %39 : vector<1x8x8x4xf32> to vector<8x8x4xf32>
    %41 = vector.shape_cast %40 : vector<8x8x4xf32> to vector<64x4xf32>
    %c5 = arith.constant 5 : index
    %c0_37 = arith.constant 0 : index
    %c0_38 = arith.constant 0 : index
    %42 = vector.load %arg2[%c5, %c0_37, %c0_38] : memref<9x4x128xf32, #tpu.memory_space<vmem>>, vector<1x4x128xf32>
    %43 = vector.shape_cast %42 : vector<1x4x128xf32> to vector<4x128xf32>
    %cst_39 = arith.constant dense<0.000000e+00> : vector<64x128xf32>
    %44 = tpu.matmul %41, %43, %cst_39 {dimension_numbers = #tpu.dot_dimension_numbers<[1], [0], [0], [1], [0, 0, 1, 1], [], []>} : vector<64x4xf32>, vector<4x128xf32>, vector<64x128xf32> -> vector<64x128xf32>
    %45 = arith.addf %38, %44 : vector<64x128xf32>
    %c0_40 = arith.constant 0 : index
    %c1_41 = arith.constant 1 : index
    %c0_42 = arith.constant 0 : index
    %c0_43 = arith.constant 0 : index
    %46 = vector.load %arg1[%c0_40, %c1_41, %c0_42, %c0_43] : memref<1x36x9x4xf32, #tpu.memory_space<vmem>>, vector<1x8x8x4xf32>
    %47 = vector.shape_cast %46 : vector<1x8x8x4xf32> to vector<8x8x4xf32>
    %48 = vector.shape_cast %47 : vector<8x8x4xf32> to vector<64x4xf32>
    %c6 = arith.constant 6 : index
    %c0_44 = arith.constant 0 : index
    %c0_45 = arith.constant 0 : index
    %49 = vector.load %arg2[%c6, %c0_44, %c0_45] : memref<9x4x128xf32, #tpu.memory_space<vmem>>, vector<1x4x128xf32>
    %50 = vector.shape_cast %49 : vector<1x4x128xf32> to vector<4x128xf32>
    %cst_46 = arith.constant dense<0.000000e+00> : vector<64x128xf32>
    %51 = tpu.matmul %48, %50, %cst_46 {dimension_numbers = #tpu.dot_dimension_numbers<[1], [0], [0], [1], [0, 0, 1, 1], [], []>} : vector<64x4xf32>, vector<4x128xf32>, vector<64x128xf32> -> vector<64x128xf32>
    %52 = arith.addf %45, %51 : vector<64x128xf32>
    %c0_47 = arith.constant 0 : index
    %c10 = arith.constant 10 : index
    %c0_48 = arith.constant 0 : index
    %c0_49 = arith.constant 0 : index
    %53 = vector.load %arg1[%c0_47, %c10, %c0_48, %c0_49] : memref<1x36x9x4xf32, #tpu.memory_space<vmem>>, vector<1x8x8x4xf32>
    %54 = vector.shape_cast %53 : vector<1x8x8x4xf32> to vector<8x8x4xf32>
    %55 = vector.shape_cast %54 : vector<8x8x4xf32> to vector<64x4xf32>
    %c7 = arith.constant 7 : index
    %c0_50 = arith.constant 0 : index
    %c0_51 = arith.constant 0 : index
    %56 = vector.load %arg2[%c7, %c0_50, %c0_51] : memref<9x4x128xf32, #tpu.memory_space<vmem>>, vector<1x4x128xf32>
    %57 = vector.shape_cast %56 : vector<1x4x128xf32> to vector<4x128xf32>
    %cst_52 = arith.constant dense<0.000000e+00> : vector<64x128xf32>
    %58 = tpu.matmul %55, %57, %cst_52 {dimension_numbers = #tpu.dot_dimension_numbers<[1], [0], [0], [1], [0, 0, 1, 1], [], []>} : vector<64x4xf32>, vector<4x128xf32>, vector<64x128xf32> -> vector<64x128xf32>
    %59 = arith.addf %52, %58 : vector<64x128xf32>
    %c0_53 = arith.constant 0 : index
    %c1_54 = arith.constant 1 : index
    %c1_55 = arith.constant 1 : index
    %c0_56 = arith.constant 0 : index
    %60 = vector.load %arg1[%c0_53, %c1_54, %c1_55, %c0_56] : memref<1x36x9x4xf32, #tpu.memory_space<vmem>>, vector<1x8x8x4xf32>
    %61 = vector.shape_cast %60 : vector<1x8x8x4xf32> to vector<8x8x4xf32>
    %62 = vector.shape_cast %61 : vector<8x8x4xf32> to vector<64x4xf32>
    %c8 = arith.constant 8 : index
    %c0_57 = arith.constant 0 : index
    %c0_58 = arith.constant 0 : index
    %63 = vector.load %arg2[%c8, %c0_57, %c0_58] : memref<9x4x128xf32, #tpu.memory_space<vmem>>, vector<1x4x128xf32>
    %64 = vector.shape_cast %63 : vector<1x4x128xf32> to vector<4x128xf32>
    %cst_59 = arith.constant dense<0.000000e+00> : vector<64x128xf32>
    %65 = tpu.matmul %62, %64, %cst_59 {dimension_numbers = #tpu.dot_dimension_numbers<[1], [0], [0], [1], [0, 0, 1, 1], [], []>} : vector<64x4xf32>, vector<4x128xf32>, vector<64x128xf32> -> vector<64x128xf32>
    %66 = arith.addf %59, %65 : vector<64x128xf32>
    %c0_60 = arith.constant 0 : index
    %c0_61 = arith.constant 0 : index
    %c0_62 = arith.constant 0 : index
    %67 = vector.load %arg4[%c0_60, %c0_61, %c0_62] : memref<1x64x128xf32, #tpu.memory_space<vmem>>, vector<1x64x128xf32>
    %68 = vector.shape_cast %67 : vector<1x64x128xf32> to vector<64x128xf32>
    %69 = vector.shape_cast %66 : vector<64x128xf32> to vector<1x64x128xf32>
    tpu.vector_store %arg4[%c0_60, %c0_61, %c0_62], %69 {strides = array<i32>} : memref<1x64x128xf32, #tpu.memory_space<vmem>>, vector<1x64x128xf32>,
    %c0_63 = arith.constant 0 : index
    %c0_64 = arith.constant 0 : index
    %70 = vector.load %arg6[%c0_63, %c0_64] : memref<1x128xf32, #tpu.memory_space<vmem>>, vector<1x128xf32>
    %cst_65 = arith.constant dense<0.000000e+00> : vector<128xf32>
    %71 = vector.multi_reduction <add>, %66, %cst_65 [0] : vector<64x128xf32> to vector<128xf32>
    %72 = vector.shape_cast %71 : vector<128xf32> to vector<1x128xf32>
    %73 = arith.addf %70, %72 : vector<1x128xf32>
    %c0_66 = arith.constant 0 : index
    %c0_67 = arith.constant 0 : index
    %74 = vector.load %arg6[%c0_66, %c0_67] : memref<1x128xf32, #tpu.memory_space<vmem>>, vector<1x128xf32>
    tpu.vector_store %arg6[%c0_66, %c0_67], %73 {strides = array<i32>} : memref<1x128xf32, #tpu.memory_space<vmem>>, vector<1x128xf32>,
    %c0_68 = arith.constant 0 : index
    %c0_69 = arith.constant 0 : index
    %75 = vector.load %arg7[%c0_68, %c0_69] : memref<1x128xf32, #tpu.memory_space<vmem>>, vector<1x128xf32>
    %76 = arith.mulf %66, %66 : vector<64x128xf32>
    %cst_70 = arith.constant dense<0.000000e+00> : vector<128xf32>
    %77 = vector.multi_reduction <add>, %76, %cst_70 [0] : vector<64x128xf32> to vector<128xf32>
    %78 = vector.shape_cast %77 : vector<128xf32> to vector<1x128xf32>
    %79 = arith.addf %75, %78 : vector<1x128xf32>
    %c0_71 = arith.constant 0 : index
    %c0_72 = arith.constant 0 : index
    %80 = vector.load %arg7[%c0_71, %c0_72] : memref<1x128xf32, #tpu.memory_space<vmem>>, vector<1x128xf32>
    tpu.vector_store %arg7[%c0_71, %c0_72], %79 {strides = array<i32>} : memref<1x128xf32, #tpu.memory_space<vmem>>, vector<1x128xf32>,
    %c0_73 = arith.constant 0 : index
    %c0_74 = arith.constant 0 : index
    %81 = vector.load %arg3[%c0_73, %c0_74] : memref<4x128xf32, #tpu.memory_space<vmem>>, vector<4x128xf32>
    %cst_75 = arith.constant dense<0.000000e+00> : vector<64x128xf32>
    %82 = tpu.matmul %34, %81, %cst_75 {dimension_numbers = #tpu.dot_dimension_numbers<[1], [0], [0], [1], [0, 0, 1, 1], [], []>} : vector<64x4xf32>, vector<4x128xf32>, vector<64x128xf32> -> vector<64x128xf32>
    %c0_76 = arith.constant 0 : index
    %c0_77 = arith.constant 0 : index
    %c0_78 = arith.constant 0 : index
    %83 = vector.load %arg5[%c0_76, %c0_77, %c0_78] : memref<1x64x128xf32, #tpu.memory_space<vmem>>, vector<1x64x128xf32>
    %84 = vector.shape_cast %83 : vector<1x64x128xf32> to vector<64x128xf32>
    %85 = vector.shape_cast %82 : vector<64x128xf32> to vector<1x64x128xf32>
    tpu.vector_store %arg5[%c0_76, %c0_77, %c0_78], %85 {strides = array<i32>} : memref<1x64x128xf32, #tpu.memory_space<vmem>>, vector<1x64x128xf32>,
    %c0_79 = arith.constant 0 : index
    %c0_80 = arith.constant 0 : index
    %86 = vector.load %arg8[%c0_79, %c0_80] : memref<1x128xf32, #tpu.memory_space<vmem>>, vector<1x128xf32>
    %cst_81 = arith.constant dense<0.000000e+00> : vector<128xf32>
    %87 = vector.multi_reduction <add>, %82, %cst_81 [0] : vector<64x128xf32> to vector<128xf32>
    %88 = vector.shape_cast %87 : vector<128xf32> to vector<1x128xf32>
    %89 = arith.addf %86, %88 : vector<1x128xf32>
    %c0_82 = arith.constant 0 : index
    %c0_83 = arith.constant 0 : index
    %90 = vector.load %arg8[%c0_82, %c0_83] : memref<1x128xf32, #tpu.memory_space<vmem>>, vector<1x128xf32>
    tpu.vector_store %arg8[%c0_82, %c0_83], %89 {strides = array<i32>} : memref<1x128xf32, #tpu.memory_space<vmem>>, vector<1x128xf32>,
    %c0_84 = arith.constant 0 : index
    %c0_85 = arith.constant 0 : index
    %91 = vector.load %arg9[%c0_84, %c0_85] : memref<1x128xf32, #tpu.memory_space<vmem>>, vector<1x128xf32>
    %92 = arith.mulf %82, %82 : vector<64x128xf32>
    %cst_86 = arith.constant dense<0.000000e+00> : vector<128xf32>
    %93 = vector.multi_reduction <add>, %92, %cst_86 [0] : vector<64x128xf32> to vector<128xf32>
    %94 = vector.shape_cast %93 : vector<128xf32> to vector<1x128xf32>
    %95 = arith.addf %91, %94 : vector<1x128xf32>
    %c0_87 = arith.constant 0 : index
    %c0_88 = arith.constant 0 : index
    %96 = vector.load %arg9[%c0_87, %c0_88] : memref<1x128xf32, #tpu.memory_space<vmem>>, vector<1x128xf32>
    tpu.vector_store %arg9[%c0_87, %c0_88], %95 {strides = array<i32>} : memref<1x128xf32, #tpu.memory_space<vmem>>, vector<1x128xf32>,
    return
  }
  func.func @transform_0(%arg0: i32) -> (i32, i32, i32, i32) {
    %c0_i32 = arith.constant 0 : i32
    %c0_i32_0 = arith.constant 0 : i32
    %c0_i32_1 = arith.constant 0 : i32
    %c0_i32_2 = arith.constant 0 : i32
    return %arg0, %c0_i32, %c0_i32_0, %c0_i32_1 : i32, i32, i32, i32
  }
  func.func @transform_1(%arg0: i32) -> (i32, i32, i32) {
    %c0_i32 = arith.constant 0 : i32
    %c0_i32_0 = arith.constant 0 : i32
    %c0_i32_1 = arith.constant 0 : i32
    %c0_i32_2 = arith.constant 0 : i32
    return %c0_i32, %c0_i32_0, %c0_i32_1 : i32, i32, i32
  }
  func.func @transform_2(%arg0: i32) -> (i32, i32) {
    %c0_i32 = arith.constant 0 : i32
    %c0_i32_0 = arith.constant 0 : i32
    %c0_i32_1 = arith.constant 0 : i32
    return %c0_i32, %c0_i32_0 : i32, i32
  }
  func.func @transform_3(%arg0: i32) -> (i32, i32, i32) {
    %c0_i32 = arith.constant 0 : i32
    %c0_i32_0 = arith.constant 0 : i32
    %c0_i32_1 = arith.constant 0 : i32
    return %arg0, %c0_i32, %c0_i32_0 : i32, i32, i32
  }
  func.func @transform_4(%arg0: i32) -> (i32, i32, i32) {
    %c0_i32 = arith.constant 0 : i32
    %c0_i32_0 = arith.constant 0 : i32
    %c0_i32_1 = arith.constant 0 : i32
    return %arg0, %c0_i32, %c0_i32_0 : i32, i32, i32
  }
  func.func @transform_5(%arg0: i32) -> (i32, i32) {
    %c0_i32 = arith.constant 0 : i32
    %c0_i32_0 = arith.constant 0 : i32
    %c0_i32_1 = arith.constant 0 : i32
    return %c0_i32, %c0_i32_0 : i32, i32
  }
  func.func @transform_6(%arg0: i32) -> (i32, i32) {
    %c0_i32 = arith.constant 0 : i32
    %c0_i32_0 = arith.constant 0 : i32
    %c0_i32_1 = arith.constant 0 : i32
    return %c0_i32, %c0_i32_0 : i32, i32
  }
  func.func @transform_7(%arg0: i32) -> (i32, i32) {
    %c0_i32 = arith.constant 0 : i32
    %c0_i32_0 = arith.constant 0 : i32
    %c0_i32_1 = arith.constant 0 : i32
    return %c0_i32, %c0_i32_0 : i32, i32
  }
  func.func @transform_8(%arg0: i32) -> (i32, i32) {
    %c0_i32 = arith.constant 0 : i32
    %c0_i32_0 = arith.constant 0 : i32
    %c0_i32_1 = arith.constant 0 : i32
    return %c0_i32, %c0_i32_0 : i32, i32
  }
}

module attributes {stable_mosaic.version = 11 : i64} {
  func.func @kernel(%arg0: i32, %arg1: memref<1x10x10x128xf32, #tpu.memory_space<vmem>>, %arg2: memref<1x128xf32, #tpu.memory_space<vmem>>, %arg3: memref<1x128xf32, #tpu.memory_space<vmem>>, %arg4: memref<9x128x128xf32, #tpu.memory_space<vmem>>, %arg5: memref<1x64x128xf32, #tpu.memory_space<vmem>>, %arg6: memref<1x128xf32, #tpu.memory_space<vmem>>, %arg7: memref<1x128xf32, #tpu.memory_space<vmem>>) attributes {dimension_semantics = [#tpu.dimension_semantics<arbitrary>], iteration_bounds = array<i64: 2>, scalar_prefetch = 0 : i64, scratch_operands = 0 : i64, tpu.core_type = #tpu.core_type<tc>, window_params = [{transform_indices = @transform_0, window_bounds = array<i64: 1, 10, 10, 128>}, {pipeline_mode = #tpu.pipeline_mode<synchronous>, transform_indices = @transform_1, window_bounds = array<i64: 1, 128>}, {pipeline_mode = #tpu.pipeline_mode<synchronous>, transform_indices = @transform_2, window_bounds = array<i64: 1, 128>}, {pipeline_mode = #tpu.pipeline_mode<synchronous>, transform_indices = @transform_3, window_bounds = array<i64: 9, 128, 128>}, {transform_indices = @transform_4, window_bounds = array<i64: 1, 64, 128>}, {pipeline_mode = #tpu.pipeline_mode<synchronous>, transform_indices = @transform_5, window_bounds = array<i64: 1, 128>}, {pipeline_mode = #tpu.pipeline_mode<synchronous>, transform_indices = @transform_6, window_bounds = array<i64: 1, 128>}]} {
    %c0_i32 = arith.constant 0 : i32
    %0 = arith.cmpi eq, %arg0, %c0_i32 : i32
    %1 = arith.extui %0 : i1 to i32
    %c0_i32_0 = arith.constant 0 : i32
    %2 = arith.cmpi ne, %1, %c0_i32_0 : i32
    scf.if %2 {
      %cst_54 = arith.constant 0.000000e+00 : f32
      %95 = vector.broadcast %cst_54 : f32 to vector<1x128xf32>
      %c0_55 = arith.constant 0 : index
      %c0_56 = arith.constant 0 : index
      %96 = vector.load %arg6[%c0_55, %c0_56] : memref<1x128xf32, #tpu.memory_space<vmem>>, vector<1x128xf32>
      tpu.vector_store %arg6[%c0_55, %c0_56], %95 {strides = array<i32>} : memref<1x128xf32, #tpu.memory_space<vmem>>, vector<1x128xf32>,
      %cst_57 = arith.constant 0.000000e+00 : f32
      %97 = vector.broadcast %cst_57 : f32 to vector<1x128xf32>
      %c0_58 = arith.constant 0 : index
      %c0_59 = arith.constant 0 : index
      %98 = vector.load %arg7[%c0_58, %c0_59] : memref<1x128xf32, #tpu.memory_space<vmem>>, vector<1x128xf32>
      tpu.vector_store %arg7[%c0_58, %c0_59], %97 {strides = array<i32>} : memref<1x128xf32, #tpu.memory_space<vmem>>, vector<1x128xf32>,
    } else {
    }
    %c0 = arith.constant 0 : index
    %c0_1 = arith.constant 0 : index
    %c0_2 = arith.constant 0 : index
    %c0_3 = arith.constant 0 : index
    %3 = vector.load %arg1[%c0, %c0_1, %c0_2, %c0_3] : memref<1x10x10x128xf32, #tpu.memory_space<vmem>>, vector<1x10x10x128xf32>
    %4 = vector.shape_cast %3 : vector<1x10x10x128xf32> to vector<10x10x128xf32>
    %c0_4 = arith.constant 0 : index
    %c0_5 = arith.constant 0 : index
    %5 = vector.load %arg2[%c0_4, %c0_5] : memref<1x128xf32, #tpu.memory_space<vmem>>, vector<1x128xf32>
    %cst = arith.constant 7.812500e-03 : f32
    %6 = vector.broadcast %cst : f32 to vector<1x128xf32>
    %7 = arith.mulf %5, %6 : vector<1x128xf32>
    %c0_6 = arith.constant 0 : index
    %c0_7 = arith.constant 0 : index
    %8 = vector.load %arg3[%c0_6, %c0_7] : memref<1x128xf32, #tpu.memory_space<vmem>>, vector<1x128xf32>
    %cst_8 = arith.constant 7.812500e-03 : f32
    %9 = vector.broadcast %cst_8 : f32 to vector<1x128xf32>
    %10 = arith.mulf %8, %9 : vector<1x128xf32>
    %11 = arith.mulf %7, %7 : vector<1x128xf32>
    %12 = arith.subf %10, %11 : vector<1x128xf32>
    %cst_9 = arith.constant 0.000000e+00 : f32
    %13 = vector.broadcast %cst_9 : f32 to vector<1x128xf32>
    %14 = arith.maximumf %12, %13 : vector<1x128xf32>
    %15 = vector.shape_cast %7 : vector<1x128xf32> to vector<1x1x128xf32>
    %16 = vector.broadcast %15 : vector<1x1x128xf32> to vector<10x10x128xf32>
    %17 = arith.subf %4, %16 : vector<10x10x128xf32>
    %cst_10 = arith.constant 9.99999974E-6 : f32
    %18 = vector.broadcast %cst_10 : f32 to vector<1x128xf32>
    %19 = arith.addf %14, %18 : vector<1x128xf32>
    %20 = math.rsqrt %19 : vector<1x128xf32>
    %21 = vector.shape_cast %20 : vector<1x128xf32> to vector<1x1x128xf32>
    %22 = vector.broadcast %21 : vector<1x1x128xf32> to vector<10x10x128xf32>
    %23 = arith.mulf %17, %22 : vector<10x10x128xf32>
    %cst_11 = arith.constant 0.000000e+00 : f32
    %24 = vector.broadcast %cst_11 : f32 to vector<10x10x128xf32>
    %25 = arith.maximumf %23, %24 : vector<10x10x128xf32>
    %cst_12 = arith.constant 0.000000e+00 : f32
    %26 = vector.broadcast %cst_12 : f32 to vector<64x128xf32>
    %27 = vector.extract_strided_slice %25 {offsets = [0, 0, 0], sizes = [8, 8, 128], strides = [1, 1, 1]} : vector<10x10x128xf32> to vector<8x8x128xf32>
    %28 = vector.shape_cast %27 : vector<8x8x128xf32> to vector<64x128xf32>
    %c0_13 = arith.constant 0 : index
    %c0_14 = arith.constant 0 : index
    %c0_15 = arith.constant 0 : index
    %29 = vector.load %arg4[%c0_13, %c0_14, %c0_15] : memref<9x128x128xf32, #tpu.memory_space<vmem>>, vector<1x128x128xf32>
    %30 = vector.shape_cast %29 : vector<1x128x128xf32> to vector<128x128xf32>
    %cst_16 = arith.constant dense<0.000000e+00> : vector<64x128xf32>
    %31 = tpu.matmul %28, %30, %cst_16 {dimension_numbers = #tpu.dot_dimension_numbers<[1], [0], [0], [1], [0, 0, 1, 1], [], []>} : vector<64x128xf32>, vector<128x128xf32>, vector<64x128xf32> -> vector<64x128xf32>
    %32 = arith.addf %26, %31 : vector<64x128xf32>
    %33 = vector.extract_strided_slice %25 {offsets = [0, 1, 0], sizes = [8, 8, 128], strides = [1, 1, 1]} : vector<10x10x128xf32> to vector<8x8x128xf32>
    %34 = vector.shape_cast %33 : vector<8x8x128xf32> to vector<64x128xf32>
    %c1 = arith.constant 1 : index
    %c0_17 = arith.constant 0 : index
    %c0_18 = arith.constant 0 : index
    %35 = vector.load %arg4[%c1, %c0_17, %c0_18] : memref<9x128x128xf32, #tpu.memory_space<vmem>>, vector<1x128x128xf32>
    %36 = vector.shape_cast %35 : vector<1x128x128xf32> to vector<128x128xf32>
    %cst_19 = arith.constant dense<0.000000e+00> : vector<64x128xf32>
    %37 = tpu.matmul %34, %36, %cst_19 {dimension_numbers = #tpu.dot_dimension_numbers<[1], [0], [0], [1], [0, 0, 1, 1], [], []>} : vector<64x128xf32>, vector<128x128xf32>, vector<64x128xf32> -> vector<64x128xf32>
    %38 = arith.addf %32, %37 : vector<64x128xf32>
    %39 = vector.extract_strided_slice %25 {offsets = [0, 2, 0], sizes = [8, 8, 128], strides = [1, 1, 1]} : vector<10x10x128xf32> to vector<8x8x128xf32>
    %40 = vector.shape_cast %39 : vector<8x8x128xf32> to vector<64x128xf32>
    %c2 = arith.constant 2 : index
    %c0_20 = arith.constant 0 : index
    %c0_21 = arith.constant 0 : index
    %41 = vector.load %arg4[%c2, %c0_20, %c0_21] : memref<9x128x128xf32, #tpu.memory_space<vmem>>, vector<1x128x128xf32>
    %42 = vector.shape_cast %41 : vector<1x128x128xf32> to vector<128x128xf32>
    %cst_22 = arith.constant dense<0.000000e+00> : vector<64x128xf32>
    %43 = tpu.matmul %40, %42, %cst_22 {dimension_numbers = #tpu.dot_dimension_numbers<[1], [0], [0], [1], [0, 0, 1, 1], [], []>} : vector<64x128xf32>, vector<128x128xf32>, vector<64x128xf32> -> vector<64x128xf32>
    %44 = arith.addf %38, %43 : vector<64x128xf32>
    %45 = vector.extract_strided_slice %25 {offsets = [1, 0, 0], sizes = [8, 8, 128], strides = [1, 1, 1]} : vector<10x10x128xf32> to vector<8x8x128xf32>
    %46 = vector.shape_cast %45 : vector<8x8x128xf32> to vector<64x128xf32>
    %c3 = arith.constant 3 : index
    %c0_23 = arith.constant 0 : index
    %c0_24 = arith.constant 0 : index
    %47 = vector.load %arg4[%c3, %c0_23, %c0_24] : memref<9x128x128xf32, #tpu.memory_space<vmem>>, vector<1x128x128xf32>
    %48 = vector.shape_cast %47 : vector<1x128x128xf32> to vector<128x128xf32>
    %cst_25 = arith.constant dense<0.000000e+00> : vector<64x128xf32>
    %49 = tpu.matmul %46, %48, %cst_25 {dimension_numbers = #tpu.dot_dimension_numbers<[1], [0], [0], [1], [0, 0, 1, 1], [], []>} : vector<64x128xf32>, vector<128x128xf32>, vector<64x128xf32> -> vector<64x128xf32>
    %50 = arith.addf %44, %49 : vector<64x128xf32>
    %51 = vector.extract_strided_slice %25 {offsets = [1, 1, 0], sizes = [8, 8, 128], strides = [1, 1, 1]} : vector<10x10x128xf32> to vector<8x8x128xf32>
    %52 = vector.shape_cast %51 : vector<8x8x128xf32> to vector<64x128xf32>
    %c4 = arith.constant 4 : index
    %c0_26 = arith.constant 0 : index
    %c0_27 = arith.constant 0 : index
    %53 = vector.load %arg4[%c4, %c0_26, %c0_27] : memref<9x128x128xf32, #tpu.memory_space<vmem>>, vector<1x128x128xf32>
    %54 = vector.shape_cast %53 : vector<1x128x128xf32> to vector<128x128xf32>
    %cst_28 = arith.constant dense<0.000000e+00> : vector<64x128xf32>
    %55 = tpu.matmul %52, %54, %cst_28 {dimension_numbers = #tpu.dot_dimension_numbers<[1], [0], [0], [1], [0, 0, 1, 1], [], []>} : vector<64x128xf32>, vector<128x128xf32>, vector<64x128xf32> -> vector<64x128xf32>
    %56 = arith.addf %50, %55 : vector<64x128xf32>
    %57 = vector.extract_strided_slice %25 {offsets = [1, 2, 0], sizes = [8, 8, 128], strides = [1, 1, 1]} : vector<10x10x128xf32> to vector<8x8x128xf32>
    %58 = vector.shape_cast %57 : vector<8x8x128xf32> to vector<64x128xf32>
    %c5 = arith.constant 5 : index
    %c0_29 = arith.constant 0 : index
    %c0_30 = arith.constant 0 : index
    %59 = vector.load %arg4[%c5, %c0_29, %c0_30] : memref<9x128x128xf32, #tpu.memory_space<vmem>>, vector<1x128x128xf32>
    %60 = vector.shape_cast %59 : vector<1x128x128xf32> to vector<128x128xf32>
    %cst_31 = arith.constant dense<0.000000e+00> : vector<64x128xf32>
    %61 = tpu.matmul %58, %60, %cst_31 {dimension_numbers = #tpu.dot_dimension_numbers<[1], [0], [0], [1], [0, 0, 1, 1], [], []>} : vector<64x128xf32>, vector<128x128xf32>, vector<64x128xf32> -> vector<64x128xf32>
    %62 = arith.addf %56, %61 : vector<64x128xf32>
    %63 = vector.extract_strided_slice %25 {offsets = [2, 0, 0], sizes = [8, 8, 128], strides = [1, 1, 1]} : vector<10x10x128xf32> to vector<8x8x128xf32>
    %64 = vector.shape_cast %63 : vector<8x8x128xf32> to vector<64x128xf32>
    %c6 = arith.constant 6 : index
    %c0_32 = arith.constant 0 : index
    %c0_33 = arith.constant 0 : index
    %65 = vector.load %arg4[%c6, %c0_32, %c0_33] : memref<9x128x128xf32, #tpu.memory_space<vmem>>, vector<1x128x128xf32>
    %66 = vector.shape_cast %65 : vector<1x128x128xf32> to vector<128x128xf32>
    %cst_34 = arith.constant dense<0.000000e+00> : vector<64x128xf32>
    %67 = tpu.matmul %64, %66, %cst_34 {dimension_numbers = #tpu.dot_dimension_numbers<[1], [0], [0], [1], [0, 0, 1, 1], [], []>} : vector<64x128xf32>, vector<128x128xf32>, vector<64x128xf32> -> vector<64x128xf32>
    %68 = arith.addf %62, %67 : vector<64x128xf32>
    %69 = vector.extract_strided_slice %25 {offsets = [2, 1, 0], sizes = [8, 8, 128], strides = [1, 1, 1]} : vector<10x10x128xf32> to vector<8x8x128xf32>
    %70 = vector.shape_cast %69 : vector<8x8x128xf32> to vector<64x128xf32>
    %c7 = arith.constant 7 : index
    %c0_35 = arith.constant 0 : index
    %c0_36 = arith.constant 0 : index
    %71 = vector.load %arg4[%c7, %c0_35, %c0_36] : memref<9x128x128xf32, #tpu.memory_space<vmem>>, vector<1x128x128xf32>
    %72 = vector.shape_cast %71 : vector<1x128x128xf32> to vector<128x128xf32>
    %cst_37 = arith.constant dense<0.000000e+00> : vector<64x128xf32>
    %73 = tpu.matmul %70, %72, %cst_37 {dimension_numbers = #tpu.dot_dimension_numbers<[1], [0], [0], [1], [0, 0, 1, 1], [], []>} : vector<64x128xf32>, vector<128x128xf32>, vector<64x128xf32> -> vector<64x128xf32>
    %74 = arith.addf %68, %73 : vector<64x128xf32>
    %75 = vector.extract_strided_slice %25 {offsets = [2, 2, 0], sizes = [8, 8, 128], strides = [1, 1, 1]} : vector<10x10x128xf32> to vector<8x8x128xf32>
    %76 = vector.shape_cast %75 : vector<8x8x128xf32> to vector<64x128xf32>
    %c8 = arith.constant 8 : index
    %c0_38 = arith.constant 0 : index
    %c0_39 = arith.constant 0 : index
    %77 = vector.load %arg4[%c8, %c0_38, %c0_39] : memref<9x128x128xf32, #tpu.memory_space<vmem>>, vector<1x128x128xf32>
    %78 = vector.shape_cast %77 : vector<1x128x128xf32> to vector<128x128xf32>
    %cst_40 = arith.constant dense<0.000000e+00> : vector<64x128xf32>
    %79 = tpu.matmul %76, %78, %cst_40 {dimension_numbers = #tpu.dot_dimension_numbers<[1], [0], [0], [1], [0, 0, 1, 1], [], []>} : vector<64x128xf32>, vector<128x128xf32>, vector<64x128xf32> -> vector<64x128xf32>
    %80 = arith.addf %74, %79 : vector<64x128xf32>
    %c0_41 = arith.constant 0 : index
    %c0_42 = arith.constant 0 : index
    %c0_43 = arith.constant 0 : index
    %81 = vector.load %arg5[%c0_41, %c0_42, %c0_43] : memref<1x64x128xf32, #tpu.memory_space<vmem>>, vector<1x64x128xf32>
    %82 = vector.shape_cast %81 : vector<1x64x128xf32> to vector<64x128xf32>
    %83 = vector.shape_cast %80 : vector<64x128xf32> to vector<1x64x128xf32>
    tpu.vector_store %arg5[%c0_41, %c0_42, %c0_43], %83 {strides = array<i32>} : memref<1x64x128xf32, #tpu.memory_space<vmem>>, vector<1x64x128xf32>,
    %c0_44 = arith.constant 0 : index
    %c0_45 = arith.constant 0 : index
    %84 = vector.load %arg6[%c0_44, %c0_45] : memref<1x128xf32, #tpu.memory_space<vmem>>, vector<1x128xf32>
    %cst_46 = arith.constant dense<0.000000e+00> : vector<128xf32>
    %85 = vector.multi_reduction <add>, %80, %cst_46 [0] : vector<64x128xf32> to vector<128xf32>
    %86 = vector.shape_cast %85 : vector<128xf32> to vector<1x128xf32>
    %87 = arith.addf %84, %86 : vector<1x128xf32>
    %c0_47 = arith.constant 0 : index
    %c0_48 = arith.constant 0 : index
    %88 = vector.load %arg6[%c0_47, %c0_48] : memref<1x128xf32, #tpu.memory_space<vmem>>, vector<1x128xf32>
    tpu.vector_store %arg6[%c0_47, %c0_48], %87 {strides = array<i32>} : memref<1x128xf32, #tpu.memory_space<vmem>>, vector<1x128xf32>,
    %c0_49 = arith.constant 0 : index
    %c0_50 = arith.constant 0 : index
    %89 = vector.load %arg7[%c0_49, %c0_50] : memref<1x128xf32, #tpu.memory_space<vmem>>, vector<1x128xf32>
    %90 = arith.mulf %80, %80 : vector<64x128xf32>
    %cst_51 = arith.constant dense<0.000000e+00> : vector<128xf32>
    %91 = vector.multi_reduction <add>, %90, %cst_51 [0] : vector<64x128xf32> to vector<128xf32>
    %92 = vector.shape_cast %91 : vector<128xf32> to vector<1x128xf32>
    %93 = arith.addf %89, %92 : vector<1x128xf32>
    %c0_52 = arith.constant 0 : index
    %c0_53 = arith.constant 0 : index
    %94 = vector.load %arg7[%c0_52, %c0_53] : memref<1x128xf32, #tpu.memory_space<vmem>>, vector<1x128xf32>
    tpu.vector_store %arg7[%c0_52, %c0_53], %93 {strides = array<i32>} : memref<1x128xf32, #tpu.memory_space<vmem>>, vector<1x128xf32>,
    return
  }
  func.func @transform_0(%arg0: i32) -> (i32, i32, i32, i32) {
    %c0_i32 = arith.constant 0 : i32
    %c0_i32_0 = arith.constant 0 : i32
    %c0_i32_1 = arith.constant 0 : i32
    %c0_i32_2 = arith.constant 0 : i32
    return %arg0, %c0_i32, %c0_i32_0, %c0_i32_1 : i32, i32, i32, i32
  }
  func.func @transform_1(%arg0: i32) -> (i32, i32) {
    %c0_i32 = arith.constant 0 : i32
    %c0_i32_0 = arith.constant 0 : i32
    %c0_i32_1 = arith.constant 0 : i32
    return %c0_i32, %c0_i32_0 : i32, i32
  }
  func.func @transform_2(%arg0: i32) -> (i32, i32) {
    %c0_i32 = arith.constant 0 : i32
    %c0_i32_0 = arith.constant 0 : i32
    %c0_i32_1 = arith.constant 0 : i32
    return %c0_i32, %c0_i32_0 : i32, i32
  }
  func.func @transform_3(%arg0: i32) -> (i32, i32, i32) {
    %c0_i32 = arith.constant 0 : i32
    %c0_i32_0 = arith.constant 0 : i32
    %c0_i32_1 = arith.constant 0 : i32
    %c0_i32_2 = arith.constant 0 : i32
    return %c0_i32, %c0_i32_0, %c0_i32_1 : i32, i32, i32
  }
  func.func @transform_4(%arg0: i32) -> (i32, i32, i32) {
    %c0_i32 = arith.constant 0 : i32
    %c0_i32_0 = arith.constant 0 : i32
    %c0_i32_1 = arith.constant 0 : i32
    return %arg0, %c0_i32, %c0_i32_0 : i32, i32, i32
  }
  func.func @transform_5(%arg0: i32) -> (i32, i32) {
    %c0_i32 = arith.constant 0 : i32
    %c0_i32_0 = arith.constant 0 : i32
    %c0_i32_1 = arith.constant 0 : i32
    return %c0_i32, %c0_i32_0 : i32, i32
  }
  func.func @transform_6(%arg0: i32) -> (i32, i32) {
    %c0_i32 = arith.constant 0 : i32
    %c0_i32_0 = arith.constant 0 : i32
    %c0_i32_1 = arith.constant 0 : i32
    return %c0_i32, %c0_i32_0 : i32, i32
  }
}

module attributes {stable_mosaic.version = 11 : i64} {
  func.func @kernel(%arg0: i32, %arg1: memref<1x64x128xf32, #tpu.memory_space<vmem>>, %arg2: memref<1x128xf32, #tpu.memory_space<vmem>>, %arg3: memref<1x128xf32, #tpu.memory_space<vmem>>, %arg4: memref<1x64x128xf32, #tpu.memory_space<vmem>>, %arg5: memref<1x128xf32, #tpu.memory_space<vmem>>, %arg6: memref<1x128xf32, #tpu.memory_space<vmem>>, %arg7: memref<1x64x128xf32, #tpu.memory_space<vmem>>) attributes {dimension_semantics = [#tpu.dimension_semantics<parallel>], iteration_bounds = array<i64: 2>, scalar_prefetch = 0 : i64, scratch_operands = 0 : i64, tpu.core_type = #tpu.core_type<tc>, window_params = [{transform_indices = @transform_0, window_bounds = array<i64: 1, 64, 128>}, {pipeline_mode = #tpu.pipeline_mode<synchronous>, transform_indices = @transform_1, window_bounds = array<i64: 1, 128>}, {pipeline_mode = #tpu.pipeline_mode<synchronous>, transform_indices = @transform_2, window_bounds = array<i64: 1, 128>}, {transform_indices = @transform_3, window_bounds = array<i64: 1, 64, 128>}, {pipeline_mode = #tpu.pipeline_mode<synchronous>, transform_indices = @transform_4, window_bounds = array<i64: 1, 128>}, {pipeline_mode = #tpu.pipeline_mode<synchronous>, transform_indices = @transform_5, window_bounds = array<i64: 1, 128>}, {transform_indices = @transform_6, window_bounds = array<i64: 1, 64, 128>}]} {
    %c0 = arith.constant 0 : index
    %c0_0 = arith.constant 0 : index
    %c0_1 = arith.constant 0 : index
    %0 = vector.load %arg1[%c0, %c0_0, %c0_1] : memref<1x64x128xf32, #tpu.memory_space<vmem>>, vector<1x64x128xf32>
    %1 = vector.shape_cast %0 : vector<1x64x128xf32> to vector<64x128xf32>
    %c0_2 = arith.constant 0 : index
    %c0_3 = arith.constant 0 : index
    %2 = vector.load %arg2[%c0_2, %c0_3] : memref<1x128xf32, #tpu.memory_space<vmem>>, vector<1x128xf32>
    %c0_4 = arith.constant 0 : index
    %c0_5 = arith.constant 0 : index
    %3 = vector.load %arg3[%c0_4, %c0_5] : memref<1x128xf32, #tpu.memory_space<vmem>>, vector<1x128xf32>
    %cst = arith.constant 7.812500e-03 : f32
    %4 = vector.broadcast %cst : f32 to vector<1x128xf32>
    %5 = arith.mulf %2, %4 : vector<1x128xf32>
    %cst_6 = arith.constant 7.812500e-03 : f32
    %6 = vector.broadcast %cst_6 : f32 to vector<1x128xf32>
    %7 = arith.mulf %3, %6 : vector<1x128xf32>
    %8 = arith.mulf %5, %5 : vector<1x128xf32>
    %9 = arith.subf %7, %8 : vector<1x128xf32>
    %cst_7 = arith.constant 0.000000e+00 : f32
    %10 = vector.broadcast %cst_7 : f32 to vector<1x128xf32>
    %11 = arith.maximumf %9, %10 : vector<1x128xf32>
    %12 = vector.broadcast %5 : vector<1x128xf32> to vector<64x128xf32>
    %13 = arith.subf %1, %12 : vector<64x128xf32>
    %cst_8 = arith.constant 9.99999974E-6 : f32
    %14 = vector.broadcast %cst_8 : f32 to vector<1x128xf32>
    %15 = arith.addf %11, %14 : vector<1x128xf32>
    %16 = math.rsqrt %15 : vector<1x128xf32>
    %17 = vector.broadcast %16 : vector<1x128xf32> to vector<64x128xf32>
    %18 = arith.mulf %13, %17 : vector<64x128xf32>
    %c0_9 = arith.constant 0 : index
    %c0_10 = arith.constant 0 : index
    %c0_11 = arith.constant 0 : index
    %19 = vector.load %arg4[%c0_9, %c0_10, %c0_11] : memref<1x64x128xf32, #tpu.memory_space<vmem>>, vector<1x64x128xf32>
    %20 = vector.shape_cast %19 : vector<1x64x128xf32> to vector<64x128xf32>
    %c0_12 = arith.constant 0 : index
    %c0_13 = arith.constant 0 : index
    %21 = vector.load %arg5[%c0_12, %c0_13] : memref<1x128xf32, #tpu.memory_space<vmem>>, vector<1x128xf32>
    %c0_14 = arith.constant 0 : index
    %c0_15 = arith.constant 0 : index
    %22 = vector.load %arg6[%c0_14, %c0_15] : memref<1x128xf32, #tpu.memory_space<vmem>>, vector<1x128xf32>
    %cst_16 = arith.constant 7.812500e-03 : f32
    %23 = vector.broadcast %cst_16 : f32 to vector<1x128xf32>
    %24 = arith.mulf %21, %23 : vector<1x128xf32>
    %cst_17 = arith.constant 7.812500e-03 : f32
    %25 = vector.broadcast %cst_17 : f32 to vector<1x128xf32>
    %26 = arith.mulf %22, %25 : vector<1x128xf32>
    %27 = arith.mulf %24, %24 : vector<1x128xf32>
    %28 = arith.subf %26, %27 : vector<1x128xf32>
    %cst_18 = arith.constant 0.000000e+00 : f32
    %29 = vector.broadcast %cst_18 : f32 to vector<1x128xf32>
    %30 = arith.maximumf %28, %29 : vector<1x128xf32>
    %31 = vector.broadcast %24 : vector<1x128xf32> to vector<64x128xf32>
    %32 = arith.subf %20, %31 : vector<64x128xf32>
    %cst_19 = arith.constant 9.99999974E-6 : f32
    %33 = vector.broadcast %cst_19 : f32 to vector<1x128xf32>
    %34 = arith.addf %30, %33 : vector<1x128xf32>
    %35 = math.rsqrt %34 : vector<1x128xf32>
    %36 = vector.broadcast %35 : vector<1x128xf32> to vector<64x128xf32>
    %37 = arith.mulf %32, %36 : vector<64x128xf32>
    %38 = arith.addf %18, %37 : vector<64x128xf32>
    %cst_20 = arith.constant 0.000000e+00 : f32
    %39 = vector.broadcast %cst_20 : f32 to vector<64x128xf32>
    %40 = arith.maximumf %38, %39 : vector<64x128xf32>
    %c0_21 = arith.constant 0 : index
    %c0_22 = arith.constant 0 : index
    %c0_23 = arith.constant 0 : index
    %41 = vector.load %arg7[%c0_21, %c0_22, %c0_23] : memref<1x64x128xf32, #tpu.memory_space<vmem>>, vector<1x64x128xf32>
    %42 = vector.shape_cast %41 : vector<1x64x128xf32> to vector<64x128xf32>
    %43 = vector.shape_cast %40 : vector<64x128xf32> to vector<1x64x128xf32>
    tpu.vector_store %arg7[%c0_21, %c0_22, %c0_23], %43 {strides = array<i32>} : memref<1x64x128xf32, #tpu.memory_space<vmem>>, vector<1x64x128xf32>,
    return
  }
  func.func @transform_0(%arg0: i32) -> (i32, i32, i32) {
    %c0_i32 = arith.constant 0 : i32
    %c0_i32_0 = arith.constant 0 : i32
    %c0_i32_1 = arith.constant 0 : i32
    return %arg0, %c0_i32, %c0_i32_0 : i32, i32, i32
  }
  func.func @transform_1(%arg0: i32) -> (i32, i32) {
    %c0_i32 = arith.constant 0 : i32
    %c0_i32_0 = arith.constant 0 : i32
    %c0_i32_1 = arith.constant 0 : i32
    return %c0_i32, %c0_i32_0 : i32, i32
  }
  func.func @transform_2(%arg0: i32) -> (i32, i32) {
    %c0_i32 = arith.constant 0 : i32
    %c0_i32_0 = arith.constant 0 : i32
    %c0_i32_1 = arith.constant 0 : i32
    return %c0_i32, %c0_i32_0 : i32, i32
  }
  func.func @transform_3(%arg0: i32) -> (i32, i32, i32) {
    %c0_i32 = arith.constant 0 : i32
    %c0_i32_0 = arith.constant 0 : i32
    %c0_i32_1 = arith.constant 0 : i32
    return %arg0, %c0_i32, %c0_i32_0 : i32, i32, i32
  }
  func.func @transform_4(%arg0: i32) -> (i32, i32) {
    %c0_i32 = arith.constant 0 : i32
    %c0_i32_0 = arith.constant 0 : i32
    %c0_i32_1 = arith.constant 0 : i32
    return %c0_i32, %c0_i32_0 : i32, i32
  }
  func.func @transform_5(%arg0: i32) -> (i32, i32) {
    %c0_i32 = arith.constant 0 : i32
    %c0_i32_0 = arith.constant 0 : i32
    %c0_i32_1 = arith.constant 0 : i32
    return %c0_i32, %c0_i32_0 : i32, i32
  }
  func.func @transform_6(%arg0: i32) -> (i32, i32, i32) {
    %c0_i32 = arith.constant 0 : i32
    %c0_i32_0 = arith.constant 0 : i32
    %c0_i32_1 = arith.constant 0 : i32
    return %arg0, %c0_i32, %c0_i32_0 : i32, i32, i32
  }
}

</mosaic_0001>

<llo_original>
// kernel: residual_block.5
$region0: #{residual_block.5}
  #allocation0 [shape = 'u32[]', space=smem, size = 0x4, offset = 0x4, fixed_abs, tag = 'smem constant byte address 0x4 - core index']
  #allocation1 [shape = 'u32[144,128]{1,0:T(1,128)}', space=vmem, size = 0x12000, scoped, tag = 'internal scratch']
  %s0 = inlined_call_operand.vmem [shape: f32[2,64,128], index: 0, kind: input, shape index: {}]
  %s1 = inlined_call_operand.vmem [shape: f32[1,128], index: 1, kind: input, shape index: {}]
  %s2 = inlined_call_operand.vmem [shape: f32[1,128], index: 2, kind: input, shape index: {}]
  %s3 = inlined_call_operand.vmem [shape: f32[2,64,128], index: 3, kind: input, shape index: {}]
  %s4 = inlined_call_operand.vmem [shape: f32[1,128], index: 4, kind: input, shape index: {}]
  %s5 = inlined_call_operand.vmem [shape: f32[1,128], index: 5, kind: input, shape index: {}]
  %s6 = inlined_call_operand.vmem [shape: f32[2,64,128], index: 6, kind: output, shape index: {}]
  %s7 = sld [smem:[#allocation0]]
  $region57: #{residual_block.5} parent=0
    _
  %s9 = ssub.s32 1, %s7
  %s10 = scalar_select 0, %s9, %s7
  loop: start=0, step=1, limit=4
  $region2: #{residual_block.5} parent=0 // loop_pre_header
    _
  $region3: #{residual_block.5} parent=0 // loop_header
    %s12 = sphi 0, %s16
    %p13 = scmp.ge.s32.totalorder %s12, 4
    %s22 = sphi 0, %s24
    %s25 = sphi 0, %s22
    %s26 = sphi 0, %s25
    %s42 = sphi 0, %s26
    %s46 = sphi 0, %s46
    %s48 = sphi 0, %s46
    %s49 = sphi 0, %s48
    %s63 = sphi 0, %s49
    %s67 = sphi 0, %s67
    %s69 = sphi 0, %s67
    %s70 = sphi 0, %s69
    %s84 = sphi 0, %s70
    %s90 = sphi 0, %s92
    %s93 = sphi 0, %s90
    %s94 = sphi 0, %s93
    %s110 = sphi 0, %s94
    %s114 = sphi 0, %s114
    %s116 = sphi 0, %s114
    %s117 = sphi 0, %s116
    %s131 = sphi 0, %s117
    %s135 = sphi 0, %s135
    %s137 = sphi 0, %s135
    %s138 = sphi 0, %s137
    %s152 = sphi 0, %s138
    %s158 = sphi 0, %s160
    %s161 = sphi 0, %s158
    %s162 = sphi 0, %s161
    %s178 = sphi 0, %s162
  $region4: #{residual_block.5} parent=0 // loop_header_branch
    %15 = sbr.rel (%p13) target = $region8
  $region5: #{residual_block.5} parent=0 // loop_body
    %s17 = ssub.s32 %s12, 1
    %s18 = ssub.s32 %s12, 2
    %s19 = sadd.s32 %s12, 1
    %s20 = ssub.s32 %s12, %s19
    %p21 = scmp.eq.s32.totalorder %s20, 0
    %s23 = sadd.s32 %s22, 1
    %s24 = scalar_select %p21, %s22, %s23
    %p27 = pneg %p21
    %p28 = scmp.eq.s32.totalorder %s12, 1
    %p29 = por %p27, %p28
    %p30 = scmp.ne.s32.totalorder %s22, %s25
    %p31 = scmp.eq.s32.totalorder %s12, 0
    %p32 = por %p30, %p31
    %p33 = scmp.ne.s32.totalorder %s22, %s25
    %p34 = scmp.eq.s32.totalorder %s17, 1
    %p35 = por %p33, %p34
    %p36 = scmp.ne.s32.totalorder %s25, %s26
    %p37 = scmp.eq.s32.totalorder %s17, 0
    %p38 = por %p36, %p37
    %p39 = scmp.ne.s32.totalorder %s25, %s26
    %p40 = scmp.eq.s32.totalorder %s18, 1
    %p41 = por %p39, %p40
    %p43 = scmp.ne.s32.totalorder %s26, %s42
    %p44 = scmp.eq.s32.totalorder %s18, 0
    %p45 = por %p43, %p44
    %s47 = sadd.s32 %s46, 1
    %p50 = scmp.eq.s32.totalorder %s12, 1
    %p51 = scmp.ne.s32.totalorder %s46, %s48
    %p52 = scmp.eq.s32.totalorder %s12, 0
    %p53 = por %p51, %p52
    %p54 = scmp.ne.s32.totalorder %s46, %s48
    %p55 = scmp.eq.s32.totalorder %s17, 1
    %p56 = por %p54, %p55
    %p57 = scmp.ne.s32.totalorder %s48, %s49
    %p58 = scmp.eq.s32.totalorder %s17, 0
    %p59 = por %p57, %p58
    %p60 = scmp.ne.s32.totalorder %s48, %s49
    %p61 = scmp.eq.s32.totalorder %s18, 1
    %p62 = por %p60, %p61
    %p64 = scmp.ne.s32.totalorder %s49, %s63
    %p65 = scmp.eq.s32.totalorder %s18, 0
    %p66 = por %p64, %p65
    %s68 = sadd.s32 %s67, 1
    %p71 = scmp.eq.s32.totalorder %s12, 1
    %p72 = scmp.ne.s32.totalorder %s67, %s69
    %p73 = scmp.eq.s32.totalorder %s12, 0
    %p74 = por %p72, %p73
    %p75 = scmp.ne.s32.totalorder %s67, %s69
    %p76 = scmp.eq.s32.totalorder %s17, 1
    %p77 = por %p75, %p76
    %p78 = scmp.ne.s32.totalorder %s69, %s70
    %p79 = scmp.eq.s32.totalorder %s17, 0
    %p80 = por %p78, %p79
    %p81 = scmp.ne.s32.totalorder %s69, %s70
    %p82 = scmp.eq.s32.totalorder %s18, 1
    %p83 = por %p81, %p82
    %p85 = scmp.ne.s32.totalorder %s70, %s84
    %p86 = scmp.eq.s32.totalorder %s18, 0
    %p87 = por %p85, %p86
    %s88 = ssub.s32 %s12, %s19
    %p89 = scmp.eq.s32.totalorder %s88, 0
    %s91 = sadd.s32 %s90, 1
    %s92 = scalar_select %p89, %s90, %s91
    %p95 = pneg %p89
    %p96 = scmp.eq.s32.totalorder %s12, 1
    %p97 = por %p95, %p96
    %p98 = scmp.ne.s32.totalorder %s90, %s93
    %p99 = scmp.eq.s32.totalorder %s12, 0
    %p100 = por %p98, %p99
    %p101 = scmp.ne.s32.totalorder %s90, %s93
    %p102 = scmp.eq.s32.totalorder %s17, 1
    %p103 = por %p101, %p102
    %p104 = scmp.ne.s32.totalorder %s93, %s94
    %p105 = scmp.eq.s32.totalorder %s17, 0
    %p106 = por %p104, %p105
    %p107 = scmp.ne.s32.totalorder %s93, %s94
    %p108 = scmp.eq.s32.totalorder %s18, 1
    %p109 = por %p107, %p108
    %p111 = scmp.ne.s32.totalorder %s94, %s110
    %p112 = scmp.eq.s32.totalorder %s18, 0
    %p113 = por %p111, %p112
    %s115 = sadd.s32 %s114, 1
    %p118 = scmp.eq.s32.totalorder %s12, 1
    %p119 = scmp.ne.s32.totalorder %s114, %s116
    %p120 = scmp.eq.s32.totalorder %s12, 0
    %p121 = por %p119, %p120
    %p122 = scmp.ne.s32.totalorder %s114, %s116
    %p123 = scmp.eq.s32.totalorder %s17, 1
    %p124 = por %p122, %p123
    %p125 = scmp.ne.s32.totalorder %s116, %s117
    %p126 = scmp.eq.s32.totalorder %s17, 0
    %p127 = por %p125, %p126
    %p128 = scmp.ne.s32.totalorder %s116, %s117
    %p129 = scmp.eq.s32.totalorder %s18, 1
    %p130 = por %p128, %p129
    %p132 = scmp.ne.s32.totalorder %s117, %s131
    %p133 = scmp.eq.s32.totalorder %s18, 0
    %p134 = por %p132, %p133
    %s136 = sadd.s32 %s135, 1
    %p139 = scmp.eq.s32.totalorder %s12, 1
    %p140 = scmp.ne.s32.totalorder %s135, %s137
    %p141 = scmp.eq.s32.totalorder %s12, 0
    %p142 = por %p140, %p141
    %p143 = scmp.ne.s32.totalorder %s135, %s137
    %p144 = scmp.eq.s32.totalorder %s17, 1
    %p145 = por %p143, %p144
    %p146 = scmp.ne.s32.totalorder %s137, %s138
    %p147 = scmp.eq.s32.totalorder %s17, 0
    %p148 = por %p146, %p147
    %p149 = scmp.ne.s32.totalorder %s137, %s138
    %p150 = scmp.eq.s32.totalorder %s18, 1
    %p151 = por %p149, %p150
    %p153 = scmp.ne.s32.totalorder %s138, %s152
    %p154 = scmp.eq.s32.totalorder %s18, 0
    %p155 = por %p153, %p154
    %s156 = ssub.s32 %s12, %s19
    %p157 = scmp.eq.s32.totalorder %s156, 0
    %s159 = sadd.s32 %s158, 1
    %s160 = scalar_select %p157, %s158, %s159
    %p163 = pneg %p157
    %p164 = scmp.eq.s32.totalorder %s12, 1
    %p165 = por %p163, %p164
    %p166 = scmp.ne.s32.totalorder %s158, %s161
    %p167 = scmp.eq.s32.totalorder %s12, 0
    %p168 = por %p166, %p167
    %p169 = scmp.ne.s32.totalorder %s158, %s161
    %p170 = scmp.eq.s32.totalorder %s17, 1
    %p171 = por %p169, %p170
    %p172 = scmp.ne.s32.totalorder %s161, %s162
    %p173 = scmp.eq.s32.totalorder %s17, 0
    %p174 = por %p172, %p173
    %p175 = scmp.ne.s32.totalorder %s161, %s162
    %p176 = scmp.eq.s32.totalorder %s18, 1
    %p177 = por %p175, %p176
    %p179 = scmp.ne.s32.totalorder %s162, %s178
    %p180 = scmp.eq.s32.totalorder %s18, 0
    %p181 = por %p179, %p180
    %p182 = scmp.le.s32.totalorder 1, %s12
    %p183 = scmp.lt.s32.totalorder %s12, 3
    %p184 = pnand %p182, %p183
    %p185 = pneg %p184
    // Predicated region
    $region9: #{residual_block.5} parent=5 // pred_check
      _
    $region10: #{residual_block.5} parent=5 // pred_check_branch
      %187 = sbr.rel (%p184) target = $region12
    $region11: #{residual_block.5} parent=5 // pred_region
      %s188 = ssub.s32 %s12, 1
      // Predicated region
      $region13: #{residual_block.5} parent=11 // pred_check
        %p189 = pneg %p59
      $region14: #{residual_block.5} parent=11 // pred_check_branch
        %191 = sbr.rel (%p189) target = $region16
      $region15: #{residual_block.5} parent=11 // pred_region
        _
      $region16: #{residual_block.5} parent=11 // pred_fallthru
        _
      // Predicated region
      $region17: #{residual_block.5} parent=11 // pred_check
        %p192 = pneg %p80
      $region18: #{residual_block.5} parent=11 // pred_check_branch
        %194 = sbr.rel (%p192) target = $region20
      $region19: #{residual_block.5} parent=11 // pred_region
        _
      $region20: #{residual_block.5} parent=11 // pred_fallthru
        _
      // Predicated region
      $region21: #{residual_block.5} parent=11 // pred_check
        %p195 = pneg %p127
      $region22: #{residual_block.5} parent=11 // pred_check_branch
        %197 = sbr.rel (%p195) target = $region24
      $region23: #{residual_block.5} parent=11 // pred_region
        _
      $region24: #{residual_block.5} parent=11 // pred_fallthru
        _
      // Predicated region
      $region25: #{residual_block.5} parent=11 // pred_check
        %p198 = pneg %p148
      $region26: #{residual_block.5} parent=11 // pred_check_branch
        %200 = sbr.rel (%p198) target = $region28
      $region27: #{residual_block.5} parent=11 // pred_region
        _
      $region28: #{residual_block.5} parent=11 // pred_fallthru
        _
    $region12: #{residual_block.5} parent=5 // pred_fallthru
      _
    %p201 = scmp.lt.s32.totalorder %s12, 2
    // Predicated region
    $region29: #{residual_block.5} parent=5 // pred_check
      %p202 = pneg %p201
    $region30: #{residual_block.5} parent=5 // pred_check_branch
      %204 = sbr.rel (%p202) target = $region32
    $region31: #{residual_block.5} parent=5 // pred_region
      // Predicated region
      $region33: #{residual_block.5} parent=31 // pred_check
        %p205 = pneg %p32
      $region34: #{residual_block.5} parent=31 // pred_check_branch
        %207 = sbr.rel (%p205) target = $region36
      $region35: #{residual_block.5} parent=31 // pred_region
        %p208 = scmp.lt.s32.totalorder %s12, 1
        %s209 = scalar_select %p208, %s12, 1
        %s210 = smul.addr %s209, 8
        %s211 = smul.addr %s210, 8
        %s212 = scalar_lea.vmem %s0, %s211
      $region36: #{residual_block.5} parent=31 // pred_fallthru
        _
      // Predicated region
      $region37: #{residual_block.5} parent=31 // pred_check
        %p213 = pneg %p100
      $region38: #{residual_block.5} parent=31 // pred_check_branch
        %215 = sbr.rel (%p213) target = $region40
      $region39: #{residual_block.5} parent=31 // pred_region
        %p216 = scmp.lt.s32.totalorder %s12, 1
        %s217 = scalar_select %p216, %s12, 1
        %s218 = smul.addr %s217, 8
        %s219 = smul.addr %s218, 8
        %s220 = scalar_lea.vmem %s3, %s219
      $region40: #{residual_block.5} parent=31 // pred_fallthru
        _
    $region32: #{residual_block.5} parent=5 // pred_fallthru
      _
    %p221 = scmp.le.s32.totalorder 1, %s12
    %p222 = scmp.lt.s32.totalorder %s12, 3
    %p223 = pnand %p221, %p222
    %p224 = pneg %p223
    // Predicated region
    $region41: #{residual_block.5} parent=5 // pred_check
      _
    $region42: #{residual_block.5} parent=5 // pred_check_branch
      %226 = sbr.rel (%p223) target = $region44
    $region43: #{residual_block.5} parent=5 // pred_region
      %s227 = ssub.s32 %s12, 1
      %p228 = scmp.lt.s32.totalorder %s17, 1
      %s229 = scalar_select %p228, %s17, 1
      %s230 = smul.addr %s229, 8
      %s231 = smul.addr %s230, 8
      %s232 = scalar_lea.vmem %s0, %s231
      %p233 = pneg %p38
      %p234 = pneg %p35
      %p235 = pneg %p59
      %p236 = pneg %p56
      %p237 = pneg %p80
      %p238 = pneg %p77
      %p239 = scmp.lt.s32.totalorder %s17, 1
      %s240 = scalar_select %p239, %s17, 1
      %s241 = smul.addr %s240, 8
      %s242 = smul.addr %s241, 8
      %s243 = scalar_lea.vmem %s3, %s242
      %p244 = pneg %p106
      %p245 = pneg %p103
      %p246 = pneg %p127
      %p247 = pneg %p124
      %p248 = pneg %p148
      %p249 = pneg %p145
      %p250 = pneg %p174
      %p251 = pneg %p171
      %p252 = scmp.lt.s32.totalorder %s17, 1
      %s253 = scalar_select %p252, %s17, 1
      %s254 = smul.addr %s253, 8
      %s255 = smul.addr %s254, 8
      %s256 = scalar_lea.vmem %s6, %s255
      %p257 = scmp.lt.s32.totalorder %s17, 1
      %s258 = scalar_select %p257, %s17, 1
      %s259 = smul.addr %s258, 8
      %s260 = smul.addr %s259, 8
      %s261 = scalar_lea.vmem %s0, %s260
      %p262 = scmp.lt.s32.totalorder %s17, 1
      %s263 = scalar_select %p262, %s17, 1
      %s264 = smul.addr %s263, 8
      %s265 = smul.addr %s264, 8
      %s266 = scalar_lea.vmem %s3, %s265
      %p267 = scmp.lt.s32.totalorder %s17, 1
      %s268 = scalar_select %p267, %s17, 1
      %s269 = smul.addr %s268, 8
      %s270 = smul.addr %s269, 8
      %s271 = scalar_lea.vmem %s6, %s270
      %v272 = vld [vmem:[%s261] sm:$0xff]
      %v273 = vld [vmem:[%s261 + $0x8] sm:$0xff]
      %v274 = vld [vmem:[%s261 + $0x10] sm:$0xff]
      %v275 = vld [vmem:[%s261 + $0x18] sm:$0xff]
      %v276 = vld [vmem:[%s261 + $0x20] sm:$0xff]
      %v277 = vld [vmem:[%s261 + $0x28] sm:$0xff]
      %v278 = vld [vmem:[%s261 + $0x30] sm:$0xff]
      %v279 = vld [vmem:[%s261 + $0x38] sm:$0xff]
      %v280 = vld [vmem:[%s1] sm:$0x1]
      %v281 = vld [vmem:[%s2] sm:$0x1]
      %v282 = vmul.f32 %v280, 0.0078125
      %v283 = vmul.f32 %v281, 0.0078125
      %v284 = vmul.f32 %v282, %v282
      %v285 = vsub.f32 %v283, %v284
      %v286 = vmax.f32 %v285, 0.0
      %v288 = vlaneseq
      %v289 = vshrl.u32 %v288, 7
      %v290 = vsub.s32 0, %v289
      %v291 = vrot.slane %v282, %v290
      %v293 = vsub.f32 %v272, %v291
      %v294 = vsub.f32 %v273, %v291
      %v295 = vsub.f32 %v274, %v291
      %v296 = vsub.f32 %v275, %v291
      %v297 = vsub.f32 %v276, %v291
      %v298 = vsub.f32 %v277, %v291
      %v299 = vsub.f32 %v278, %v291
      %v300 = vsub.f32 %v279, %v291
      %v301 = vadd.f32 %v286, 1e-05
      %v302 = vrsqrt.pop %v301
      %v304 = vlaneseq
      %v305 = vshrl.u32 %v304, 7
      %v306 = vsub.s32 0, %v305
      %v307 = vrot.slane %v302, %v306
      %v309 = vmul.f32 %v293, %v307
      %v310 = vmul.f32 %v294, %v307
      %v311 = vmul.f32 %v295, %v307
      %v312 = vmul.f32 %v296, %v307
      %v313 = vmul.f32 %v297, %v307
      %v314 = vmul.f32 %v298, %v307
      %v315 = vmul.f32 %v299, %v307
      %v316 = vmul.f32 %v300, %v307
      %v317 = vld [vmem:[%s266] sm:$0xff]
      %v318 = vld [vmem:[%s266 + $0x8] sm:$0xff]
      %v319 = vld [vmem:[%s266 + $0x10] sm:$0xff]
      %v320 = vld [vmem:[%s266 + $0x18] sm:$0xff]
      %v321 = vld [vmem:[%s266 + $0x20] sm:$0xff]
      %v322 = vld [vmem:[%s266 + $0x28] sm:$0xff]
      %v323 = vld [vmem:[%s266 + $0x30] sm:$0xff]
      %v324 = vld [vmem:[%s266 + $0x38] sm:$0xff]
      %v325 = vld [vmem:[%s4] sm:$0x1]
      %v326 = vld [vmem:[%s5] sm:$0x1]
      %v327 = vmul.f32 %v325, 0.0078125
      %v328 = vmul.f32 %v326, 0.0078125
      %v329 = vmul.f32 %v327, %v327
      %v330 = vsub.f32 %v328, %v329
      %v331 = vmax.f32 %v330, 0.0
      %v333 = vlaneseq
      %v334 = vshrl.u32 %v333, 7
      %v335 = vsub.s32 0, %v334
      %v336 = vrot.slane %v327, %v335
      %v338 = vsub.f32 %v317, %v336
      %v339 = vsub.f32 %v318, %v336
      %v340 = vsub.f32 %v319, %v336
      %v341 = vsub.f32 %v320, %v336
      %v342 = vsub.f32 %v321, %v336
      %v343 = vsub.f32 %v322, %v336
      %v344 = vsub.f32 %v323, %v336
      %v345 = vsub.f32 %v324, %v336
      %v346 = vadd.f32 %v331, 1e-05
      %v347 = vrsqrt.pop %v346
      %v349 = vlaneseq
      %v350 = vshrl.u32 %v349, 7
      %v351 = vsub.s32 0, %v350
      %v352 = vrot.slane %v347, %v351
      %v354 = vmul.f32 %v338, %v352
      %v355 = vmul.f32 %v339, %v352
      %v356 = vmul.f32 %v340, %v352
      %v357 = vmul.f32 %v341, %v352
      %v358 = vmul.f32 %v342, %v352
      %v359 = vmul.f32 %v343, %v352
      %v360 = vmul.f32 %v344, %v352
      %v361 = vmul.f32 %v345, %v352
      %v362 = vadd.f32 %v309, %v354
      %v363 = vadd.f32 %v310, %v355
      %v364 = vadd.f32 %v311, %v356
      %v365 = vadd.f32 %v312, %v357
      %v366 = vadd.f32 %v313, %v358
      %v367 = vadd.f32 %v314, %v359
      %v368 = vadd.f32 %v315, %v360
      %v369 = vadd.f32 %v316, %v361
      %v370 = vmax.f32 %v362, 0.0
      %v371 = vmax.f32 %v363, 0.0
      %v372 = vmax.f32 %v364, 0.0
      %v373 = vmax.f32 %v365, 0.0
      %v374 = vmax.f32 %v366, 0.0
      %v375 = vmax.f32 %v367, 0.0
      %v376 = vmax.f32 %v368, 0.0
      %v377 = vmax.f32 %v369, 0.0
      %378 = vst [vmem:[%s271] sm:$0xff] %v370
      %379 = vst [vmem:[%s271 + $0x8] sm:$0xff] %v371
      %380 = vst [vmem:[%s271 + $0x10] sm:$0xff] %v372
      %381 = vst [vmem:[%s271 + $0x18] sm:$0xff] %v373
      %382 = vst [vmem:[%s271 + $0x20] sm:$0xff] %v374
      %383 = vst [vmem:[%s271 + $0x28] sm:$0xff] %v375
      %384 = vst [vmem:[%s271 + $0x30] sm:$0xff] %v376
      %385 = vst [vmem:[%s271 + $0x38] sm:$0xff] %v377
      %p386 = scmp.lt.s32.totalorder %s17, 1
      %s387 = scalar_select %p386, %s17, 1
      %s388 = smul.addr %s387, 8
      %s389 = smul.addr %s388, 8
      %s390 = scalar_lea.vmem %s6, %s389
      // Predicated region
      $region45: #{residual_block.5} parent=43 // pred_check
        %p391 = pneg %p171
      $region46: #{residual_block.5} parent=43 // pred_check_branch
        %393 = sbr.rel (%p391) target = $region48
      $region47: #{residual_block.5} parent=43 // pred_region
        _
      $region48: #{residual_block.5} parent=43 // pred_fallthru
        _
    $region44: #{residual_block.5} parent=5 // pred_fallthru
      _
    %p394 = scmp.le.s32.totalorder 2, %s12
    // Predicated region
    $region49: #{residual_block.5} parent=5 // pred_check
      %p395 = pneg %p394
    $region50: #{residual_block.5} parent=5 // pred_check_branch
      %397 = sbr.rel (%p395) target = $region52
    $region51: #{residual_block.5} parent=5 // pred_region
      %s398 = ssub.s32 %s12, 2
      // Predicated region
      $region53: #{residual_block.5} parent=51 // pred_check
        %p399 = pneg %p177
      $region54: #{residual_block.5} parent=51 // pred_check_branch
        %401 = sbr.rel (%p399) target = $region56
      $region55: #{residual_block.5} parent=51 // pred_region
        %p402 = scmp.lt.s32.totalorder %s18, 1
        %s403 = scalar_select %p402, %s18, 1
        %s404 = smul.addr %s403, 8
        %s405 = smul.addr %s404, 8
        %s406 = scalar_lea.vmem %s6, %s405
      $region56: #{residual_block.5} parent=51 // pred_fallthru
        _
    $region52: #{residual_block.5} parent=5 // pred_fallthru
      _
  $region6: #{residual_block.5} parent=0 // loop_footer
    %s16 = sadd.s32 1, %s12
  $region7: #{residual_block.5} parent=0 // loop_footer_branch
    %11 = sbr.rel target = $region3
  $region8: #{residual_block.5} parent=0 // loop_exit
    _

// kernel: residual_block.3
$region0: #{residual_block.3}
  #allocation0 [shape = 'u32[]', space=smem, size = 0x4, offset = 0x4, fixed_abs, tag = 'smem constant byte address 0x4 - core index']
  #allocation1 [shape = 'u32[144,128]{1,0:T(1,128)}', space=vmem, size = 0x12000, scoped, tag = 'internal scratch']
  %s0 = inlined_call_operand.vmem [shape: f32[2,36,9,4], index: 0, kind: input, shape index: {}]
  %s1 = inlined_call_operand.vmem [shape: f32[9,4,128], index: 1, kind: input, shape index: {}]
  %s2 = inlined_call_operand.vmem [shape: f32[4,128], index: 2, kind: input, shape index: {}]
  %s3 = inlined_call_operand.vmem [shape: f32[2,64,128], index: 3, kind: output, shape index: {0}]
  %s4 = inlined_call_operand.vmem [shape: f32[2,64,128], index: 4, kind: output, shape index: {1}]
  %s5 = inlined_call_operand.vmem [shape: f32[1,128], index: 5, kind: output, shape index: {2}]
  %s6 = inlined_call_operand.vmem [shape: f32[1,128], index: 6, kind: output, shape index: {3}]
  %s7 = inlined_call_operand.vmem [shape: f32[1,128], index: 7, kind: output, shape index: {4}]
  %s8 = inlined_call_operand.vmem [shape: f32[1,128], index: 8, kind: output, shape index: {5}]
  %9 = xla_tuple %s3, %s4, %s5, %s6, %s7, %s8
  %s10 = sld [smem:[#allocation0]]
  $region89: #{residual_block.3} parent=0
    _
  %s12 = ssub.s32 1, %s10
  %s13 = scalar_select 0, %s12, %s10
  loop: start=0, step=1, limit=4
  $region2: #{residual_block.3} parent=0 // loop_pre_header
    _
  $region3: #{residual_block.3} parent=0 // loop_header
    %s15 = sphi 0, %s19
    %p16 = scmp.ge.s32.totalorder %s15, 4
    %s25 = sphi 0, %s27
    %s28 = sphi 0, %s25
    %s29 = sphi 0, %s28
    %s45 = sphi 0, %s29
    %s49 = sphi 0, %s49
    %s51 = sphi 0, %s49
    %s52 = sphi 0, %s51
    %s66 = sphi 0, %s52
    %s70 = sphi 0, %s70
    %s72 = sphi 0, %s70
    %s73 = sphi 0, %s72
    %s87 = sphi 0, %s73
    %s93 = sphi 0, %s95
    %s96 = sphi 0, %s93
    %s97 = sphi 0, %s96
    %s113 = sphi 0, %s97
    %s119 = sphi 0, %s121
    %s122 = sphi 0, %s119
    %s123 = sphi 0, %s122
    %s139 = sphi 0, %s123
    %s143 = sphi 0, %s143
    %s145 = sphi 0, %s143
    %s146 = sphi 0, %s145
    %s160 = sphi 0, %s146
    %s164 = sphi 0, %s164
    %s166 = sphi 0, %s164
    %s167 = sphi 0, %s166
    %s181 = sphi 0, %s167
    %s185 = sphi 0, %s185
    %s187 = sphi 0, %s185
    %s188 = sphi 0, %s187
    %s202 = sphi 0, %s188
    %s206 = sphi 0, %s206
    %s208 = sphi 0, %s206
    %s209 = sphi 0, %s208
    %s223 = sphi 0, %s209
  $region4: #{residual_block.3} parent=0 // loop_header_branch
    %18 = sbr.rel (%p16) target = $region8
  $region5: #{residual_block.3} parent=0 // loop_body
    %s20 = ssub.s32 %s15, 1
    %s21 = ssub.s32 %s15, 2
    %s22 = sadd.s32 %s15, 1
    %s23 = ssub.s32 %s15, %s22
    %p24 = scmp.eq.s32.totalorder %s23, 0
    %s26 = sadd.s32 %s25, 1
    %s27 = scalar_select %p24, %s25, %s26
    %p30 = pneg %p24
    %p31 = scmp.eq.s32.totalorder %s15, 1
    %p32 = por %p30, %p31
    %p33 = scmp.ne.s32.totalorder %s25, %s28
    %p34 = scmp.eq.s32.totalorder %s15, 0
    %p35 = por %p33, %p34
    %p36 = scmp.ne.s32.totalorder %s25, %s28
    %p37 = scmp.eq.s32.totalorder %s20, 1
    %p38 = por %p36, %p37
    %p39 = scmp.ne.s32.totalorder %s28, %s29
    %p40 = scmp.eq.s32.totalorder %s20, 0
    %p41 = por %p39, %p40
    %p42 = scmp.ne.s32.totalorder %s28, %s29
    %p43 = scmp.eq.s32.totalorder %s21, 1
    %p44 = por %p42, %p43
    %p46 = scmp.ne.s32.totalorder %s29, %s45
    %p47 = scmp.eq.s32.totalorder %s21, 0
    %p48 = por %p46, %p47
    %s50 = sadd.s32 %s49, 1
    %p53 = scmp.eq.s32.totalorder %s15, 1
    %p54 = scmp.ne.s32.totalorder %s49, %s51
    %p55 = scmp.eq.s32.totalorder %s15, 0
    %p56 = por %p54, %p55
    %p57 = scmp.ne.s32.totalorder %s49, %s51
    %p58 = scmp.eq.s32.totalorder %s20, 1
    %p59 = por %p57, %p58
    %p60 = scmp.ne.s32.totalorder %s51, %s52
    %p61 = scmp.eq.s32.totalorder %s20, 0
    %p62 = por %p60, %p61
    %p63 = scmp.ne.s32.totalorder %s51, %s52
    %p64 = scmp.eq.s32.totalorder %s21, 1
    %p65 = por %p63, %p64
    %p67 = scmp.ne.s32.totalorder %s52, %s66
    %p68 = scmp.eq.s32.totalorder %s21, 0
    %p69 = por %p67, %p68
    %s71 = sadd.s32 %s70, 1
    %p74 = scmp.eq.s32.totalorder %s15, 1
    %p75 = scmp.ne.s32.totalorder %s70, %s72
    %p76 = scmp.eq.s32.totalorder %s15, 0
    %p77 = por %p75, %p76
    %p78 = scmp.ne.s32.totalorder %s70, %s72
    %p79 = scmp.eq.s32.totalorder %s20, 1
    %p80 = por %p78, %p79
    %p81 = scmp.ne.s32.totalorder %s72, %s73
    %p82 = scmp.eq.s32.totalorder %s20, 0
    %p83 = por %p81, %p82
    %p84 = scmp.ne.s32.totalorder %s72, %s73
    %p85 = scmp.eq.s32.totalorder %s21, 1
    %p86 = por %p84, %p85
    %p88 = scmp.ne.s32.totalorder %s73, %s87
    %p89 = scmp.eq.s32.totalorder %s21, 0
    %p90 = por %p88, %p89
    %s91 = ssub.s32 %s15, %s22
    %p92 = scmp.eq.s32.totalorder %s91, 0
    %s94 = sadd.s32 %s93, 1
    %s95 = scalar_select %p92, %s93, %s94
    %p98 = pneg %p92
    %p99 = scmp.eq.s32.totalorder %s15, 1
    %p100 = por %p98, %p99
    %p101 = scmp.ne.s32.totalorder %s93, %s96
    %p102 = scmp.eq.s32.totalorder %s15, 0
    %p103 = por %p101, %p102
    %p104 = scmp.ne.s32.totalorder %s93, %s96
    %p105 = scmp.eq.s32.totalorder %s20, 1
    %p106 = por %p104, %p105
    %p107 = scmp.ne.s32.totalorder %s96, %s97
    %p108 = scmp.eq.s32.totalorder %s20, 0
    %p109 = por %p107, %p108
    %p110 = scmp.ne.s32.totalorder %s96, %s97
    %p111 = scmp.eq.s32.totalorder %s21, 1
    %p112 = por %p110, %p111
    %p114 = scmp.ne.s32.totalorder %s97, %s113
    %p115 = scmp.eq.s32.totalorder %s21, 0
    %p116 = por %p114, %p115
    %s117 = ssub.s32 %s15, %s22
    %p118 = scmp.eq.s32.totalorder %s117, 0
    %s120 = sadd.s32 %s119, 1
    %s121 = scalar_select %p118, %s119, %s120
    %p124 = pneg %p118
    %p125 = scmp.eq.s32.totalorder %s15, 1
    %p126 = por %p124, %p125
    %p127 = scmp.ne.s32.totalorder %s119, %s122
    %p128 = scmp.eq.s32.totalorder %s15, 0
    %p129 = por %p127, %p128
    %p130 = scmp.ne.s32.totalorder %s119, %s122
    %p131 = scmp.eq.s32.totalorder %s20, 1
    %p132 = por %p130, %p131
    %p133 = scmp.ne.s32.totalorder %s122, %s123
    %p134 = scmp.eq.s32.totalorder %s20, 0
    %p135 = por %p133, %p134
    %p136 = scmp.ne.s32.totalorder %s122, %s123
    %p137 = scmp.eq.s32.totalorder %s21, 1
    %p138 = por %p136, %p137
    %p140 = scmp.ne.s32.totalorder %s123, %s139
    %p141 = scmp.eq.s32.totalorder %s21, 0
    %p142 = por %p140, %p141
    %s144 = sadd.s32 %s143, 1
    %p147 = scmp.eq.s32.totalorder %s15, 1
    %p148 = scmp.ne.s32.totalorder %s143, %s145
    %p149 = scmp.eq.s32.totalorder %s15, 0
    %p150 = por %p148, %p149
    %p151 = scmp.ne.s32.totalorder %s143, %s145
    %p152 = scmp.eq.s32.totalorder %s20, 1
    %p153 = por %p151, %p152
    %p154 = scmp.ne.s32.totalorder %s145, %s146
    %p155 = scmp.eq.s32.totalorder %s20, 0
    %p156 = por %p154, %p155
    %p157 = scmp.ne.s32.totalorder %s145, %s146
    %p158 = scmp.eq.s32.totalorder %s21, 1
    %p159 = por %p157, %p158
    %p161 = scmp.ne.s32.totalorder %s146, %s160
    %p162 = scmp.eq.s32.totalorder %s21, 0
    %p163 = por %p161, %p162
    %s165 = sadd.s32 %s164, 1
    %p168 = scmp.eq.s32.totalorder %s15, 1
    %p169 = scmp.ne.s32.totalorder %s164, %s166
    %p170 = scmp.eq.s32.totalorder %s15, 0
    %p171 = por %p169, %p170
    %p172 = scmp.ne.s32.totalorder %s164, %s166
    %p173 = scmp.eq.s32.totalorder %s20, 1
    %p174 = por %p172, %p173
    %p175 = scmp.ne.s32.totalorder %s166, %s167
    %p176 = scmp.eq.s32.totalorder %s20, 0
    %p177 = por %p175, %p176
    %p178 = scmp.ne.s32.totalorder %s166, %s167
    %p179 = scmp.eq.s32.totalorder %s21, 1
    %p180 = por %p178, %p179
    %p182 = scmp.ne.s32.totalorder %s167, %s181
    %p183 = scmp.eq.s32.totalorder %s21, 0
    %p184 = por %p182, %p183
    %s186 = sadd.s32 %s185, 1
    %p189 = scmp.eq.s32.totalorder %s15, 1
    %p190 = scmp.ne.s32.totalorder %s185, %s187
    %p191 = scmp.eq.s32.totalorder %s15, 0
    %p192 = por %p190, %p191
    %p193 = scmp.ne.s32.totalorder %s185, %s187
    %p194 = scmp.eq.s32.totalorder %s20, 1
    %p195 = por %p193, %p194
    %p196 = scmp.ne.s32.totalorder %s187, %s188
    %p197 = scmp.eq.s32.totalorder %s20, 0
    %p198 = por %p196, %p197
    %p199 = scmp.ne.s32.totalorder %s187, %s188
    %p200 = scmp.eq.s32.totalorder %s21, 1
    %p201 = por %p199, %p200
    %p203 = scmp.ne.s32.totalorder %s188, %s202
    %p204 = scmp.eq.s32.totalorder %s21, 0
    %p205 = por %p203, %p204
    %s207 = sadd.s32 %s206, 1
    %p210 = scmp.eq.s32.totalorder %s15, 1
    %p211 = scmp.ne.s32.totalorder %s206, %s208
    %p212 = scmp.eq.s32.totalorder %s15, 0
    %p213 = por %p211, %p212
    %p214 = scmp.ne.s32.totalorder %s206, %s208
    %p215 = scmp.eq.s32.totalorder %s20, 1
    %p216 = por %p214, %p215
    %p217 = scmp.ne.s32.totalorder %s208, %s209
    %p218 = scmp.eq.s32.totalorder %s20, 0
    %p219 = por %p217, %p218
    %p220 = scmp.ne.s32.totalorder %s208, %s209
    %p221 = scmp.eq.s32.totalorder %s21, 1
    %p222 = por %p220, %p221
    %p224 = scmp.ne.s32.totalorder %s209, %s223
    %p225 = scmp.eq.s32.totalorder %s21, 0
    %p226 = por %p224, %p225
    %p227 = scmp.le.s32.totalorder 1, %s15
    %p228 = scmp.lt.s32.totalorder %s15, 3
    %p229 = pnand %p227, %p228
    %p230 = pneg %p229
    // Predicated region
    $region9: #{residual_block.3} parent=5 // pred_check
      _
    $region10: #{residual_block.3} parent=5 // pred_check_branch
      %232 = sbr.rel (%p229) target = $region12
    $region11: #{residual_block.3} parent=5 // pred_region
      %s233 = ssub.s32 %s15, 1
      // Predicated region
      $region13: #{residual_block.3} parent=11 // pred_check
        %p234 = pneg %p62
      $region14: #{residual_block.3} parent=11 // pred_check_branch
        %236 = sbr.rel (%p234) target = $region16
      $region15: #{residual_block.3} parent=11 // pred_region
        _
      $region16: #{residual_block.3} parent=11 // pred_fallthru
        _
      // Predicated region
      $region17: #{residual_block.3} parent=11 // pred_check
        %p237 = pneg %p83
      $region18: #{residual_block.3} parent=11 // pred_check_branch
        %239 = sbr.rel (%p237) target = $region20
      $region19: #{residual_block.3} parent=11 // pred_region
        _
      $region20: #{residual_block.3} parent=11 // pred_fallthru
        _
    $region12: #{residual_block.3} parent=5 // pred_fallthru
      _
    %p240 = scmp.lt.s32.totalorder %s15, 2
    // Predicated region
    $region21: #{residual_block.3} parent=5 // pred_check
      %p241 = pneg %p240
    $region22: #{residual_block.3} parent=5 // pred_check_branch
      %243 = sbr.rel (%p241) target = $region24
    $region23: #{residual_block.3} parent=5 // pred_region
      // Predicated region
      $region25: #{residual_block.3} parent=23 // pred_check
        %p244 = pneg %p35
      $region26: #{residual_block.3} parent=23 // pred_check_branch
        %246 = sbr.rel (%p244) target = $region28
      $region27: #{residual_block.3} parent=23 // pred_region
        %p247 = scmp.lt.s32.totalorder %s15, 1
        %s248 = scalar_select %p247, %s15, 1
        %s249 = smul.addr %s248, 72
        %s250 = smul.addr %s249, 8
        %s251 = scalar_lea.vmem %s0, %s250
      $region28: #{residual_block.3} parent=23 // pred_fallthru
        _
    $region24: #{residual_block.3} parent=5 // pred_fallthru
      _
    %p252 = scmp.le.s32.totalorder 1, %s15
    %p253 = scmp.lt.s32.totalorder %s15, 3
    %p254 = pnand %p252, %p253
    %p255 = pneg %p254
    // Predicated region
    $region29: #{residual_block.3} parent=5 // pred_check
      _
    $region30: #{residual_block.3} parent=5 // pred_check_branch
      %257 = sbr.rel (%p254) target = $region32
    $region31: #{residual_block.3} parent=5 // pred_region
      %s258 = ssub.s32 %s15, 1
      %p259 = scmp.lt.s32.totalorder %s20, 1
      %s260 = scalar_select %p259, %s20, 1
      %s261 = smul.addr %s260, 72
      %s262 = smul.addr %s261, 8
      %s263 = scalar_lea.vmem %s0, %s262
      %p264 = pneg %p41
      %p265 = pneg %p38
      %p266 = pneg %p62
      %p267 = pneg %p59
      %p268 = pneg %p83
      %p269 = pneg %p80
      %p270 = pneg %p109
      %p271 = pneg %p106
      %p272 = scmp.lt.s32.totalorder %s20, 1
      %s273 = scalar_select %p272, %s20, 1
      %s274 = smul.addr %s273, 8
      %s275 = smul.addr %s274, 8
      %s276 = scalar_lea.vmem %s3, %s275
      %p277 = pneg %p135
      %p278 = pneg %p132
      %p279 = scmp.lt.s32.totalorder %s20, 1
      %s280 = scalar_select %p279, %s20, 1
      %s281 = smul.addr %s280, 8
      %s282 = smul.addr %s281, 8
      %s283 = scalar_lea.vmem %s4, %s282
      %p284 = pneg %p156
      %p285 = pneg %p153
      %p286 = pneg %p177
      %p287 = pneg %p174
      %p288 = pneg %p198
      %p289 = pneg %p195
      %p290 = pneg %p219
      %p291 = pneg %p216
      %p292 = scmp.lt.s32.totalorder %s20, 1
      %s293 = scalar_select %p292, %s20, 1
      %s294 = smul.addr %s293, 72
      %s295 = smul.addr %s294, 8
      %s296 = scalar_lea.vmem %s0, %s295
      %p297 = scmp.lt.s32.totalorder %s20, 1
      %s298 = scalar_select %p297, %s20, 1
      %s299 = smul.addr %s298, 8
      %s300 = smul.addr %s299, 8
      %s301 = scalar_lea.vmem %s3, %s300
      %p302 = scmp.lt.s32.totalorder %s20, 1
      %s303 = scalar_select %p302, %s20, 1
      %s304 = smul.addr %s303, 8
      %s305 = smul.addr %s304, 8
      %s306 = scalar_lea.vmem %s4, %s305
      %p307 = scmp.eq.s32.totalorder %s20, 0
      // Predicated region
      $region33: #{residual_block.3} parent=31 // pred_check
        %p308 = pneg %p307
      $region34: #{residual_block.3} parent=31 // pred_check_branch
        %310 = sbr.rel (%p308) target = $region36
      $region35: #{residual_block.3} parent=31 // pred_region
        %311 = vst [vmem:[%s5] sm:$0x1] 0.0
        %312 = vst [vmem:[%s6] sm:$0x1] 0.0
        %313 = vst [vmem:[%s7] sm:$0x1] 0.0
        %314 = vst [vmem:[%s8] sm:$0x1] 0.0
      $region36: #{residual_block.3} parent=31 // pred_fallthru
        _
      %v315 = vld [vmem:[%s296] sm:$0xff]
      %v316 = vld [vmem:[%s296 + $0x10] sm:$0xff]
      %v317 = vld [vmem:[%s296 + $0x20] sm:$0xff]
      %v318 = vld [vmem:[%s296 + $0x30] sm:$0xff]
      %v319 = vld [vmem:[%s296 + $0x40] sm:$0xff]
      %v320 = vld [vmem:[%s296 + $0x50] sm:$0xff]
      %v321 = vld [vmem:[%s296 + $0x60] sm:$0xff]
      %v322 = vld [vmem:[%s296 + $0x70] sm:$0xff]
      %v323 = vld [vmem:[%s1] sm:$0xf]
      %s324 = scalar_lea.vmem %s296, 144
      %v325 = vld [vmem:[%s324] sm:$0xff]
      %v326 = vld [vmem:[%s324 + $0x10] sm:$0xff]
      %v327 = vld [vmem:[%s324 + $0x20] sm:$0xff]
      %v328 = vld [vmem:[%s324 + $0x30] sm:$0xff]
      %v329 = vld [vmem:[%s324 + $0x40] sm:$0xff]
      %v330 = vld [vmem:[%s324 + $0x50] sm:$0xff]
      %v331 = vld [vmem:[%s324 + $0x60] sm:$0xff]
      %v332 = vld [vmem:[%s324 + $0x70] sm:$0xff]
      %s333 = scalar_lea.vmem %s1, 4
      %v334 = vld [vmem:[%s333] sm:$0xf]
      %vm335 = vcmask 31744
      %v337 = vsel %vm335, %v325, 0
      %v340 = vsel %vm335, %v326, 0
      %v343 = vsel %vm335, %v327, 0
      %v346 = vsel %vm335, %v328, 0
      %v349 = vsel %vm335, %v329, 0
      %v352 = vsel %vm335, %v330, 0
      %v355 = vsel %vm335, %v331, 0
      %v358 = vsel %vm335, %v332, 0
      %vm360 = vcmask 1043456
      %v362 = vsel %vm360, %v334, 0
      %364 = vmatprep.subr.mxu0 0.0
      %365 = vmatpush1.msra.mxu0 %v362
      %366 = vmatprep.subr.mxu0 0.0
      %367 = vmatpush1.msra.mxu0 0.0
      %368 = vmatprep.subr.mxu0 0.0
      %369 = vmatpush1.msra.mxu0 0.0
      %370 = vmatprep.subr.mxu0 0.0
      %371 = vmatpush1.msra.mxu0 0.0
      %372 = vmatprep.subr.mxu0 0.0
      %373 = vmatpush1.msra.mxu0 0.0
      %374 = vmatprep.subr.mxu0 0.0
      %375 = vmatpush1.msra.mxu0 0.0
      %376 = vmatprep.subr.mxu0 0.0
      %377 = vmatpush1.msra.mxu0 0.0
      %378 = vmatprep.subr.mxu0 0.0
      %379 = vmatpush1.msra.mxu0 0.0
      %380 = vmatprep.subr.mxu0 0.0
      %381 = vmatpush1.msra.mxu0 0.0
      %382 = vmatprep.subr.mxu0 0.0
      %383 = vmatpush1.msra.mxu0 0.0
      %384 = vmatprep.subr.mxu0 0.0
      %385 = vmatpush1.msra.mxu0 0.0
      %386 = vmatprep.subr.mxu0 0.0
      %387 = vmatpush1.msra.mxu0 0.0
      %388 = vmatprep.subr.mxu0 0.0
      %389 = vmatpush1.msra.mxu0 0.0
      %390 = vmatprep.subr.mxu0 0.0
      %391 = vmatpush1.msra.mxu0 0.0
      %392 = vmatprep.subr.mxu0 0.0
      %393 = vmatpush1.msra.mxu0 0.0
      %394 = vmatprep.subr.mxu0 0.0
      %395 = vmatpush1.msra.mxu0 0.0
      %396 = vmatprep.subr.mxu0 0.0
      %397 = vmatpush1.msra.mxu0 0.0
      %398 = vmatprep.subr.mxu0 0.0
      %399 = vmatpush1.msra.mxu0 0.0
      %400 = vmatprep.subr.mxu0 0.0
      %401 = vmatpush1.msra.mxu0 0.0
      %402 = vmatprep.subr.mxu0 0.0
      %403 = vmatpush1.msra.mxu0 0.0
      %404 = vmatprep.subr.mxu0 0.0
      %405 = vmatpush1.msra.mxu0 0.0
      %406 = vmatprep.subr.mxu0 0.0
      %407 = vmatpush1.msra.mxu0 0.0
      %408 = vmatprep.subr.mxu0 0.0
      %409 = vmatpush1.msra.mxu0 0.0
      %410 = vmatprep.subr.mxu0 0.0
      %411 = vmatpush1.msra.mxu0 0.0
      %412 = vmatprep.subr.mxu0 0.0
      %413 = vmatpush1.msra.mxu0 0.0
      %414 = vmatprep.subr.mxu0 0.0
      %415 = vmatpush1.msra.mxu0 0.0
      %416 = vmatprep.subr.mxu0 0.0
      %417 = vmatpush1.msra.mxu0 0.0
      %418 = vmatprep.subr.mxu0 0.0
      %419 = vmatpush1.msra.mxu0 0.0
      %420 = vmatprep.subr.mxu0 0.0
      %421 = vmatpush1.msra.mxu0 0.0
      %422 = vmatprep.subr.mxu0 0.0
      %423 = vmatpush1.msra.mxu0 0.0
      %424 = vmatprep.subr.mxu0 0.0
      %425 = vmatpush1.msra.mxu0 0.0
      %426 = vmatprep.subr.mxu0 0.0
      %427 = vmatpush1.msra.mxu0 0.0
      %428 = vmatprep.mubr.f32.mxu0 0.0
      %429 = vmatmul.mubr.f32.gmra.mrb[0].mxu0 %v337
      %v430 = vpop.f32.mrb[0].mxu0
      %v431 = vadd.f32 0.0, %v430
      %v432 = vpop.f32.mrb[0].mxu0
      %433 = vmatprep.mubr.f32.mxu0 0.0
      %434 = vmatmul.mubr.f32.gmra.mrb[0].mxu0 %v340
      %v435 = vpop.f32.mrb[0].mxu0
      %v436 = vadd.f32 0.0, %v435
      %v437 = vpop.f32.mrb[0].mxu0
      %438 = vmatprep.mubr.f32.mxu0 0.0
      %439 = vmatmul.mubr.f32.gmra.mrb[0].mxu0 %v343
      %v440 = vpop.f32.mrb[0].mxu0
      %v441 = vadd.f32 0.0, %v440
      %v442 = vpop.f32.mrb[0].mxu0
      %443 = vmatprep.mubr.f32.mxu0 0.0
      %444 = vmatmul.mubr.f32.gmra.mrb[0].mxu0 %v346
      %v445 = vpop.f32.mrb[0].mxu0
      %v446 = vadd.f32 0.0, %v445
      %v447 = vpop.f32.mrb[0].mxu0
      %448 = vmatprep.mubr.f32.mxu0 0.0
      %449 = vmatmul.mubr.f32.gmra.mrb[0].mxu0 %v349
      %v450 = vpop.f32.mrb[0].mxu0
      %v451 = vadd.f32 0.0, %v450
      %v452 = vpop.f32.mrb[0].mxu0
      %453 = vmatprep.mubr.f32.mxu0 0.0
      %454 = vmatmul.mubr.f32.gmra.mrb[0].mxu0 %v352
      %v455 = vpop.f32.mrb[0].mxu0
      %v456 = vadd.f32 0.0, %v455
      %v457 = vpop.f32.mrb[0].mxu0
      %458 = vmatprep.mubr.f32.mxu0 0.0
      %459 = vmatmul.mubr.f32.gmra.mrb[0].mxu0 %v355
      %v460 = vpop.f32.mrb[0].mxu0
      %v461 = vadd.f32 0.0, %v460
      %v462 = vpop.f32.mrb[0].mxu0
      %463 = vmatprep.mubr.f32.mxu0 0.0
      %464 = vmatmul.mubr.f32.gmra.mrb[0].mxu0 %v358
      %v465 = vpop.f32.mrb[0].mxu0
      %v466 = vadd.f32 0.0, %v465
      %v467 = vpop.f32.mrb[0].mxu0
      %468 = vdwg.mxu0
      %v470 = vsel %vm335, %v315, 0
      %v473 = vsel %vm335, %v316, 0
      %v476 = vsel %vm335, %v317, 0
      %v479 = vsel %vm335, %v318, 0
      %v482 = vsel %vm335, %v319, 0
      %v485 = vsel %vm335, %v320, 0
      %v488 = vsel %vm335, %v321, 0
      %v491 = vsel %vm335, %v322, 0
      %v494 = vsel %vm360, %v323, 0
      %496 = vmatprep.subr.mxu0 0.0
      %497 = vmatpush1.msra.mxu0 %v494
      %498 = vmatprep.subr.mxu0 0.0
      %499 = vmatpush1.msra.mxu0 0.0
      %500 = vmatprep.subr.mxu0 0.0
      %501 = vmatpush1.msra.mxu0 0.0
      %502 = vmatprep.subr.mxu0 0.0
      %503 = vmatpush1.msra.mxu0 0.0
      %504 = vmatprep.subr.mxu0 0.0
      %505 = vmatpush1.msra.mxu0 0.0
      %506 = vmatprep.subr.mxu0 0.0
      %507 = vmatpush1.msra.mxu0 0.0
      %508 = vmatprep.subr.mxu0 0.0
      %509 = vmatpush1.msra.mxu0 0.0
      %510 = vmatprep.subr.mxu0 0.0
      %511 = vmatpush1.msra.mxu0 0.0
      %512 = vmatprep.subr.mxu0 0.0
      %513 = vmatpush1.msra.mxu0 0.0
      %514 = vmatprep.subr.mxu0 0.0
      %515 = vmatpush1.msra.mxu0 0.0
      %516 = vmatprep.subr.mxu0 0.0
      %517 = vmatpush1.msra.mxu0 0.0
      %518 = vmatprep.subr.mxu0 0.0
      %519 = vmatpush1.msra.mxu0 0.0
      %520 = vmatprep.subr.mxu0 0.0
      %521 = vmatpush1.msra.mxu0 0.0
      %522 = vmatprep.subr.mxu0 0.0
      %523 = vmatpush1.msra.mxu0 0.0
      %524 = vmatprep.subr.mxu0 0.0
      %525 = vmatpush1.msra.mxu0 0.0
      %526 = vmatprep.subr.mxu0 0.0
      %527 = vmatpush1.msra.mxu0 0.0
      %528 = vmatprep.subr.mxu0 0.0
      %529 = vmatpush1.msra.mxu0 0.0
      %530 = vmatprep.subr.mxu0 0.0
      %531 = vmatpush1.msra.mxu0 0.0
      %532 = vmatprep.subr.mxu0 0.0
      %533 = vmatpush1.msra.mxu0 0.0
      %534 = vmatprep.subr.mxu0 0.0
      %535 = vmatpush1.msra.mxu0 0.0
      %536 = vmatprep.subr.mxu0 0.0
      %537 = vmatpush1.msra.mxu0 0.0
      %538 = vmatprep.subr.mxu0 0.0
      %539 = vmatpush1.msra.mxu0 0.0
      %540 = vmatprep.subr.mxu0 0.0
      %541 = vmatpush1.msra.mxu0 0.0
      %542 = vmatprep.subr.mxu0 0.0
      %543 = vmatpush1.msra.mxu0 0.0
      %544 = vmatprep.subr.mxu0 0.0
      %545 = vmatpush1.msra.mxu0 0.0
      %546 = vmatprep.subr.mxu0 0.0
      %547 = vmatpush1.msra.mxu0 0.0
      %548 = vmatprep.subr.mxu0 0.0
      %549 = vmatpush1.msra.mxu0 0.0
      %550 = vmatprep.subr.mxu0 0.0
      %551 = vmatpush1.msra.mxu0 0.0
      %552 = vmatprep.subr.mxu0 0.0
      %553 = vmatpush1.msra.mxu0 0.0
      %554 = vmatprep.subr.mxu0 0.0
      %555 = vmatpush1.msra.mxu0 0.0
      %556 = vmatprep.subr.mxu0 0.0
      %557 = vmatpush1.msra.mxu0 0.0
      %558 = vmatprep.subr.mxu0 0.0
      %559 = vmatpush1.msra.mxu0 0.0
      %560 = vmatprep.mubr.f32.mxu0 0.0
      %561 = vmatmul.mubr.f32.gmra.mrb[0].mxu0 %v470
      %v562 = vpop.f32.mrb[0].mxu0
      %v563 = vadd.f32 %v431, %v562
      %v564 = vpop.f32.mrb[0].mxu0
      %565 = vmatprep.mubr.f32.mxu0 0.0
      %566 = vmatmul.mubr.f32.gmra.mrb[0].mxu0 %v473
      %v567 = vpop.f32.mrb[0].mxu0
      %v568 = vadd.f32 %v436, %v567
      %v569 = vpop.f32.mrb[0].mxu0
      %570 = vmatprep.mubr.f32.mxu0 0.0
      %571 = vmatmul.mubr.f32.gmra.mrb[0].mxu0 %v476
      %v572 = vpop.f32.mrb[0].mxu0
      %v573 = vadd.f32 %v441, %v572
      %v574 = vpop.f32.mrb[0].mxu0
      %575 = vmatprep.mubr.f32.mxu0 0.0
      %576 = vmatmul.mubr.f32.gmra.mrb[0].mxu0 %v479
      %v577 = vpop.f32.mrb[0].mxu0
      %v578 = vadd.f32 %v446, %v577
      %v579 = vpop.f32.mrb[0].mxu0
      %580 = vmatprep.mubr.f32.mxu0 0.0
      %581 = vmatmul.mubr.f32.gmra.mrb[0].mxu0 %v482
      %v582 = vpop.f32.mrb[0].mxu0
      %v583 = vadd.f32 %v451, %v582
      %v584 = vpop.f32.mrb[0].mxu0
      %585 = vmatprep.mubr.f32.mxu0 0.0
      %586 = vmatmul.mubr.f32.gmra.mrb[0].mxu0 %v485
      %v587 = vpop.f32.mrb[0].mxu0
      %v588 = vadd.f32 %v456, %v587
      %v589 = vpop.f32.mrb[0].mxu0
      %590 = vmatprep.mubr.f32.mxu0 0.0
      %591 = vmatmul.mubr.f32.gmra.mrb[0].mxu0 %v488
      %v592 = vpop.f32.mrb[0].mxu0
      %v593 = vadd.f32 %v461, %v592
      %v594 = vpop.f32.mrb[0].mxu0
      %595 = vmatprep.mubr.f32.mxu0 0.0
      %596 = vmatmul.mubr.f32.gmra.mrb[0].mxu0 %v491
      %v597 = vpop.f32.mrb[0].mxu0
      %v598 = vadd.f32 %v466, %v597
      %v599 = vpop.f32.mrb[0].mxu0
      %600 = vdwg.mxu0
      %v601 = vld [vmem:[%s296 + $0x1] sm:$0xff]
      %v602 = vld [vmem:[%s296 + $0x11] sm:$0xff]
      %v603 = vld [vmem:[%s296 + $0x21] sm:$0xff]
      %v604 = vld [vmem:[%s296 + $0x31] sm:$0xff]
      %v605 = vld [vmem:[%s296 + $0x41] sm:$0xff]
      %v606 = vld [vmem:[%s296 + $0x51] sm:$0xff]
      %v607 = vld [vmem:[%s296 + $0x61] sm:$0xff]
      %v608 = vld [vmem:[%s296 + $0x71] sm:$0xff]
      %s609 = scalar_lea.vmem %s1, 8
      %v610 = vld [vmem:[%s609] sm:$0xf]
      %v612 = vsel %vm335, %v601, 0
      %v615 = vsel %vm335, %v602, 0
      %v618 = vsel %vm335, %v603, 0
      %v621 = vsel %vm335, %v604, 0
      %v624 = vsel %vm335, %v605, 0
      %v627 = vsel %vm335, %v606, 0
      %v630 = vsel %vm335, %v607, 0
      %v633 = vsel %vm335, %v608, 0
      %v636 = vsel %vm360, %v610, 0
      %638 = vmatprep.subr.mxu0 0.0
      %639 = vmatpush1.msra.mxu0 %v636
      %640 = vmatprep.subr.mxu0 0.0
      %641 = vmatpush1.msra.mxu0 0.0
      %642 = vmatprep.subr.mxu0 0.0
      %643 = vmatpush1.msra.mxu0 0.0
      %644 = vmatprep.subr.mxu0 0.0
      %645 = vmatpush1.msra.mxu0 0.0
      %646 = vmatprep.subr.mxu0 0.0
      %647 = vmatpush1.msra.mxu0 0.0
      %648 = vmatprep.subr.mxu0 0.0
      %649 = vmatpush1.msra.mxu0 0.0
      %650 = vmatprep.subr.mxu0 0.0
      %651 = vmatpush1.msra.mxu0 0.0
      %652 = vmatprep.subr.mxu0 0.0
      %653 = vmatpush1.msra.mxu0 0.0
      %654 = vmatprep.subr.mxu0 0.0
      %655 = vmatpush1.msra.mxu0 0.0
      %656 = vmatprep.subr.mxu0 0.0
      %657 = vmatpush1.msra.mxu0 0.0
      %658 = vmatprep.subr.mxu0 0.0
      %659 = vmatpush1.msra.mxu0 0.0
      %660 = vmatprep.subr.mxu0 0.0
      %661 = vmatpush1.msra.mxu0 0.0
      %662 = vmatprep.subr.mxu0 0.0
      %663 = vmatpush1.msra.mxu0 0.0
      %664 = vmatprep.subr.mxu0 0.0
      %665 = vmatpush1.msra.mxu0 0.0
      %666 = vmatprep.subr.mxu0 0.0
      %667 = vmatpush1.msra.mxu0 0.0
      %668 = vmatprep.subr.mxu0 0.0
      %669 = vmatpush1.msra.mxu0 0.0
      %670 = vmatprep.subr.mxu0 0.0
      %671 = vmatpush1.msra.mxu0 0.0
      %672 = vmatprep.subr.mxu0 0.0
      %673 = vmatpush1.msra.mxu0 0.0
      %674 = vmatprep.subr.mxu0 0.0
      %675 = vmatpush1.msra.mxu0 0.0
      %676 = vmatprep.subr.mxu0 0.0
      %677 = vmatpush1.msra.mxu0 0.0
      %678 = vmatprep.subr.mxu0 0.0
      %679 = vmatpush1.msra.mxu0 0.0
      %680 = vmatprep.subr.mxu0 0.0
      %681 = vmatpush1.msra.mxu0 0.0
      %682 = vmatprep.subr.mxu0 0.0
      %683 = vmatpush1.msra.mxu0 0.0
      %684 = vmatprep.subr.mxu0 0.0
      %685 = vmatpush1.msra.mxu0 0.0
      %686 = vmatprep.subr.mxu0 0.0
      %687 = vmatpush1.msra.mxu0 0.0
      %688 = vmatprep.subr.mxu0 0.0
      %689 = vmatpush1.msra.mxu0 0.0
      %690 = vmatprep.subr.mxu0 0.0
      %691 = vmatpush1.msra.mxu0 0.0
      %692 = vmatprep.subr.mxu0 0.0
      %693 = vmatpush1.msra.mxu0 0.0
      %694 = vmatprep.subr.mxu0 0.0
      %695 = vmatpush1.msra.mxu0 0.0
      %696 = vmatprep.subr.mxu0 0.0
      %697 = vmatpush1.msra.mxu0 0.0
      %698 = vmatprep.subr.mxu0 0.0
      %699 = vmatpush1.msra.mxu0 0.0
      %700 = vmatprep.subr.mxu0 0.0
      %701 = vmatpush1.msra.mxu0 0.0
      %702 = vmatprep.mubr.f32.mxu0 0.0
      %703 = vmatmul.mubr.f32.gmra.mrb[0].mxu0 %v612
      %v704 = vpop.f32.mrb[0].mxu0
      %v705 = vadd.f32 0.0, %v704
      %v706 = vpop.f32.mrb[0].mxu0
      %707 = vmatprep.mubr.f32.mxu0 0.0
      %708 = vmatmul.mubr.f32.gmra.mrb[0].mxu0 %v615
      %v709 = vpop.f32.mrb[0].mxu0
      %v710 = vadd.f32 0.0, %v709
      %v711 = vpop.f32.mrb[0].mxu0
      %712 = vmatprep.mubr.f32.mxu0 0.0
      %713 = vmatmul.mubr.f32.gmra.mrb[0].mxu0 %v618
      %v714 = vpop.f32.mrb[0].mxu0
      %v715 = vadd.f32 0.0, %v714
      %v716 = vpop.f32.mrb[0].mxu0
      %717 = vmatprep.mubr.f32.mxu0 0.0
      %718 = vmatmul.mubr.f32.gmra.mrb[0].mxu0 %v621
      %v719 = vpop.f32.mrb[0].mxu0
      %v720 = vadd.f32 0.0, %v719
      %v721 = vpop.f32.mrb[0].mxu0
      %722 = vmatprep.mubr.f32.mxu0 0.0
      %723 = vmatmul.mubr.f32.gmra.mrb[0].mxu0 %v624
      %v724 = vpop.f32.mrb[0].mxu0
      %v725 = vadd.f32 0.0, %v724
      %v726 = vpop.f32.mrb[0].mxu0
      %727 = vmatprep.mubr.f32.mxu0 0.0
      %728 = vmatmul.mubr.f32.gmra.mrb[0].mxu0 %v627
      %v729 = vpop.f32.mrb[0].mxu0
      %v730 = vadd.f32 0.0, %v729
      %v731 = vpop.f32.mrb[0].mxu0
      %732 = vmatprep.mubr.f32.mxu0 0.0
      %733 = vmatmul.mubr.f32.gmra.mrb[0].mxu0 %v630
      %v734 = vpop.f32.mrb[0].mxu0
      %v735 = vadd.f32 0.0, %v734
      %v736 = vpop.f32.mrb[0].mxu0
      %737 = vmatprep.mubr.f32.mxu0 0.0
      %738 = vmatmul.mubr.f32.gmra.mrb[0].mxu0 %v633
      %v739 = vpop.f32.mrb[0].mxu0
      %v740 = vadd.f32 0.0, %v739
      %v741 = vpop.f32.mrb[0].mxu0
      %742 = vdwg.mxu0
      %v743 = vadd.f32 %v563, %v705
      %v744 = vadd.f32 %v568, %v710
      %v745 = vadd.f32 %v573, %v715
      %v746 = vadd.f32 %v578, %v720
      %v747 = vadd.f32 %v583, %v725
      %v748 = vadd.f32 %v588, %v730
      %v749 = vadd.f32 %v593, %v735
      %v750 = vadd.f32 %v598, %v740
      %s751 = scalar_lea.vmem %s296, 288
      %v752 = vld [vmem:[%s751] sm:$0xff]
      %v753 = vld [vmem:[%s751 + $0x10] sm:$0xff]
      %v754 = vld [vmem:[%s751 + $0x20] sm:$0xff]
      %v755 = vld [vmem:[%s751 + $0x30] sm:$0xff]
      %v756 = vld [vmem:[%s751 + $0x40] sm:$0xff]
      %v757 = vld [vmem:[%s751 + $0x50] sm:$0xff]
      %v758 = vld [vmem:[%s751 + $0x60] sm:$0xff]
      %v759 = vld [vmem:[%s751 + $0x70] sm:$0xff]
      %s760 = scalar_lea.vmem %s1, 12
      %v761 = vld [vmem:[%s760] sm:$0xf]
      %v763 = vsel %vm335, %v752, 0
      %v766 = vsel %vm335, %v753, 0
      %v769 = vsel %vm335, %v754, 0
      %v772 = vsel %vm335, %v755, 0
      %v775 = vsel %vm335, %v756, 0
      %v778 = vsel %vm335, %v757, 0
      %v781 = vsel %vm335, %v758, 0
      %v784 = vsel %vm335, %v759, 0
      %v787 = vsel %vm360, %v761, 0
      %789 = vmatprep.subr.mxu0 0.0
      %790 = vmatpush1.msra.mxu0 %v787
      %791 = vmatprep.subr.mxu0 0.0
      %792 = vmatpush1.msra.mxu0 0.0
      %793 = vmatprep.subr.mxu0 0.0
      %794 = vmatpush1.msra.mxu0 0.0
      %795 = vmatprep.subr.mxu0 0.0
      %796 = vmatpush1.msra.mxu0 0.0
      %797 = vmatprep.subr.mxu0 0.0
      %798 = vmatpush1.msra.mxu0 0.0
      %799 = vmatprep.subr.mxu0 0.0
      %800 = vmatpush1.msra.mxu0 0.0
      %801 = vmatprep.subr.mxu0 0.0
      %802 = vmatpush1.msra.mxu0 0.0
      %803 = vmatprep.subr.mxu0 0.0
      %804 = vmatpush1.msra.mxu0 0.0
      %805 = vmatprep.subr.mxu0 0.0
      %806 = vmatpush1.msra.mxu0 0.0
      %807 = vmatprep.subr.mxu0 0.0
      %808 = vmatpush1.msra.mxu0 0.0
      %809 = vmatprep.subr.mxu0 0.0
      %810 = vmatpush1.msra.mxu0 0.0
      %811 = vmatprep.subr.mxu0 0.0
      %812 = vmatpush1.msra.mxu0 0.0
      %813 = vmatprep.subr.mxu0 0.0
      %814 = vmatpush1.msra.mxu0 0.0
      %815 = vmatprep.subr.mxu0 0.0
      %816 = vmatpush1.msra.mxu0 0.0
      %817 = vmatprep.subr.mxu0 0.0
      %818 = vmatpush1.msra.mxu0 0.0
      %819 = vmatprep.subr.mxu0 0.0
      %820 = vmatpush1.msra.mxu0 0.0
      %821 = vmatprep.subr.mxu0 0.0
      %822 = vmatpush1.msra.mxu0 0.0
      %823 = vmatprep.subr.mxu0 0.0
      %824 = vmatpush1.msra.mxu0 0.0
      %825 = vmatprep.subr.mxu0 0.0
      %826 = vmatpush1.msra.mxu0 0.0
      %827 = vmatprep.subr.mxu0 0.0
      %828 = vmatpush1.msra.mxu0 0.0
      %829 = vmatprep.subr.mxu0 0.0
      %830 = vmatpush1.msra.mxu0 0.0
      %831 = vmatprep.subr.mxu0 0.0
      %832 = vmatpush1.msra.mxu0 0.0
      %833 = vmatprep.subr.mxu0 0.0
      %834 = vmatpush1.msra.mxu0 0.0
      %835 = vmatprep.subr.mxu0 0.0
      %836 = vmatpush1.msra.mxu0 0.0
      %837 = vmatprep.subr.mxu0 0.0
      %838 = vmatpush1.msra.mxu0 0.0
      %839 = vmatprep.subr.mxu0 0.0
      %840 = vmatpush1.msra.mxu0 0.0
      %841 = vmatprep.subr.mxu0 0.0
      %842 = vmatpush1.msra.mxu0 0.0
      %843 = vmatprep.subr.mxu0 0.0
      %844 = vmatpush1.msra.mxu0 0.0
      %845 = vmatprep.subr.mxu0 0.0
      %846 = vmatpush1.msra.mxu0 0.0
      %847 = vmatprep.subr.mxu0 0.0
      %848 = vmatpush1.msra.mxu0 0.0
      %849 = vmatprep.subr.mxu0 0.0
      %850 = vmatpush1.msra.mxu0 0.0
      %851 = vmatprep.subr.mxu0 0.0
      %852 = vmatpush1.msra.mxu0 0.0
      %853 = vmatprep.mubr.f32.mxu0 0.0
      %854 = vmatmul.mubr.f32.gmra.mrb[0].mxu0 %v763
      %v855 = vpop.f32.mrb[0].mxu0
      %v856 = vadd.f32 0.0, %v855
      %v857 = vpop.f32.mrb[0].mxu0
      %858 = vmatprep.mubr.f32.mxu0 0.0
      %859 = vmatmul.mubr.f32.gmra.mrb[0].mxu0 %v766
      %v860 = vpop.f32.mrb[0].mxu0
      %v861 = vadd.f32 0.0, %v860
      %v862 = vpop.f32.mrb[0].mxu0
      %863 = vmatprep.mubr.f32.mxu0 0.0
      %864 = vmatmul.mubr.f32.gmra.mrb[0].mxu0 %v769
      %v865 = vpop.f32.mrb[0].mxu0
      %v866 = vadd.f32 0.0, %v865
      %v867 = vpop.f32.mrb[0].mxu0
      %868 = vmatprep.mubr.f32.mxu0 0.0
      %869 = vmatmul.mubr.f32.gmra.mrb[0].mxu0 %v772
      %v870 = vpop.f32.mrb[0].mxu0
      %v871 = vadd.f32 0.0, %v870
      %v872 = vpop.f32.mrb[0].mxu0
      %873 = vmatprep.mubr.f32.mxu0 0.0
      %874 = vmatmul.mubr.f32.gmra.mrb[0].mxu0 %v775
      %v875 = vpop.f32.mrb[0].mxu0
      %v876 = vadd.f32 0.0, %v875
      %v877 = vpop.f32.mrb[0].mxu0
      %878 = vmatprep.mubr.f32.mxu0 0.0
      %879 = vmatmul.mubr.f32.gmra.mrb[0].mxu0 %v778
      %v880 = vpop.f32.mrb[0].mxu0
      %v881 = vadd.f32 0.0, %v880
      %v882 = vpop.f32.mrb[0].mxu0
      %883 = vmatprep.mubr.f32.mxu0 0.0
      %884 = vmatmul.mubr.f32.gmra.mrb[0].mxu0 %v781
      %v885 = vpop.f32.mrb[0].mxu0
      %v886 = vadd.f32 0.0, %v885
      %v887 = vpop.f32.mrb[0].mxu0
      %888 = vmatprep.mubr.f32.mxu0 0.0
      %889 = vmatmul.mubr.f32.gmra.mrb[0].mxu0 %v784
      %v890 = vpop.f32.mrb[0].mxu0
      %v891 = vadd.f32 0.0, %v890
      %v892 = vpop.f32.mrb[0].mxu0
      %893 = vdwg.mxu0
      %v894 = vadd.f32 %v743, %v856
      %v895 = vadd.f32 %v744, %v861
      %v896 = vadd.f32 %v745, %v866
      %v897 = vadd.f32 %v746, %v871
      %v898 = vadd.f32 %v747, %v876
      %v899 = vadd.f32 %v748, %v881
      %v900 = vadd.f32 %v749, %v886
      %v901 = vadd.f32 %v750, %v891
      %s902 = scalar_lea.vmem %s296, 432
      %v903 = vld [vmem:[%s902] sm:$0xff]
      %v904 = vld [vmem:[%s902 + $0x10] sm:$0xff]
      %v905 = vld [vmem:[%s902 + $0x20] sm:$0xff]
      %v906 = vld [vmem:[%s902 + $0x30] sm:$0xff]
      %v907 = vld [vmem:[%s902 + $0x40] sm:$0xff]
      %v908 = vld [vmem:[%s902 + $0x50] sm:$0xff]
      %v909 = vld [vmem:[%s902 + $0x60] sm:$0xff]
      %v910 = vld [vmem:[%s902 + $0x70] sm:$0xff]
      %s911 = scalar_lea.vmem %s1, 16
      %v912 = vld [vmem:[%s911] sm:$0xf]
      %v914 = vsel %vm335, %v903, 0
      %v917 = vsel %vm335, %v904, 0
      %v920 = vsel %vm335, %v905, 0
      %v923 = vsel %vm335, %v906, 0
      %v926 = vsel %vm335, %v907, 0
      %v929 = vsel %vm335, %v908, 0
      %v932 = vsel %vm335, %v909, 0
      %v935 = vsel %vm335, %v910, 0
      %v938 = vsel %vm360, %v912, 0
      %940 = vmatprep.subr.mxu0 0.0
      %941 = vmatpush1.msra.mxu0 %v938
      %942 = vmatprep.subr.mxu0 0.0
      %943 = vmatpush1.msra.mxu0 0.0
      %944 = vmatprep.subr.mxu0 0.0
      %945 = vmatpush1.msra.mxu0 0.0
      %946 = vmatprep.subr.mxu0 0.0
      %947 = vmatpush1.msra.mxu0 0.0
      %948 = vmatprep.subr.mxu0 0.0
      %949 = vmatpush1.msra.mxu0 0.0
      %950 = vmatprep.subr.mxu0 0.0
      %951 = vmatpush1.msra.mxu0 0.0
      %952 = vmatprep.subr.mxu0 0.0
      %953 = vmatpush1.msra.mxu0 0.0
      %954 = vmatprep.subr.mxu0 0.0
      %955 = vmatpush1.msra.mxu0 0.0
      %956 = vmatprep.subr.mxu0 0.0
      %957 = vmatpush1.msra.mxu0 0.0
      %958 = vmatprep.subr.mxu0 0.0
      %959 = vmatpush1.msra.mxu0 0.0
      %960 = vmatprep.subr.mxu0 0.0
      %961 = vmatpush1.msra.mxu0 0.0
      %962 = vmatprep.subr.mxu0 0.0
      %963 = vmatpush1.msra.mxu0 0.0
      %964 = vmatprep.subr.mxu0 0.0
      %965 = vmatpush1.msra.mxu0 0.0
      %966 = vmatprep.subr.mxu0 0.0
      %967 = vmatpush1.msra.mxu0 0.0
      %968 = vmatprep.subr.mxu0 0.0
      %969 = vmatpush1.msra.mxu0 0.0
      %970 = vmatprep.subr.mxu0 0.0
      %971 = vmatpush1.msra.mxu0 0.0
      %972 = vmatprep.subr.mxu0 0.0
      %973 = vmatpush1.msra.mxu0 0.0
      %974 = vmatprep.subr.mxu0 0.0
      %975 = vmatpush1.msra.mxu0 0.0
      %976 = vmatprep.subr.mxu0 0.0
      %977 = vmatpush1.msra.mxu0 0.0
      %978 = vmatprep.subr.mxu0 0.0
      %979 = vmatpush1.msra.mxu0 0.0
      %980 = vmatprep.subr.mxu0 0.0
      %981 = vmatpush1.msra.mxu0 0.0
      %982 = vmatprep.subr.mxu0 0.0
      %983 = vmatpush1.msra.mxu0 0.0
      %984 = vmatprep.subr.mxu0 0.0
      %985 = vmatpush1.msra.mxu0 0.0
      %986 = vmatprep.subr.mxu0 0.0
      %987 = vmatpush1.msra.mxu0 0.0
      %988 = vmatprep.subr.mxu0 0.0
      %989 = vmatpush1.msra.mxu0 0.0
      %990 = vmatprep.subr.mxu0 0.0
      %991 = vmatpush1.msra.mxu0 0.0
      %992 = vmatprep.subr.mxu0 0.0
      %993 = vmatpush1.msra.mxu0 0.0
      %994 = vmatprep.subr.mxu0 0.0
      %995 = vmatpush1.msra.mxu0 0.0
      %996 = vmatprep.subr.mxu0 0.0
      %997 = vmatpush1.msra.mxu0 0.0
      %998 = vmatprep.subr.mxu0 0.0
      %999 = vmatpush1.msra.mxu0 0.0
      %1000 = vmatprep.subr.mxu0 0.0
      %1001 = vmatpush1.msra.mxu0 0.0
      %1002 = vmatprep.subr.mxu0 0.0
      %1003 = vmatpush1.msra.mxu0 0.0
      %1004 = vmatprep.mubr.f32.mxu0 0.0
      %1005 = vmatmul.mubr.f32.gmra.mrb[0].mxu0 %v914
      %v1006 = vpop.f32.mrb[0].mxu0
      %v1007 = vadd.f32 0.0, %v1006
      %v1008 = vpop.f32.mrb[0].mxu0
      %1009 = vmatprep.mubr.f32.mxu0 0.0
      %1010 = vmatmul.mubr.f32.gmra.mrb[0].mxu0 %v917
      %v1011 = vpop.f32.mrb[0].mxu0
      %v1012 = vadd.f32 0.0, %v1011
      %v1013 = vpop.f32.mrb[0].mxu0
      %1014 = vmatprep.mubr.f32.mxu0 0.0
      %1015 = vmatmul.mubr.f32.gmra.mrb[0].mxu0 %v920
      %v1016 = vpop.f32.mrb[0].mxu0
      %v1017 = vadd.f32 0.0, %v1016
      %v1018 = vpop.f32.mrb[0].mxu0
      %1019 = vmatprep.mubr.f32.mxu0 0.0
      %1020 = vmatmul.mubr.f32.gmra.mrb[0].mxu0 %v923
      %v1021 = vpop.f32.mrb[0].mxu0
      %v1022 = vadd.f32 0.0, %v1021
      %v1023 = vpop.f32.mrb[0].mxu0
      %1024 = vmatprep.mubr.f32.mxu0 0.0
      %1025 = vmatmul.mubr.f32.gmra.mrb[0].mxu0 %v926
      %v1026 = vpop.f32.mrb[0].mxu0
      %v1027 = vadd.f32 0.0, %v1026
      %v1028 = vpop.f32.mrb[0].mxu0
      %1029 = vmatprep.mubr.f32.mxu0 0.0
      %1030 = vmatmul.mubr.f32.gmra.mrb[0].mxu0 %v929
      %v1031 = vpop.f32.mrb[0].mxu0
      %v1032 = vadd.f32 0.0, %v1031
      %v1033 = vpop.f32.mrb[0].mxu0
      %1034 = vmatprep.mubr.f32.mxu0 0.0
      %1035 = vmatmul.mubr.f32.gmra.mrb[0].mxu0 %v932
      %v1036 = vpop.f32.mrb[0].mxu0
      %v1037 = vadd.f32 0.0, %v1036
      %v1038 = vpop.f32.mrb[0].mxu0
      %1039 = vmatprep.mubr.f32.mxu0 0.0
      %1040 = vmatmul.mubr.f32.gmra.mrb[0].mxu0 %v935
      %v1041 = vpop.f32.mrb[0].mxu0
      %v1042 = vadd.f32 0.0, %v1041
      %v1043 = vpop.f32.mrb[0].mxu0
      %1044 = vdwg.mxu0
      %v1045 = vadd.f32 %v894, %v1007
      %v1046 = vadd.f32 %v895, %v1012
      %v1047 = vadd.f32 %v896, %v1017
      %v1048 = vadd.f32 %v897, %v1022
      %v1049 = vadd.f32 %v898, %v1027
      %v1050 = vadd.f32 %v899, %v1032
      %v1051 = vadd.f32 %v900, %v1037
      %v1052 = vadd.f32 %v901, %v1042
      %v1053 = vld [vmem:[%s751 + $0x1] sm:$0xff]
      %v1054 = vld [vmem:[%s751 + $0x11] sm:$0xff]
      %v1055 = vld [vmem:[%s751 + $0x21] sm:$0xff]
      %v1056 = vld [vmem:[%s751 + $0x31] sm:$0xff]
      %v1057 = vld [vmem:[%s751 + $0x41] sm:$0xff]
      %v1058 = vld [vmem:[%s751 + $0x51] sm:$0xff]
      %v1059 = vld [vmem:[%s751 + $0x61] sm:$0xff]
      %v1060 = vld [vmem:[%s751 + $0x71] sm:$0xff]
      %s1061 = scalar_lea.vmem %s1, 20
      %v1062 = vld [vmem:[%s1061] sm:$0xf]
      %v1064 = vsel %vm335, %v1053, 0
      %v1067 = vsel %vm335, %v1054, 0
      %v1070 = vsel %vm335, %v1055, 0
      %v1073 = vsel %vm335, %v1056, 0
      %v1076 = vsel %vm335, %v1057, 0
      %v1079 = vsel %vm335, %v1058, 0
      %v1082 = vsel %vm335, %v1059, 0
      %v1085 = vsel %vm335, %v1060, 0
      %v1088 = vsel %vm360, %v1062, 0
      %1090 = vmatprep.subr.mxu0 0.0
      %1091 = vmatpush1.msra.mxu0 %v1088
      %1092 = vmatprep.subr.mxu0 0.0
      %1093 = vmatpush1.msra.mxu0 0.0
      %1094 = vmatprep.subr.mxu0 0.0
      %1095 = vmatpush1.msra.mxu0 0.0
      %1096 = vmatprep.subr.mxu0 0.0
      %1097 = vmatpush1.msra.mxu0 0.0
      %1098 = vmatprep.subr.mxu0 0.0
      %1099 = vmatpush1.msra.mxu0 0.0
      %1100 = vmatprep.subr.mxu0 0.0
      %1101 = vmatpush1.msra.mxu0 0.0
      %1102 = vmatprep.subr.mxu0 0.0
      %1103 = vmatpush1.msra.mxu0 0.0
      %1104 = vmatprep.subr.mxu0 0.0
      %1105 = vmatpush1.msra.mxu0 0.0
      %1106 = vmatprep.subr.mxu0 0.0
      %1107 = vmatpush1.msra.mxu0 0.0
      %1108 = vmatprep.subr.mxu0 0.0
      %1109 = vmatpush1.msra.mxu0 0.0
      %1110 = vmatprep.subr.mxu0 0.0
      %1111 = vmatpush1.msra.mxu0 0.0
      %1112 = vmatprep.subr.mxu0 0.0
      %1113 = vmatpush1.msra.mxu0 0.0
      %1114 = vmatprep.subr.mxu0 0.0
      %1115 = vmatpush1.msra.mxu0 0.0
      %1116 = vmatprep.subr.mxu0 0.0
      %1117 = vmatpush1.msra.mxu0 0.0
      %1118 = vmatprep.subr.mxu0 0.0
      %1119 = vmatpush1.msra.mxu0 0.0
      %1120 = vmatprep.subr.mxu0 0.0
      %1121 = vmatpush1.msra.mxu0 0.0
      %1122 = vmatprep.subr.mxu0 0.0
      %1123 = vmatpush1.msra.mxu0 0.0
      %1124 = vmatprep.subr.mxu0 0.0
      %1125 = vmatpush1.msra.mxu0 0.0
      %1126 = vmatprep.subr.mxu0 0.0
      %1127 = vmatpush1.msra.mxu0 0.0
      %1128 = vmatprep.subr.mxu0 0.0
      %1129 = vmatpush1.msra.mxu0 0.0
      %1130 = vmatprep.subr.mxu0 0.0
      %1131 = vmatpush1.msra.mxu0 0.0
      %1132 = vmatprep.subr.mxu0 0.0
      %1133 = vmatpush1.msra.mxu0 0.0
      %1134 = vmatprep.subr.mxu0 0.0
      %1135 = vmatpush1.msra.mxu0 0.0
      %1136 = vmatprep.subr.mxu0 0.0
      %1137 = vmatpush1.msra.mxu0 0.0
      %1138 = vmatprep.subr.mxu0 0.0
      %1139 = vmatpush1.msra.mxu0 0.0
      %1140 = vmatprep.subr.mxu0 0.0
      %1141 = vmatpush1.msra.mxu0 0.0
      %1142 = vmatprep.subr.mxu0 0.0
      %1143 = vmatpush1.msra.mxu0 0.0
      %1144 = vmatprep.subr.mxu0 0.0
      %1145 = vmatpush1.msra.mxu0 0.0
      %1146 = vmatprep.subr.mxu0 0.0
      %1147 = vmatpush1.msra.mxu0 0.0
      %1148 = vmatprep.subr.mxu0 0.0
      %1149 = vmatpush1.msra.mxu0 0.0
      %1150 = vmatprep.subr.mxu0 0.0
      %1151 = vmatpush1.msra.mxu0 0.0
      %1152 = vmatprep.subr.mxu0 0.0
      %1153 = vmatpush1.msra.mxu0 0.0
      %1154 = vmatprep.mubr.f32.mxu0 0.0
      %1155 = vmatmul.mubr.f32.gmra.mrb[0].mxu0 %v1064
      %v1156 = vpop.f32.mrb[0].mxu0
      %v1157 = vadd.f32 0.0, %v1156
      %v1158 = vpop.f32.mrb[0].mxu0
      %1159 = vmatprep.mubr.f32.mxu0 0.0
      %1160 = vmatmul.mubr.f32.gmra.mrb[0].mxu0 %v1067
      %v1161 = vpop.f32.mrb[0].mxu0
      %v1162 = vadd.f32 0.0, %v1161
      %v1163 = vpop.f32.mrb[0].mxu0
      %1164 = vmatprep.mubr.f32.mxu0 0.0
      %1165 = vmatmul.mubr.f32.gmra.mrb[0].mxu0 %v1070
      %v1166 = vpop.f32.mrb[0].mxu0
      %v1167 = vadd.f32 0.0, %v1166
      %v1168 = vpop.f32.mrb[0].mxu0
      %1169 = vmatprep.mubr.f32.mxu0 0.0
      %1170 = vmatmul.mubr.f32.gmra.mrb[0].mxu0 %v1073
      %v1171 = vpop.f32.mrb[0].mxu0
      %v1172 = vadd.f32 0.0, %v1171
      %v1173 = vpop.f32.mrb[0].mxu0
      %1174 = vmatprep.mubr.f32.mxu0 0.0
      %1175 = vmatmul.mubr.f32.gmra.mrb[0].mxu0 %v1076
      %v1176 = vpop.f32.mrb[0].mxu0
      %v1177 = vadd.f32 0.0, %v1176
      %v1178 = vpop.f32.mrb[0].mxu0
      %1179 = vmatprep.mubr.f32.mxu0 0.0
      %1180 = vmatmul.mubr.f32.gmra.mrb[0].mxu0 %v1079
      %v1181 = vpop.f32.mrb[0].mxu0
      %v1182 = vadd.f32 0.0, %v1181
      %v1183 = vpop.f32.mrb[0].mxu0
      %1184 = vmatprep.mubr.f32.mxu0 0.0
      %1185 = vmatmul.mubr.f32.gmra.mrb[0].mxu0 %v1082
      %v1186 = vpop.f32.mrb[0].mxu0
      %v1187 = vadd.f32 0.0, %v1186
      %v1188 = vpop.f32.mrb[0].mxu0
      %1189 = vmatprep.mubr.f32.mxu0 0.0
      %1190 = vmatmul.mubr.f32.gmra.mrb[0].mxu0 %v1085
      %v1191 = vpop.f32.mrb[0].mxu0
      %v1192 = vadd.f32 0.0, %v1191
      %v1193 = vpop.f32.mrb[0].mxu0
      %1194 = vdwg.mxu0
      %v1195 = vadd.f32 %v1045, %v1157
      %v1196 = vadd.f32 %v1046, %v1162
      %v1197 = vadd.f32 %v1047, %v1167
      %v1198 = vadd.f32 %v1048, %v1172
      %v1199 = vadd.f32 %v1049, %v1177
      %v1200 = vadd.f32 %v1050, %v1182
      %v1201 = vadd.f32 %v1051, %v1187
      %v1202 = vadd.f32 %v1052, %v1192
      %s1203 = scalar_lea.vmem %s296, 16
      %v1204 = vld [vmem:[%s1203] sm:$0xff]
      %v1205 = vld [vmem:[%s1203 + $0x10] sm:$0xff]
      %v1206 = vld [vmem:[%s1203 + $0x20] sm:$0xff]
      %v1207 = vld [vmem:[%s1203 + $0x30] sm:$0xff]
      %v1208 = vld [vmem:[%s1203 + $0x40] sm:$0xff]
      %v1209 = vld [vmem:[%s1203 + $0x50] sm:$0xff]
      %v1210 = vld [vmem:[%s1203 + $0x60] sm:$0xff]
      %v1211 = vld [vmem:[%s1203 + $0x70] sm:$0xff]
      %s1212 = scalar_lea.vmem %s1, 24
      %v1213 = vld [vmem:[%s1212] sm:$0xf]
      %v1215 = vsel %vm335, %v1204, 0
      %v1218 = vsel %vm335, %v1205, 0
      %v1221 = vsel %vm335, %v1206, 0
      %v1224 = vsel %vm335, %v1207, 0
      %v1227 = vsel %vm335, %v1208, 0
      %v1230 = vsel %vm335, %v1209, 0
      %v1233 = vsel %vm335, %v1210, 0
      %v1236 = vsel %vm335, %v1211, 0
      %v1239 = vsel %vm360, %v1213, 0
      %1241 = vmatprep.subr.mxu0 0.0
      %1242 = vmatpush1.msra.mxu0 %v1239
      %1243 = vmatprep.subr.mxu0 0.0
      %1244 = vmatpush1.msra.mxu0 0.0
      %1245 = vmatprep.subr.mxu0 0.0
      %1246 = vmatpush1.msra.mxu0 0.0
      %1247 = vmatprep.subr.mxu0 0.0
      %1248 = vmatpush1.msra.mxu0 0.0
      %1249 = vmatprep.subr.mxu0 0.0
      %1250 = vmatpush1.msra.mxu0 0.0
      %1251 = vmatprep.subr.mxu0 0.0
      %1252 = vmatpush1.msra.mxu0 0.0
      %1253 = vmatprep.subr.mxu0 0.0
      %1254 = vmatpush1.msra.mxu0 0.0
      %1255 = vmatprep.subr.mxu0 0.0
      %1256 = vmatpush1.msra.mxu0 0.0
      %1257 = vmatprep.subr.mxu0 0.0
      %1258 = vmatpush1.msra.mxu0 0.0
      %1259 = vmatprep.subr.mxu0 0.0
      %1260 = vmatpush1.msra.mxu0 0.0
      %1261 = vmatprep.subr.mxu0 0.0
      %1262 = vmatpush1.msra.mxu0 0.0
      %1263 = vmatprep.subr.mxu0 0.0
      %1264 = vmatpush1.msra.mxu0 0.0
      %1265 = vmatprep.subr.mxu0 0.0
      %1266 = vmatpush1.msra.mxu0 0.0
      %1267 = vmatprep.subr.mxu0 0.0
      %1268 = vmatpush1.msra.mxu0 0.0
      %1269 = vmatprep.subr.mxu0 0.0
      %1270 = vmatpush1.msra.mxu0 0.0
      %1271 = vmatprep.subr.mxu0 0.0
      %1272 = vmatpush1.msra.mxu0 0.0
      %1273 = vmatprep.subr.mxu0 0.0
      %1274 = vmatpush1.msra.mxu0 0.0
      %1275 = vmatprep.subr.mxu0 0.0
      %1276 = vmatpush1.msra.mxu0 0.0
      %1277 = vmatprep.subr.mxu0 0.0
      %1278 = vmatpush1.msra.mxu0 0.0
      %1279 = vmatprep.subr.mxu0 0.0
      %1280 = vmatpush1.msra.mxu0 0.0
      %1281 = vmatprep.subr.mxu0 0.0
      %1282 = vmatpush1.msra.mxu0 0.0
      %1283 = vmatprep.subr.mxu0 0.0
      %1284 = vmatpush1.msra.mxu0 0.0
      %1285 = vmatprep.subr.mxu0 0.0
      %1286 = vmatpush1.msra.mxu0 0.0
      %1287 = vmatprep.subr.mxu0 0.0
      %1288 = vmatpush1.msra.mxu0 0.0
      %1289 = vmatprep.subr.mxu0 0.0
      %1290 = vmatpush1.msra.mxu0 0.0
      %1291 = vmatprep.subr.mxu0 0.0
      %1292 = vmatpush1.msra.mxu0 0.0
      %1293 = vmatprep.subr.mxu0 0.0
      %1294 = vmatpush1.msra.mxu0 0.0
      %1295 = vmatprep.subr.mxu0 0.0
      %1296 = vmatpush1.msra.mxu0 0.0
      %1297 = vmatprep.subr.mxu0 0.0
      %1298 = vmatpush1.msra.mxu0 0.0
      %1299 = vmatprep.subr.mxu0 0.0
      %1300 = vmatpush1.msra.mxu0 0.0
      %1301 = vmatprep.subr.mxu0 0.0
      %1302 = vmatpush1.msra.mxu0 0.0
      %1303 = vmatprep.subr.mxu0 0.0
      %1304 = vmatpush1.msra.mxu0 0.0
      %1305 = vmatprep.mubr.f32.mxu0 0.0
      %1306 = vmatmul.mubr.f32.gmra.mrb[0].mxu0 %v1215
      %v1307 = vpop.f32.mrb[0].mxu0
      %v1308 = vadd.f32 0.0, %v1307
      %v1309 = vpop.f32.mrb[0].mxu0
      %1310 = vmatprep.mubr.f32.mxu0 0.0
      %1311 = vmatmul.mubr.f32.gmra.mrb[0].mxu0 %v1218
      %v1312 = vpop.f32.mrb[0].mxu0
      %v1313 = vadd.f32 0.0, %v1312
      %v1314 = vpop.f32.mrb[0].mxu0
      %1315 = vmatprep.mubr.f32.mxu0 0.0
      %1316 = vmatmul.mubr.f32.gmra.mrb[0].mxu0 %v1221
      %v1317 = vpop.f32.mrb[0].mxu0
      %v1318 = vadd.f32 0.0, %v1317
      %v1319 = vpop.f32.mrb[0].mxu0
      %1320 = vmatprep.mubr.f32.mxu0 0.0
      %1321 = vmatmul.mubr.f32.gmra.mrb[0].mxu0 %v1224
      %v1322 = vpop.f32.mrb[0].mxu0
      %v1323 = vadd.f32 0.0, %v1322
      %v1324 = vpop.f32.mrb[0].mxu0
      %1325 = vmatprep.mubr.f32.mxu0 0.0
      %1326 = vmatmul.mubr.f32.gmra.mrb[0].mxu0 %v1227
      %v1327 = vpop.f32.mrb[0].mxu0
      %v1328 = vadd.f32 0.0, %v1327
      %v1329 = vpop.f32.mrb[0].mxu0
      %1330 = vmatprep.mubr.f32.mxu0 0.0
      %1331 = vmatmul.mubr.f32.gmra.mrb[0].mxu0 %v1230
      %v1332 = vpop.f32.mrb[0].mxu0
      %v1333 = vadd.f32 0.0, %v1332
      %v1334 = vpop.f32.mrb[0].mxu0
      %1335 = vmatprep.mubr.f32.mxu0 0.0
      %1336 = vmatmul.mubr.f32.gmra.mrb[0].mxu0 %v1233
      %v1337 = vpop.f32.mrb[0].mxu0
      %v1338 = vadd.f32 0.0, %v1337
      %v1339 = vpop.f32.mrb[0].mxu0
      %1340 = vmatprep.mubr.f32.mxu0 0.0
      %1341 = vmatmul.mubr.f32.gmra.mrb[0].mxu0 %v1236
      %v1342 = vpop.f32.mrb[0].mxu0
      %v1343 = vadd.f32 0.0, %v1342
      %v1344 = vpop.f32.mrb[0].mxu0
      %1345 = vdwg.mxu0
      %v1346 = vadd.f32 %v1195, %v1308
      %v1347 = vadd.f32 %v1196, %v1313
      %v1348 = vadd.f32 %v1197, %v1318
      %v1349 = vadd.f32 %v1198, %v1323
      %v1350 = vadd.f32 %v1199, %v1328
      %v1351 = vadd.f32 %v1200, %v1333
      %v1352 = vadd.f32 %v1201, %v1338
      %v1353 = vadd.f32 %v1202, %v1343
      %s1354 = scalar_lea.vmem %s296, 160
      %v1355 = vld [vmem:[%s1354] sm:$0xff]
      %v1356 = vld [vmem:[%s1354 + $0x10] sm:$0xff]
      %v1357 = vld [vmem:[%s1354 + $0x20] sm:$0xff]
      %v1358 = vld [vmem:[%s1354 + $0x30] sm:$0xff]
      %v1359 = vld [vmem:[%s1354 + $0x40] sm:$0xff]
      %v1360 = vld [vmem:[%s1354 + $0x50] sm:$0xff]
      %v1361 = vld [vmem:[%s1354 + $0x60] sm:$0xff]
      %v1362 = vld [vmem:[%s1354 + $0x70] sm:$0xff]
      %s1363 = scalar_lea.vmem %s1, 28
      %v1364 = vld [vmem:[%s1363] sm:$0xf]
      %v1366 = vsel %vm335, %v1355, 0
      %v1369 = vsel %vm335, %v1356, 0
      %v1372 = vsel %vm335, %v1357, 0
      %v1375 = vsel %vm335, %v1358, 0
      %v1378 = vsel %vm335, %v1359, 0
      %v1381 = vsel %vm335, %v1360, 0
      %v1384 = vsel %vm335, %v1361, 0
      %v1387 = vsel %vm335, %v1362, 0
      %v1390 = vsel %vm360, %v1364, 0
      %1392 = vmatprep.subr.mxu0 0.0
      %1393 = vmatpush1.msra.mxu0 %v1390
      %1394 = vmatprep.subr.mxu0 0.0
      %1395 = vmatpush1.msra.mxu0 0.0
      %1396 = vmatprep.subr.mxu0 0.0
      %1397 = vmatpush1.msra.mxu0 0.0
      %1398 = vmatprep.subr.mxu0 0.0
      %1399 = vmatpush1.msra.mxu0 0.0
      %1400 = vmatprep.subr.mxu0 0.0
      %1401 = vmatpush1.msra.mxu0 0.0
      %1402 = vmatprep.subr.mxu0 0.0
      %1403 = vmatpush1.msra.mxu0 0.0
      %1404 = vmatprep.subr.mxu0 0.0
      %1405 = vmatpush1.msra.mxu0 0.0
      %1406 = vmatprep.subr.mxu0 0.0
      %1407 = vmatpush1.msra.mxu0 0.0
      %1408 = vmatprep.subr.mxu0 0.0
      %1409 = vmatpush1.msra.mxu0 0.0
      %1410 = vmatprep.subr.mxu0 0.0
      %1411 = vmatpush1.msra.mxu0 0.0
      %1412 = vmatprep.subr.mxu0 0.0
      %1413 = vmatpush1.msra.mxu0 0.0
      %1414 = vmatprep.subr.mxu0 0.0
      %1415 = vmatpush1.msra.mxu0 0.0
      %1416 = vmatprep.subr.mxu0 0.0
      %1417 = vmatpush1.msra.mxu0 0.0
      %1418 = vmatprep.subr.mxu0 0.0
      %1419 = vmatpush1.msra.mxu0 0.0
      %1420 = vmatprep.subr.mxu0 0.0
      %1421 = vmatpush1.msra.mxu0 0.0
      %1422 = vmatprep.subr.mxu0 0.0
      %1423 = vmatpush1.msra.mxu0 0.0
      %1424 = vmatprep.subr.mxu0 0.0
      %1425 = vmatpush1.msra.mxu0 0.0
      %1426 = vmatprep.subr.mxu0 0.0
      %1427 = vmatpush1.msra.mxu0 0.0
      %1428 = vmatprep.subr.mxu0 0.0
      %1429 = vmatpush1.msra.mxu0 0.0
      %1430 = vmatprep.subr.mxu0 0.0
      %1431 = vmatpush1.msra.mxu0 0.0
      %1432 = vmatprep.subr.mxu0 0.0
      %1433 = vmatpush1.msra.mxu0 0.0
      %1434 = vmatprep.subr.mxu0 0.0
      %1435 = vmatpush1.msra.mxu0 0.0
      %1436 = vmatprep.subr.mxu0 0.0
      %1437 = vmatpush1.msra.mxu0 0.0
      %1438 = vmatprep.subr.mxu0 0.0
      %1439 = vmatpush1.msra.mxu0 0.0
      %1440 = vmatprep.subr.mxu0 0.0
      %1441 = vmatpush1.msra.mxu0 0.0
      %1442 = vmatprep.subr.mxu0 0.0
      %1443 = vmatpush1.msra.mxu0 0.0
      %1444 = vmatprep.subr.mxu0 0.0
      %1445 = vmatpush1.msra.mxu0 0.0
      %1446 = vmatprep.subr.mxu0 0.0
      %1447 = vmatpush1.msra.mxu0 0.0
      %1448 = vmatprep.subr.mxu0 0.0
      %1449 = vmatpush1.msra.mxu0 0.0
      %1450 = vmatprep.subr.mxu0 0.0
      %1451 = vmatpush1.msra.mxu0 0.0
      %1452 = vmatprep.subr.mxu0 0.0
      %1453 = vmatpush1.msra.mxu0 0.0
      %1454 = vmatprep.subr.mxu0 0.0
      %1455 = vmatpush1.msra.mxu0 0.0
      %1456 = vmatprep.mubr.f32.mxu0 0.0
      %1457 = vmatmul.mubr.f32.gmra.mrb[0].mxu0 %v1366
      %v1458 = vpop.f32.mrb[0].mxu0
      %v1459 = vadd.f32 0.0, %v1458
      %v1460 = vpop.f32.mrb[0].mxu0
      %1461 = vmatprep.mubr.f32.mxu0 0.0
      %1462 = vmatmul.mubr.f32.gmra.mrb[0].mxu0 %v1369
      %v1463 = vpop.f32.mrb[0].mxu0
      %v1464 = vadd.f32 0.0, %v1463
      %v1465 = vpop.f32.mrb[0].mxu0
      %1466 = vmatprep.mubr.f32.mxu0 0.0
      %1467 = vmatmul.mubr.f32.gmra.mrb[0].mxu0 %v1372
      %v1468 = vpop.f32.mrb[0].mxu0
      %v1469 = vadd.f32 0.0, %v1468
      %v1470 = vpop.f32.mrb[0].mxu0
      %1471 = vmatprep.mubr.f32.mxu0 0.0
      %1472 = vmatmul.mubr.f32.gmra.mrb[0].mxu0 %v1375
      %v1473 = vpop.f32.mrb[0].mxu0
      %v1474 = vadd.f32 0.0, %v1473
      %v1475 = vpop.f32.mrb[0].mxu0
      %1476 = vmatprep.mubr.f32.mxu0 0.0
      %1477 = vmatmul.mubr.f32.gmra.mrb[0].mxu0 %v1378
      %v1478 = vpop.f32.mrb[0].mxu0
      %v1479 = vadd.f32 0.0, %v1478
      %v1480 = vpop.f32.mrb[0].mxu0
      %1481 = vmatprep.mubr.f32.mxu0 0.0
      %1482 = vmatmul.mubr.f32.gmra.mrb[0].mxu0 %v1381
      %v1483 = vpop.f32.mrb[0].mxu0
      %v1484 = vadd.f32 0.0, %v1483
      %v1485 = vpop.f32.mrb[0].mxu0
      %1486 = vmatprep.mubr.f32.mxu0 0.0
      %1487 = vmatmul.mubr.f32.gmra.mrb[0].mxu0 %v1384
      %v1488 = vpop.f32.mrb[0].mxu0
      %v1489 = vadd.f32 0.0, %v1488
      %v1490 = vpop.f32.mrb[0].mxu0
      %1491 = vmatprep.mubr.f32.mxu0 0.0
      %1492 = vmatmul.mubr.f32.gmra.mrb[0].mxu0 %v1387
      %v1493 = vpop.f32.mrb[0].mxu0
      %v1494 = vadd.f32 0.0, %v1493
      %v1495 = vpop.f32.mrb[0].mxu0
      %1496 = vdwg.mxu0
      %v1497 = vadd.f32 %v1346, %v1459
      %v1498 = vadd.f32 %v1347, %v1464
      %v1499 = vadd.f32 %v1348, %v1469
      %v1500 = vadd.f32 %v1349, %v1474
      %v1501 = vadd.f32 %v1350, %v1479
      %v1502 = vadd.f32 %v1351, %v1484
      %v1503 = vadd.f32 %v1352, %v1489
      %v1504 = vadd.f32 %v1353, %v1494
      %v1505 = vld [vmem:[%s1203 + $0x1] sm:$0xff]
      %v1506 = vld [vmem:[%s1203 + $0x11] sm:$0xff]
      %v1507 = vld [vmem:[%s1203 + $0x21] sm:$0xff]
      %v1508 = vld [vmem:[%s1203 + $0x31] sm:$0xff]
      %v1509 = vld [vmem:[%s1203 + $0x41] sm:$0xff]
      %v1510 = vld [vmem:[%s1203 + $0x51] sm:$0xff]
      %v1511 = vld [vmem:[%s1203 + $0x61] sm:$0xff]
      %v1512 = vld [vmem:[%s1203 + $0x71] sm:$0xff]
      %s1513 = scalar_lea.vmem %s1, 32
      %v1514 = vld [vmem:[%s1513] sm:$0xf]
      %v1516 = vsel %vm335, %v1505, 0
      %v1519 = vsel %vm335, %v1506, 0
      %v1522 = vsel %vm335, %v1507, 0
      %v1525 = vsel %vm335, %v1508, 0
      %v1528 = vsel %vm335, %v1509, 0
      %v1531 = vsel %vm335, %v1510, 0
      %v1534 = vsel %vm335, %v1511, 0
      %v1537 = vsel %vm335, %v1512, 0
      %v1540 = vsel %vm360, %v1514, 0
      %1542 = vmatprep.subr.mxu0 0.0
      %1543 = vmatpush1.msra.mxu0 %v1540
      %1544 = vmatprep.subr.mxu0 0.0
      %1545 = vmatpush1.msra.mxu0 0.0
      %1546 = vmatprep.subr.mxu0 0.0
      %1547 = vmatpush1.msra.mxu0 0.0
      %1548 = vmatprep.subr.mxu0 0.0
      %1549 = vmatpush1.msra.mxu0 0.0
      %1550 = vmatprep.subr.mxu0 0.0
      %1551 = vmatpush1.msra.mxu0 0.0
      %1552 = vmatprep.subr.mxu0 0.0
      %1553 = vmatpush1.msra.mxu0 0.0
      %1554 = vmatprep.subr.mxu0 0.0
      %1555 = vmatpush1.msra.mxu0 0.0
      %1556 = vmatprep.subr.mxu0 0.0
      %1557 = vmatpush1.msra.mxu0 0.0
      %1558 = vmatprep.subr.mxu0 0.0
      %1559 = vmatpush1.msra.mxu0 0.0
      %1560 = vmatprep.subr.mxu0 0.0
      %1561 = vmatpush1.msra.mxu0 0.0
      %1562 = vmatprep.subr.mxu0 0.0
      %1563 = vmatpush1.msra.mxu0 0.0
      %1564 = vmatprep.subr.mxu0 0.0
      %1565 = vmatpush1.msra.mxu0 0.0
      %1566 = vmatprep.subr.mxu0 0.0
      %1567 = vmatpush1.msra.mxu0 0.0
      %1568 = vmatprep.subr.mxu0 0.0
      %1569 = vmatpush1.msra.mxu0 0.0
      %1570 = vmatprep.subr.mxu0 0.0
      %1571 = vmatpush1.msra.mxu0 0.0
      %1572 = vmatprep.subr.mxu0 0.0
      %1573 = vmatpush1.msra.mxu0 0.0
      %1574 = vmatprep.subr.mxu0 0.0
      %1575 = vmatpush1.msra.mxu0 0.0
      %1576 = vmatprep.subr.mxu0 0.0
      %1577 = vmatpush1.msra.mxu0 0.0
      %1578 = vmatprep.subr.mxu0 0.0
      %1579 = vmatpush1.msra.mxu0 0.0
      %1580 = vmatprep.subr.mxu0 0.0
      %1581 = vmatpush1.msra.mxu0 0.0
      %1582 = vmatprep.subr.mxu0 0.0
      %1583 = vmatpush1.msra.mxu0 0.0
      %1584 = vmatprep.subr.mxu0 0.0
      %1585 = vmatpush1.msra.mxu0 0.0
      %1586 = vmatprep.subr.mxu0 0.0
      %1587 = vmatpush1.msra.mxu0 0.0
      %1588 = vmatprep.subr.mxu0 0.0
      %1589 = vmatpush1.msra.mxu0 0.0
      %1590 = vmatprep.subr.mxu0 0.0
      %1591 = vmatpush1.msra.mxu0 0.0
      %1592 = vmatprep.subr.mxu0 0.0
      %1593 = vmatpush1.msra.mxu0 0.0
      %1594 = vmatprep.subr.mxu0 0.0
      %1595 = vmatpush1.msra.mxu0 0.0
      %1596 = vmatprep.subr.mxu0 0.0
      %1597 = vmatpush1.msra.mxu0 0.0
      %1598 = vmatprep.subr.mxu0 0.0
      %1599 = vmatpush1.msra.mxu0 0.0
      %1600 = vmatprep.subr.mxu0 0.0
      %1601 = vmatpush1.msra.mxu0 0.0
      %1602 = vmatprep.subr.mxu0 0.0
      %1603 = vmatpush1.msra.mxu0 0.0
      %1604 = vmatprep.subr.mxu0 0.0
      %1605 = vmatpush1.msra.mxu0 0.0
      %1606 = vmatprep.mubr.f32.mxu0 0.0
      %1607 = vmatmul.mubr.f32.gmra.mrb[0].mxu0 %v1516
      %v1608 = vpop.f32.mrb[0].mxu0
      %v1609 = vadd.f32 0.0, %v1608
      %v1610 = vpop.f32.mrb[0].mxu0
      %1611 = vmatprep.mubr.f32.mxu0 0.0
      %1612 = vmatmul.mubr.f32.gmra.mrb[0].mxu0 %v1519
      %v1613 = vpop.f32.mrb[0].mxu0
      %v1614 = vadd.f32 0.0, %v1613
      %v1615 = vpop.f32.mrb[0].mxu0
      %1616 = vmatprep.mubr.f32.mxu0 0.0
      %1617 = vmatmul.mubr.f32.gmra.mrb[0].mxu0 %v1522
      %v1618 = vpop.f32.mrb[0].mxu0
      %v1619 = vadd.f32 0.0, %v1618
      %v1620 = vpop.f32.mrb[0].mxu0
      %1621 = vmatprep.mubr.f32.mxu0 0.0
      %1622 = vmatmul.mubr.f32.gmra.mrb[0].mxu0 %v1525
      %v1623 = vpop.f32.mrb[0].mxu0
      %v1624 = vadd.f32 0.0, %v1623
      %v1625 = vpop.f32.mrb[0].mxu0
      %1626 = vmatprep.mubr.f32.mxu0 0.0
      %1627 = vmatmul.mubr.f32.gmra.mrb[0].mxu0 %v1528
      %v1628 = vpop.f32.mrb[0].mxu0
      %v1629 = vadd.f32 0.0, %v1628
      %v1630 = vpop.f32.mrb[0].mxu0
      %1631 = vmatprep.mubr.f32.mxu0 0.0
      %1632 = vmatmul.mubr.f32.gmra.mrb[0].mxu0 %v1531
      %v1633 = vpop.f32.mrb[0].mxu0
      %v1634 = vadd.f32 0.0, %v1633
      %v1635 = vpop.f32.mrb[0].mxu0
      %1636 = vmatprep.mubr.f32.mxu0 0.0
      %1637 = vmatmul.mubr.f32.gmra.mrb[0].mxu0 %v1534
      %v1638 = vpop.f32.mrb[0].mxu0
      %v1639 = vadd.f32 0.0, %v1638
      %v1640 = vpop.f32.mrb[0].mxu0
      %1641 = vmatprep.mubr.f32.mxu0 0.0
      %1642 = vmatmul.mubr.f32.gmra.mrb[0].mxu0 %v1537
      %v1643 = vpop.f32.mrb[0].mxu0
      %v1644 = vadd.f32 0.0, %v1643
      %v1645 = vpop.f32.mrb[0].mxu0
      %1646 = vdwg.mxu0
      %v1647 = vadd.f32 %v1497, %v1609
      %v1648 = vadd.f32 %v1498, %v1614
      %v1649 = vadd.f32 %v1499, %v1619
      %v1650 = vadd.f32 %v1500, %v1624
      %v1651 = vadd.f32 %v1501, %v1629
      %v1652 = vadd.f32 %v1502, %v1634
      %v1653 = vadd.f32 %v1503, %v1639
      %v1654 = vadd.f32 %v1504, %v1644
      %1655 = vst [vmem:[%s301] sm:$0xff] %v1647
      %1656 = vst [vmem:[%s301 + $0x8] sm:$0xff] %v1648
      %1657 = vst [vmem:[%s301 + $0x10] sm:$0xff] %v1649
      %1658 = vst [vmem:[%s301 + $0x18] sm:$0xff] %v1650
      %1659 = vst [vmem:[%s301 + $0x20] sm:$0xff] %v1651
      %1660 = vst [vmem:[%s301 + $0x28] sm:$0xff] %v1652
      %1661 = vst [vmem:[%s301 + $0x30] sm:$0xff] %v1653
      %1662 = vst [vmem:[%s301 + $0x38] sm:$0xff] %v1654
      %v1663 = vld [vmem:[%s5] sm:$0x1]
      %v1664 = vadd.f32 %v1647, %v1648
      %v1665 = vadd.f32 %v1664, %v1649
      %v1666 = vadd.f32 %v1665, %v1650
      %v1667 = vadd.f32 %v1666, %v1651
      %v1668 = vadd.f32 %v1667, %v1652
      %v1669 = vadd.f32 %v1668, %v1653
      %v1670 = vadd.f32 %v1669, %v1654
      %v1671 = vrot.slane %v1670, 4
      %v1672 = vadd.f32 %v1670, %v1671
      %v1673 = vrot.slane %v1672, 2
      %v1674 = vadd.f32 %v1672, %v1673
      %v1675 = vrot.slane %v1674, 1
      %v1676 = vadd.f32 %v1674, %v1675
      %v1677 = vadd.f32 %v1663, %v1676
      %1678 = vst [vmem:[%s5] sm:$0x1] %v1677
      %v1679 = vld [vmem:[%s6] sm:$0x1]
      %v1680 = vmul.f32 %v1647, %v1647
      %v1681 = vmul.f32 %v1648, %v1648
      %v1682 = vmul.f32 %v1649, %v1649
      %v1683 = vmul.f32 %v1650, %v1650
      %v1684 = vmul.f32 %v1651, %v1651
      %v1685 = vmul.f32 %v1652, %v1652
      %v1686 = vmul.f32 %v1653, %v1653
      %v1687 = vmul.f32 %v1654, %v1654
      %v1688 = vadd.f32 %v1680, %v1681
      %v1689 = vadd.f32 %v1688, %v1682
      %v1690 = vadd.f32 %v1689, %v1683
      %v1691 = vadd.f32 %v1690, %v1684
      %v1692 = vadd.f32 %v1691, %v1685
      %v1693 = vadd.f32 %v1692, %v1686
      %v1694 = vadd.f32 %v1693, %v1687
      %v1695 = vrot.slane %v1694, 4
      %v1696 = vadd.f32 %v1694, %v1695
      %v1697 = vrot.slane %v1696, 2
      %v1698 = vadd.f32 %v1696, %v1697
      %v1699 = vrot.slane %v1698, 1
      %v1700 = vadd.f32 %v1698, %v1699
      %v1701 = vadd.f32 %v1679, %v1700
      %1702 = vst [vmem:[%s6] sm:$0x1] %v1701
      %v1703 = vld [vmem:[%s2] sm:$0xf]
      %v1705 = vsel %vm360, %v1703, 0
      %1707 = vmatprep.subr.mxu0 0.0
      %1708 = vmatpush1.msra.mxu0 %v1705
      %1709 = vmatprep.subr.mxu0 0.0
      %1710 = vmatpush1.msra.mxu0 0.0
      %1711 = vmatprep.subr.mxu0 0.0
      %1712 = vmatpush1.msra.mxu0 0.0
      %1713 = vmatprep.subr.mxu0 0.0
      %1714 = vmatpush1.msra.mxu0 0.0
      %1715 = vmatprep.subr.mxu0 0.0
      %1716 = vmatpush1.msra.mxu0 0.0
      %1717 = vmatprep.subr.mxu0 0.0
      %1718 = vmatpush1.msra.mxu0 0.0
      %1719 = vmatprep.subr.mxu0 0.0
      %1720 = vmatpush1.msra.mxu0 0.0
      %1721 = vmatprep.subr.mxu0 0.0
      %1722 = vmatpush1.msra.mxu0 0.0
      %1723 = vmatprep.subr.mxu0 0.0
      %1724 = vmatpush1.msra.mxu0 0.0
      %1725 = vmatprep.subr.mxu0 0.0
      %1726 = vmatpush1.msra.mxu0 0.0
      %1727 = vmatprep.subr.mxu0 0.0
      %1728 = vmatpush1.msra.mxu0 0.0
      %1729 = vmatprep.subr.mxu0 0.0
      %1730 = vmatpush1.msra.mxu0 0.0
      %1731 = vmatprep.subr.mxu0 0.0
      %1732 = vmatpush1.msra.mxu0 0.0
      %1733 = vmatprep.subr.mxu0 0.0
      %1734 = vmatpush1.msra.mxu0 0.0
      %1735 = vmatprep.subr.mxu0 0.0
      %1736 = vmatpush1.msra.mxu0 0.0
      %1737 = vmatprep.subr.mxu0 0.0
      %1738 = vmatpush1.msra.mxu0 0.0
      %1739 = vmatprep.subr.mxu0 0.0
      %1740 = vmatpush1.msra.mxu0 0.0
      %1741 = vmatprep.subr.mxu0 0.0
      %1742 = vmatpush1.msra.mxu0 0.0
      %1743 = vmatprep.subr.mxu0 0.0
      %1744 = vmatpush1.msra.mxu0 0.0
      %1745 = vmatprep.subr.mxu0 0.0
      %1746 = vmatpush1.msra.mxu0 0.0
      %1747 = vmatprep.subr.mxu0 0.0
      %1748 = vmatpush1.msra.mxu0 0.0
      %1749 = vmatprep.subr.mxu0 0.0
      %1750 = vmatpush1.msra.mxu0 0.0
      %1751 = vmatprep.subr.mxu0 0.0
      %1752 = vmatpush1.msra.mxu0 0.0
      %1753 = vmatprep.subr.mxu0 0.0
      %1754 = vmatpush1.msra.mxu0 0.0
      %1755 = vmatprep.subr.mxu0 0.0
      %1756 = vmatpush1.msra.mxu0 0.0
      %1757 = vmatprep.subr.mxu0 0.0
      %1758 = vmatpush1.msra.mxu0 0.0
      %1759 = vmatprep.subr.mxu0 0.0
      %1760 = vmatpush1.msra.mxu0 0.0
      %1761 = vmatprep.subr.mxu0 0.0
      %1762 = vmatpush1.msra.mxu0 0.0
      %1763 = vmatprep.subr.mxu0 0.0
      %1764 = vmatpush1.msra.mxu0 0.0
      %1765 = vmatprep.subr.mxu0 0.0
      %1766 = vmatpush1.msra.mxu0 0.0
      %1767 = vmatprep.subr.mxu0 0.0
      %1768 = vmatpush1.msra.mxu0 0.0
      %1769 = vmatprep.subr.mxu0 0.0
      %1770 = vmatpush1.msra.mxu0 0.0
      %1771 = vmatprep.mubr.f32.mxu0 0.0
      %1772 = vmatmul.mubr.f32.gmra.mrb[0].mxu0 %v914
      %v1773 = vpop.f32.mrb[0].mxu0
      %v1774 = vadd.f32 0.0, %v1773
      %v1775 = vpop.f32.mrb[0].mxu0
      %1776 = vmatprep.mubr.f32.mxu0 0.0
      %1777 = vmatmul.mubr.f32.gmra.mrb[0].mxu0 %v917
      %v1778 = vpop.f32.mrb[0].mxu0
      %v1779 = vadd.f32 0.0, %v1778
      %v1780 = vpop.f32.mrb[0].mxu0
      %1781 = vmatprep.mubr.f32.mxu0 0.0
      %1782 = vmatmul.mubr.f32.gmra.mrb[0].mxu0 %v920
      %v1783 = vpop.f32.mrb[0].mxu0
      %v1784 = vadd.f32 0.0, %v1783
      %v1785 = vpop.f32.mrb[0].mxu0
      %1786 = vmatprep.mubr.f32.mxu0 0.0
      %1787 = vmatmul.mubr.f32.gmra.mrb[0].mxu0 %v923
      %v1788 = vpop.f32.mrb[0].mxu0
      %v1789 = vadd.f32 0.0, %v1788
      %v1790 = vpop.f32.mrb[0].mxu0
      %1791 = vmatprep.mubr.f32.mxu0 0.0
      %1792 = vmatmul.mubr.f32.gmra.mrb[0].mxu0 %v926
      %v1793 = vpop.f32.mrb[0].mxu0
      %v1794 = vadd.f32 0.0, %v1793
      %v1795 = vpop.f32.mrb[0].mxu0
      %1796 = vmatprep.mubr.f32.mxu0 0.0
      %1797 = vmatmul.mubr.f32.gmra.mrb[0].mxu0 %v929
      %v1798 = vpop.f32.mrb[0].mxu0
      %v1799 = vadd.f32 0.0, %v1798
      %v1800 = vpop.f32.mrb[0].mxu0
      %1801 = vmatprep.mubr.f32.mxu0 0.0
      %1802 = vmatmul.mubr.f32.gmra.mrb[0].mxu0 %v932
      %v1803 = vpop.f32.mrb[0].mxu0
      %v1804 = vadd.f32 0.0, %v1803
      %v1805 = vpop.f32.mrb[0].mxu0
      %1806 = vmatprep.mubr.f32.mxu0 0.0
      %1807 = vmatmul.mubr.f32.gmra.mrb[0].mxu0 %v935
      %v1808 = vpop.f32.mrb[0].mxu0
      %v1809 = vadd.f32 0.0, %v1808
      %v1810 = vpop.f32.mrb[0].mxu0
      %1811 = vdwg.mxu0
      %1812 = vst [vmem:[%s306] sm:$0xff] %v1774
      %1813 = vst [vmem:[%s306 + $0x8] sm:$0xff] %v1779
      %1814 = vst [vmem:[%s306 + $0x10] sm:$0xff] %v1784
      %1815 = vst [vmem:[%s306 + $0x18] sm:$0xff] %v1789
      %1816 = vst [vmem:[%s306 + $0x20] sm:$0xff] %v1794
      %1817 = vst [vmem:[%s306 + $0x28] sm:$0xff] %v1799
      %1818 = vst [vmem:[%s306 + $0x30] sm:$0xff] %v1804
      %1819 = vst [vmem:[%s306 + $0x38] sm:$0xff] %v1809
      %v1820 = vld [vmem:[%s7] sm:$0x1]
      %v1821 = vadd.f32 %v1774, %v1779
      %v1822 = vadd.f32 %v1821, %v1784
      %v1823 = vadd.f32 %v1822, %v1789
      %v1824 = vadd.f32 %v1823, %v1794
      %v1825 = vadd.f32 %v1824, %v1799
      %v1826 = vadd.f32 %v1825, %v1804
      %v1827 = vadd.f32 %v1826, %v1809
      %v1828 = vrot.slane %v1827, 4
      %v1829 = vadd.f32 %v1827, %v1828
      %v1830 = vrot.slane %v1829, 2
      %v1831 = vadd.f32 %v1829, %v1830
      %v1832 = vrot.slane %v1831, 1
      %v1833 = vadd.f32 %v1831, %v1832
      %v1834 = vadd.f32 %v1820, %v1833
      %1835 = vst [vmem:[%s7] sm:$0x1] %v1834
      %v1836 = vld [vmem:[%s8] sm:$0x1]
      %v1837 = vmul.f32 %v1774, %v1774
      %v1838 = vmul.f32 %v1779, %v1779
      %v1839 = vmul.f32 %v1784, %v1784
      %v1840 = vmul.f32 %v1789, %v1789
      %v1841 = vmul.f32 %v1794, %v1794
      %v1842 = vmul.f32 %v1799, %v1799
      %v1843 = vmul.f32 %v1804, %v1804
      %v1844 = vmul.f32 %v1809, %v1809
      %v1845 = vadd.f32 %v1837, %v1838
      %v1846 = vadd.f32 %v1845, %v1839
      %v1847 = vadd.f32 %v1846, %v1840
      %v1848 = vadd.f32 %v1847, %v1841
      %v1849 = vadd.f32 %v1848, %v1842
      %v1850 = vadd.f32 %v1849, %v1843
      %v1851 = vadd.f32 %v1850, %v1844
      %v1852 = vrot.slane %v1851, 4
      %v1853 = vadd.f32 %v1851, %v1852
      %v1854 = vrot.slane %v1853, 2
      %v1855 = vadd.f32 %v1853, %v1854
      %v1856 = vrot.slane %v1855, 1
      %v1857 = vadd.f32 %v1855, %v1856
      %v1858 = vadd.f32 %v1836, %v1857
      %1859 = vst [vmem:[%s8] sm:$0x1] %v1858
      %p1860 = scmp.lt.s32.totalorder %s20, 1
      %s1861 = scalar_select %p1860, %s20, 1
      %s1862 = smul.addr %s1861, 8
      %s1863 = smul.addr %s1862, 8
      %s1864 = scalar_lea.vmem %s3, %s1863
      %p1865 = scmp.lt.s32.totalorder %s20, 1
      %s1866 = scalar_select %p1865, %s20, 1
      %s1867 = smul.addr %s1866, 8
      %s1868 = smul.addr %s1867, 8
      %s1869 = scalar_lea.vmem %s4, %s1868
      // Predicated region
      $region37: #{residual_block.3} parent=31 // pred_check
        %p1870 = pneg %p106
      $region38: #{residual_block.3} parent=31 // pred_check_branch
        %1872 = sbr.rel (%p1870) target = $region40
      $region39: #{residual_block.3} parent=31 // pred_region
        _
      $region40: #{residual_block.3} parent=31 // pred_fallthru
        _
      // Predicated region
      $region41: #{residual_block.3} parent=31 // pred_check
        %p1873 = pneg %p132
      $region42: #{residual_block.3} parent=31 // pred_check_branch
        %1875 = sbr.rel (%p1873) target = $region44
      $region43: #{residual_block.3} parent=31 // pred_region
        _
      $region44: #{residual_block.3} parent=31 // pred_fallthru
        _
      // Predicated region
      $region45: #{residual_block.3} parent=31 // pred_check
        %p1876 = pneg %p153
      $region46: #{residual_block.3} parent=31 // pred_check_branch
        %1878 = sbr.rel (%p1876) target = $region48
      $region47: #{residual_block.3} parent=31 // pred_region
        _
      $region48: #{residual_block.3} parent=31 // pred_fallthru
        _
      // Predicated region
      $region49: #{residual_block.3} parent=31 // pred_check
        %p1879 = pneg %p174
      $region50: #{residual_block.3} parent=31 // pred_check_branch
        %1881 = sbr.rel (%p1879) target = $region52
      $region51: #{residual_block.3} parent=31 // pred_region
        _
      $region52: #{residual_block.3} parent=31 // pred_fallthru
        _
      // Predicated region
      $region53: #{residual_block.3} parent=31 // pred_check
        %p1882 = pneg %p195
      $region54: #{residual_block.3} parent=31 // pred_check_branch
        %1884 = sbr.rel (%p1882) target = $region56
      $region55: #{residual_block.3} parent=31 // pred_region
        _
      $region56: #{residual_block.3} parent=31 // pred_fallthru
        _
      // Predicated region
      $region57: #{residual_block.3} parent=31 // pred_check
        %p1885 = pneg %p216
      $region58: #{residual_block.3} parent=31 // pred_check_branch
        %1887 = sbr.rel (%p1885) target = $region60
      $region59: #{residual_block.3} parent=31 // pred_region
        _
      $region60: #{residual_block.3} parent=31 // pred_fallthru
        _
      // Predicated region
      $region61: #{residual_block.3} parent=31 // pred_check
        %p1888 = pneg %p153
      $region62: #{residual_block.3} parent=31 // pred_check_branch
        %1890 = sbr.rel (%p1888) target = $region64
      $region63: #{residual_block.3} parent=31 // pred_region
        _
      $region64: #{residual_block.3} parent=31 // pred_fallthru
        _
      // Predicated region
      $region65: #{residual_block.3} parent=31 // pred_check
        %p1891 = pneg %p174
      $region66: #{residual_block.3} parent=31 // pred_check_branch
        %1893 = sbr.rel (%p1891) target = $region68
      $region67: #{residual_block.3} parent=31 // pred_region
        _
      $region68: #{residual_block.3} parent=31 // pred_fallthru
        _
      // Predicated region
      $region69: #{residual_block.3} parent=31 // pred_check
        %p1894 = pneg %p195
      $region70: #{residual_block.3} parent=31 // pred_check_branch
        %1896 = sbr.rel (%p1894) target = $region72
      $region71: #{residual_block.3} parent=31 // pred_region
        _
      $region72: #{residual_block.3} parent=31 // pred_fallthru
        _
      // Predicated region
      $region73: #{residual_block.3} parent=31 // pred_check
        %p1897 = pneg %p216
      $region74: #{residual_block.3} parent=31 // pred_check_branch
        %1899 = sbr.rel (%p1897) target = $region76
      $region75: #{residual_block.3} parent=31 // pred_region
        _
      $region76: #{residual_block.3} parent=31 // pred_fallthru
        _
    $region32: #{residual_block.3} parent=5 // pred_fallthru
      _
    %p1900 = scmp.le.s32.totalorder 2, %s15
    // Predicated region
    $region77: #{residual_block.3} parent=5 // pred_check
      %p1901 = pneg %p1900
    $region78: #{residual_block.3} parent=5 // pred_check_branch
      %1903 = sbr.rel (%p1901) target = $region80
    $region79: #{residual_block.3} parent=5 // pred_region
      %s1904 = ssub.s32 %s15, 2
      // Predicated region
      $region81: #{residual_block.3} parent=79 // pred_check
        %p1905 = pneg %p112
      $region82: #{residual_block.3} parent=79 // pred_check_branch
        %1907 = sbr.rel (%p1905) target = $region84
      $region83: #{residual_block.3} parent=79 // pred_region
        %p1908 = scmp.lt.s32.totalorder %s21, 1
        %s1909 = scalar_select %p1908, %s21, 1
        %s1910 = smul.addr %s1909, 8
        %s1911 = smul.addr %s1910, 8
        %s1912 = scalar_lea.vmem %s3, %s1911
      $region84: #{residual_block.3} parent=79 // pred_fallthru
        _
      // Predicated region
      $region85: #{residual_block.3} parent=79 // pred_check
        %p1913 = pneg %p138
      $region86: #{residual_block.3} parent=79 // pred_check_branch
        %1915 = sbr.rel (%p1913) target = $region88
      $region87: #{residual_block.3} parent=79 // pred_region
        %p1916 = scmp.lt.s32.totalorder %s21, 1
        %s1917 = scalar_select %p1916, %s21, 1
        %s1918 = smul.addr %s1917, 8
        %s1919 = smul.addr %s1918, 8
        %s1920 = scalar_lea.vmem %s4, %s1919
      $region88: #{residual_block.3} parent=79 // pred_fallthru
        _
    $region80: #{residual_block.3} parent=5 // pred_fallthru
      _
  $region6: #{residual_block.3} parent=0 // loop_footer
    %s19 = sadd.s32 1, %s15
  $region7: #{residual_block.3} parent=0 // loop_footer_branch
    %14 = sbr.rel target = $region3
  $region8: #{residual_block.3} parent=0 // loop_exit
    _

// kernel: residual_block.4
$region0: #{residual_block.4}
  #allocation0 [shape = 'u32[]', space=smem, size = 0x4, offset = 0x4, fixed_abs, tag = 'smem constant byte address 0x4 - core index']
  #allocation1 [shape = 'u32[144,128]{1,0:T(1,128)}', space=vmem, size = 0x12000, scoped, tag = 'internal scratch']
  %s0 = inlined_call_operand.vmem [shape: f32[2,10,10,128], index: 0, kind: input, shape index: {}]
  %s1 = inlined_call_operand.vmem [shape: f32[1,128], index: 1, kind: input, shape index: {}]
  %s2 = inlined_call_operand.vmem [shape: f32[1,128], index: 2, kind: input, shape index: {}]
  %s3 = inlined_call_operand.vmem [shape: f32[9,128,128], index: 3, kind: input, shape index: {}]
  %s4 = inlined_call_operand.vmem [shape: f32[2,64,128], index: 4, kind: output, shape index: {0}]
  %s5 = inlined_call_operand.vmem [shape: f32[1,128], index: 5, kind: output, shape index: {1}]
  %s6 = inlined_call_operand.vmem [shape: f32[1,128], index: 6, kind: output, shape index: {2}]
  %7 = xla_tuple %s4, %s5, %s6
  %s8 = sld [smem:[#allocation0]]
  $region69: #{residual_block.4} parent=0
    _
  %s10 = ssub.s32 1, %s8
  %s11 = scalar_select 0, %s10, %s8
  loop: start=0, step=1, limit=4
  $region2: #{residual_block.4} parent=0 // loop_pre_header
    _
  $region3: #{residual_block.4} parent=0 // loop_header
    %s13 = sphi 0, %s17
    %p14 = scmp.ge.s32.totalorder %s13, 4
    %s23 = sphi 0, %s25
    %s26 = sphi 0, %s23
    %s27 = sphi 0, %s26
    %s43 = sphi 0, %s27
    %s47 = sphi 0, %s47
    %s49 = sphi 0, %s47
    %s50 = sphi 0, %s49
    %s64 = sphi 0, %s50
    %s68 = sphi 0, %s68
    %s70 = sphi 0, %s68
    %s71 = sphi 0, %s70
    %s85 = sphi 0, %s71
    %s89 = sphi 0, %s89
    %s91 = sphi 0, %s89
    %s92 = sphi 0, %s91
    %s106 = sphi 0, %s92
    %s112 = sphi 0, %s114
    %s115 = sphi 0, %s112
    %s116 = sphi 0, %s115
    %s132 = sphi 0, %s116
    %s136 = sphi 0, %s136
    %s138 = sphi 0, %s136
    %s139 = sphi 0, %s138
    %s153 = sphi 0, %s139
    %s157 = sphi 0, %s157
    %s159 = sphi 0, %s157
    %s160 = sphi 0, %s159
    %s174 = sphi 0, %s160
  $region4: #{residual_block.4} parent=0 // loop_header_branch
    %16 = sbr.rel (%p14) target = $region8
  $region5: #{residual_block.4} parent=0 // loop_body
    %s18 = ssub.s32 %s13, 1
    %s19 = ssub.s32 %s13, 2
    %s20 = sadd.s32 %s13, 1
    %s21 = ssub.s32 %s13, %s20
    %p22 = scmp.eq.s32.totalorder %s21, 0
    %s24 = sadd.s32 %s23, 1
    %s25 = scalar_select %p22, %s23, %s24
    %p28 = pneg %p22
    %p29 = scmp.eq.s32.totalorder %s13, 1
    %p30 = por %p28, %p29
    %p31 = scmp.ne.s32.totalorder %s23, %s26
    %p32 = scmp.eq.s32.totalorder %s13, 0
    %p33 = por %p31, %p32
    %p34 = scmp.ne.s32.totalorder %s23, %s26
    %p35 = scmp.eq.s32.totalorder %s18, 1
    %p36 = por %p34, %p35
    %p37 = scmp.ne.s32.totalorder %s26, %s27
    %p38 = scmp.eq.s32.totalorder %s18, 0
    %p39 = por %p37, %p38
    %p40 = scmp.ne.s32.totalorder %s26, %s27
    %p41 = scmp.eq.s32.totalorder %s19, 1
    %p42 = por %p40, %p41
    %p44 = scmp.ne.s32.totalorder %s27, %s43
    %p45 = scmp.eq.s32.totalorder %s19, 0
    %p46 = por %p44, %p45
    %s48 = sadd.s32 %s47, 1
    %p51 = scmp.eq.s32.totalorder %s13, 1
    %p52 = scmp.ne.s32.totalorder %s47, %s49
    %p53 = scmp.eq.s32.totalorder %s13, 0
    %p54 = por %p52, %p53
    %p55 = scmp.ne.s32.totalorder %s47, %s49
    %p56 = scmp.eq.s32.totalorder %s18, 1
    %p57 = por %p55, %p56
    %p58 = scmp.ne.s32.totalorder %s49, %s50
    %p59 = scmp.eq.s32.totalorder %s18, 0
    %p60 = por %p58, %p59
    %p61 = scmp.ne.s32.totalorder %s49, %s50
    %p62 = scmp.eq.s32.totalorder %s19, 1
    %p63 = por %p61, %p62
    %p65 = scmp.ne.s32.totalorder %s50, %s64
    %p66 = scmp.eq.s32.totalorder %s19, 0
    %p67 = por %p65, %p66
    %s69 = sadd.s32 %s68, 1
    %p72 = scmp.eq.s32.totalorder %s13, 1
    %p73 = scmp.ne.s32.totalorder %s68, %s70
    %p74 = scmp.eq.s32.totalorder %s13, 0
    %p75 = por %p73, %p74
    %p76 = scmp.ne.s32.totalorder %s68, %s70
    %p77 = scmp.eq.s32.totalorder %s18, 1
    %p78 = por %p76, %p77
    %p79 = scmp.ne.s32.totalorder %s70, %s71
    %p80 = scmp.eq.s32.totalorder %s18, 0
    %p81 = por %p79, %p80
    %p82 = scmp.ne.s32.totalorder %s70, %s71
    %p83 = scmp.eq.s32.totalorder %s19, 1
    %p84 = por %p82, %p83
    %p86 = scmp.ne.s32.totalorder %s71, %s85
    %p87 = scmp.eq.s32.totalorder %s19, 0
    %p88 = por %p86, %p87
    %s90 = sadd.s32 %s89, 1
    %p93 = scmp.eq.s32.totalorder %s13, 1
    %p94 = scmp.ne.s32.totalorder %s89, %s91
    %p95 = scmp.eq.s32.totalorder %s13, 0
    %p96 = por %p94, %p95
    %p97 = scmp.ne.s32.totalorder %s89, %s91
    %p98 = scmp.eq.s32.totalorder %s18, 1
    %p99 = por %p97, %p98
    %p100 = scmp.ne.s32.totalorder %s91, %s92
    %p101 = scmp.eq.s32.totalorder %s18, 0
    %p102 = por %p100, %p101
    %p103 = scmp.ne.s32.totalorder %s91, %s92
    %p104 = scmp.eq.s32.totalorder %s19, 1
    %p105 = por %p103, %p104
    %p107 = scmp.ne.s32.totalorder %s92, %s106
    %p108 = scmp.eq.s32.totalorder %s19, 0
    %p109 = por %p107, %p108
    %s110 = ssub.s32 %s13, %s20
    %p111 = scmp.eq.s32.totalorder %s110, 0
    %s113 = sadd.s32 %s112, 1
    %s114 = scalar_select %p111, %s112, %s113
    %p117 = pneg %p111
    %p118 = scmp.eq.s32.totalorder %s13, 1
    %p119 = por %p117, %p118
    %p120 = scmp.ne.s32.totalorder %s112, %s115
    %p121 = scmp.eq.s32.totalorder %s13, 0
    %p122 = por %p120, %p121
    %p123 = scmp.ne.s32.totalorder %s112, %s115
    %p124 = scmp.eq.s32.totalorder %s18, 1
    %p125 = por %p123, %p124
    %p126 = scmp.ne.s32.totalorder %s115, %s116
    %p127 = scmp.eq.s32.totalorder %s18, 0
    %p128 = por %p126, %p127
    %p129 = scmp.ne.s32.totalorder %s115, %s116
    %p130 = scmp.eq.s32.totalorder %s19, 1
    %p131 = por %p129, %p130
    %p133 = scmp.ne.s32.totalorder %s116, %s132
    %p134 = scmp.eq.s32.totalorder %s19, 0
    %p135 = por %p133, %p134
    %s137 = sadd.s32 %s136, 1
    %p140 = scmp.eq.s32.totalorder %s13, 1
    %p141 = scmp.ne.s32.totalorder %s136, %s138
    %p142 = scmp.eq.s32.totalorder %s13, 0
    %p143 = por %p141, %p142
    %p144 = scmp.ne.s32.totalorder %s136, %s138
    %p145 = scmp.eq.s32.totalorder %s18, 1
    %p146 = por %p144, %p145
    %p147 = scmp.ne.s32.totalorder %s138, %s139
    %p148 = scmp.eq.s32.totalorder %s18, 0
    %p149 = por %p147, %p148
    %p150 = scmp.ne.s32.totalorder %s138, %s139
    %p151 = scmp.eq.s32.totalorder %s19, 1
    %p152 = por %p150, %p151
    %p154 = scmp.ne.s32.totalorder %s139, %s153
    %p155 = scmp.eq.s32.totalorder %s19, 0
    %p156 = por %p154, %p155
    %s158 = sadd.s32 %s157, 1
    %p161 = scmp.eq.s32.totalorder %s13, 1
    %p162 = scmp.ne.s32.totalorder %s157, %s159
    %p163 = scmp.eq.s32.totalorder %s13, 0
    %p164 = por %p162, %p163
    %p165 = scmp.ne.s32.totalorder %s157, %s159
    %p166 = scmp.eq.s32.totalorder %s18, 1
    %p167 = por %p165, %p166
    %p168 = scmp.ne.s32.totalorder %s159, %s160
    %p169 = scmp.eq.s32.totalorder %s18, 0
    %p170 = por %p168, %p169
    %p171 = scmp.ne.s32.totalorder %s159, %s160
    %p172 = scmp.eq.s32.totalorder %s19, 1
    %p173 = por %p171, %p172
    %p175 = scmp.ne.s32.totalorder %s160, %s174
    %p176 = scmp.eq.s32.totalorder %s19, 0
    %p177 = por %p175, %p176
    %p178 = scmp.le.s32.totalorder 1, %s13
    %p179 = scmp.lt.s32.totalorder %s13, 3
    %p180 = pnand %p178, %p179
    %p181 = pneg %p180
    // Predicated region
    $region9: #{residual_block.4} parent=5 // pred_check
      _
    $region10: #{residual_block.4} parent=5 // pred_check_branch
      %183 = sbr.rel (%p180) target = $region12
    $region11: #{residual_block.4} parent=5 // pred_region
      %s184 = ssub.s32 %s13, 1
      // Predicated region
      $region13: #{residual_block.4} parent=11 // pred_check
        %p185 = pneg %p60
      $region14: #{residual_block.4} parent=11 // pred_check_branch
        %187 = sbr.rel (%p185) target = $region16
      $region15: #{residual_block.4} parent=11 // pred_region
        _
      $region16: #{residual_block.4} parent=11 // pred_fallthru
        _
      // Predicated region
      $region17: #{residual_block.4} parent=11 // pred_check
        %p188 = pneg %p81
      $region18: #{residual_block.4} parent=11 // pred_check_branch
        %190 = sbr.rel (%p188) target = $region20
      $region19: #{residual_block.4} parent=11 // pred_region
        _
      $region20: #{residual_block.4} parent=11 // pred_fallthru
        _
      // Predicated region
      $region21: #{residual_block.4} parent=11 // pred_check
        %p191 = pneg %p102
      $region22: #{residual_block.4} parent=11 // pred_check_branch
        %193 = sbr.rel (%p191) target = $region24
      $region23: #{residual_block.4} parent=11 // pred_region
        _
      $region24: #{residual_block.4} parent=11 // pred_fallthru
        _
    $region12: #{residual_block.4} parent=5 // pred_fallthru
      _
    %p194 = scmp.lt.s32.totalorder %s13, 2
    // Predicated region
    $region25: #{residual_block.4} parent=5 // pred_check
      %p195 = pneg %p194
    $region26: #{residual_block.4} parent=5 // pred_check_branch
      %197 = sbr.rel (%p195) target = $region28
    $region27: #{residual_block.4} parent=5 // pred_region
      // Predicated region
      $region29: #{residual_block.4} parent=27 // pred_check
        %p198 = pneg %p33
      $region30: #{residual_block.4} parent=27 // pred_check_branch
        %200 = sbr.rel (%p198) target = $region32
      $region31: #{residual_block.4} parent=27 // pred_region
        %p201 = scmp.lt.s32.totalorder %s13, 1
        %s202 = scalar_select %p201, %s13, 1
        %s203 = smul.addr %s202, 20
        %s204 = smul.addr %s203, 8
        %s205 = scalar_lea.vmem %s0, %s204
      $region32: #{residual_block.4} parent=27 // pred_fallthru
        _
    $region28: #{residual_block.4} parent=5 // pred_fallthru
      _
    %p206 = scmp.le.s32.totalorder 1, %s13
    %p207 = scmp.lt.s32.totalorder %s13, 3
    %p208 = pnand %p206, %p207
    %p209 = pneg %p208
    // Predicated region
    $region33: #{residual_block.4} parent=5 // pred_check
      _
    $region34: #{residual_block.4} parent=5 // pred_check_branch
      %211 = sbr.rel (%p208) target = $region36
    $region35: #{residual_block.4} parent=5 // pred_region
      %s212 = ssub.s32 %s13, 1
      %p213 = scmp.lt.s32.totalorder %s18, 1
      %s214 = scalar_select %p213, %s18, 1
      %s215 = smul.addr %s214, 20
      %s216 = smul.addr %s215, 8
      %s217 = scalar_lea.vmem %s0, %s216
      %p218 = pneg %p39
      %p219 = pneg %p36
      %p220 = pneg %p60
      %p221 = pneg %p57
      %p222 = pneg %p81
      %p223 = pneg %p78
      %p224 = pneg %p102
      %p225 = pneg %p99
      %p226 = pneg %p128
      %p227 = pneg %p125
      %p228 = scmp.lt.s32.totalorder %s18, 1
      %s229 = scalar_select %p228, %s18, 1
      %s230 = smul.addr %s229, 8
      %s231 = smul.addr %s230, 8
      %s232 = scalar_lea.vmem %s4, %s231
      %p233 = pneg %p149
      %p234 = pneg %p146
      %p235 = pneg %p170
      %p236 = pneg %p167
      %p237 = scmp.lt.s32.totalorder %s18, 1
      %s238 = scalar_select %p237, %s18, 1
      %s239 = smul.addr %s238, 20
      %s240 = smul.addr %s239, 8
      %s241 = scalar_lea.vmem %s0, %s240
      %p242 = scmp.lt.s32.totalorder %s18, 1
      %s243 = scalar_select %p242, %s18, 1
      %s244 = smul.addr %s243, 8
      %s245 = smul.addr %s244, 8
      %s246 = scalar_lea.vmem %s4, %s245
      %p247 = scmp.eq.s32.totalorder %s18, 0
      // Predicated region
      $region37: #{residual_block.4} parent=35 // pred_check
        %p248 = pneg %p247
      $region38: #{residual_block.4} parent=35 // pred_check_branch
        %250 = sbr.rel (%p248) target = $region40
      $region39: #{residual_block.4} parent=35 // pred_region
        %251 = vst [vmem:[%s5] sm:$0x1] 0.0
        %252 = vst [vmem:[%s6] sm:$0x1] 0.0
      $region40: #{residual_block.4} parent=35 // pred_fallthru
        _
      %v253 = vld [vmem:[%s241] sm:$0xff]
      %v254 = vld [vmem:[%s241 + $0x8] sm:$0x3]
      %v255 = vld [vmem:[%s241 + $0x10] sm:$0xff]
      %v256 = vld [vmem:[%s241 + $0x18] sm:$0x3]
      %v257 = vld [vmem:[%s241 + $0x20] sm:$0xff]
      %v258 = vld [vmem:[%s241 + $0x28] sm:$0x3]
      %v259 = vld [vmem:[%s241 + $0x30] sm:$0xff]
      %v260 = vld [vmem:[%s241 + $0x38] sm:$0x3]
      %v261 = vld [vmem:[%s241 + $0x40] sm:$0xff]
      %v262 = vld [vmem:[%s241 + $0x48] sm:$0x3]
      %v263 = vld [vmem:[%s241 + $0x50] sm:$0xff]
      %v264 = vld [vmem:[%s241 + $0x58] sm:$0x3]
      %v265 = vld [vmem:[%s241 + $0x60] sm:$0xff]
      %v266 = vld [vmem:[%s241 + $0x68] sm:$0x3]
      %v267 = vld [vmem:[%s241 + $0x70] sm:$0xff]
      %v268 = vld [vmem:[%s241 + $0x78] sm:$0x3]
      %v269 = vld [vmem:[%s241 + $0x80] sm:$0xff]
      %v270 = vld [vmem:[%s241 + $0x88] sm:$0x3]
      %v271 = vld [vmem:[%s241 + $0x90] sm:$0xff]
      %v272 = vld [vmem:[%s241 + $0x98] sm:$0x3]
      %v273 = vld [vmem:[%s1] sm:$0x1]
      %v274 = vmul.f32 %v273, 0.0078125
      %v275 = vld [vmem:[%s2] sm:$0x1]
      %v276 = vmul.f32 %v275, 0.0078125
      %v277 = vmul.f32 %v274, %v274
      %v278 = vsub.f32 %v276, %v277
      %v279 = vmax.f32 %v278, 0.0
      %v281 = vlaneseq
      %v282 = vshrl.u32 %v281, 7
      %v283 = vsub.s32 0, %v282
      %v284 = vrot.slane %v274, %v283
      %v286 = vsub.f32 %v253, %v284
      %v287 = vsub.f32 %v254, %v284
      %v288 = vsub.f32 %v255, %v284
      %v289 = vsub.f32 %v256, %v284
      %v290 = vsub.f32 %v257, %v284
      %v291 = vsub.f32 %v258, %v284
      %v292 = vsub.f32 %v259, %v284
      %v293 = vsub.f32 %v260, %v284
      %v294 = vsub.f32 %v261, %v284
      %v295 = vsub.f32 %v262, %v284
      %v296 = vsub.f32 %v263, %v284
      %v297 = vsub.f32 %v264, %v284
      %v298 = vsub.f32 %v265, %v284
      %v299 = vsub.f32 %v266, %v284
      %v300 = vsub.f32 %v267, %v284
      %v301 = vsub.f32 %v268, %v284
      %v302 = vsub.f32 %v269, %v284
      %v303 = vsub.f32 %v270, %v284
      %v304 = vsub.f32 %v271, %v284
      %v305 = vsub.f32 %v272, %v284
      %v306 = vadd.f32 %v279, 1e-05
      %v307 = vrsqrt.pop %v306
      %v309 = vlaneseq
      %v310 = vshrl.u32 %v309, 7
      %v311 = vsub.s32 0, %v310
      %v312 = vrot.slane %v307, %v311
      %v314 = vmul.f32 %v286, %v312
      %v315 = vmul.f32 %v287, %v312
      %v316 = vmul.f32 %v288, %v312
      %v317 = vmul.f32 %v289, %v312
      %v318 = vmul.f32 %v290, %v312
      %v319 = vmul.f32 %v291, %v312
      %v320 = vmul.f32 %v292, %v312
      %v321 = vmul.f32 %v293, %v312
      %v322 = vmul.f32 %v294, %v312
      %v323 = vmul.f32 %v295, %v312
      %v324 = vmul.f32 %v296, %v312
      %v325 = vmul.f32 %v297, %v312
      %v326 = vmul.f32 %v298, %v312
      %v327 = vmul.f32 %v299, %v312
      %v328 = vmul.f32 %v300, %v312
      %v329 = vmul.f32 %v301, %v312
      %v330 = vmul.f32 %v302, %v312
      %v331 = vmul.f32 %v303, %v312
      %v332 = vmul.f32 %v304, %v312
      %v333 = vmul.f32 %v305, %v312
      %v334 = vmax.f32 %v314, 0.0
      %v335 = vmax.f32 %v315, 0.0
      %v336 = vmax.f32 %v316, 0.0
      %v337 = vmax.f32 %v317, 0.0
      %v338 = vmax.f32 %v318, 0.0
      %v339 = vmax.f32 %v319, 0.0
      %v340 = vmax.f32 %v320, 0.0
      %v341 = vmax.f32 %v321, 0.0
      %v342 = vmax.f32 %v322, 0.0
      %v343 = vmax.f32 %v323, 0.0
      %v344 = vmax.f32 %v324, 0.0
      %v345 = vmax.f32 %v325, 0.0
      %v346 = vmax.f32 %v326, 0.0
      %v347 = vmax.f32 %v327, 0.0
      %v348 = vmax.f32 %v328, 0.0
      %v349 = vmax.f32 %v329, 0.0
      %v350 = vmax.f32 %v330, 0.0
      %v351 = vmax.f32 %v331, 0.0
      %v352 = vmax.f32 %v332, 0.0
      %v353 = vmax.f32 %v333, 0.0
      %v354 = vld [vmem:[%s3] sm:$0xff]
      %v355 = vld [vmem:[%s3 + $0x8] sm:$0xff]
      %v356 = vld [vmem:[%s3 + $0x10] sm:$0xff]
      %v357 = vld [vmem:[%s3 + $0x18] sm:$0xff]
      %v358 = vld [vmem:[%s3 + $0x20] sm:$0xff]
      %v359 = vld [vmem:[%s3 + $0x28] sm:$0xff]
      %v360 = vld [vmem:[%s3 + $0x30] sm:$0xff]
      %v361 = vld [vmem:[%s3 + $0x38] sm:$0xff]
      %v362 = vld [vmem:[%s3 + $0x40] sm:$0xff]
      %v363 = vld [vmem:[%s3 + $0x48] sm:$0xff]
      %v364 = vld [vmem:[%s3 + $0x50] sm:$0xff]
      %v365 = vld [vmem:[%s3 + $0x58] sm:$0xff]
      %v366 = vld [vmem:[%s3 + $0x60] sm:$0xff]
      %v367 = vld [vmem:[%s3 + $0x68] sm:$0xff]
      %v368 = vld [vmem:[%s3 + $0x70] sm:$0xff]
      %v369 = vld [vmem:[%s3 + $0x78] sm:$0xff]
      %vm386 = vcmask 1046528
      %v387 = vrot.slane %v334, 1
      %v388 = vrot.slane %v335, 1
      %v389 = vsel %vm386, %v387, %v388
      %v390 = vrot.slane %v336, 1
      %v391 = vrot.slane %v337, 1
      %v392 = vsel %vm386, %v390, %v391
      %v393 = vrot.slane %v338, 1
      %v394 = vrot.slane %v339, 1
      %v395 = vsel %vm386, %v393, %v394
      %v396 = vrot.slane %v340, 1
      %v397 = vrot.slane %v341, 1
      %v398 = vsel %vm386, %v396, %v397
      %v399 = vrot.slane %v342, 1
      %v400 = vrot.slane %v343, 1
      %v401 = vsel %vm386, %v399, %v400
      %v402 = vrot.slane %v344, 1
      %v403 = vrot.slane %v345, 1
      %v404 = vsel %vm386, %v402, %v403
      %v405 = vrot.slane %v346, 1
      %v406 = vrot.slane %v347, 1
      %v407 = vsel %vm386, %v405, %v406
      %v408 = vrot.slane %v348, 1
      %v409 = vrot.slane %v349, 1
      %v410 = vsel %vm386, %v408, %v409
      %s419 = scalar_lea.vmem %s3, 128
      %v420 = vld [vmem:[%s419] sm:$0xff]
      %v421 = vld [vmem:[%s419 + $0x8] sm:$0xff]
      %v422 = vld [vmem:[%s419 + $0x10] sm:$0xff]
      %v423 = vld [vmem:[%s419 + $0x18] sm:$0xff]
      %v424 = vld [vmem:[%s419 + $0x20] sm:$0xff]
      %v425 = vld [vmem:[%s419 + $0x28] sm:$0xff]
      %v426 = vld [vmem:[%s419 + $0x30] sm:$0xff]
      %v427 = vld [vmem:[%s419 + $0x38] sm:$0xff]
      %v428 = vld [vmem:[%s419 + $0x40] sm:$0xff]
      %v429 = vld [vmem:[%s419 + $0x48] sm:$0xff]
      %v430 = vld [vmem:[%s419 + $0x50] sm:$0xff]
      %v431 = vld [vmem:[%s419 + $0x58] sm:$0xff]
      %v432 = vld [vmem:[%s419 + $0x60] sm:$0xff]
      %v433 = vld [vmem:[%s419 + $0x68] sm:$0xff]
      %v434 = vld [vmem:[%s419 + $0x70] sm:$0xff]
      %v435 = vld [vmem:[%s419 + $0x78] sm:$0xff]
      %436 = vmatprep.subr.mxu0 0.0
      %437 = vmatpush1.msra.mxu0 %v420
      %438 = vmatprep.subr.mxu0 0.0
      %439 = vmatpush1.msra.mxu0 %v421
      %440 = vmatprep.subr.mxu0 0.0
      %441 = vmatpush1.msra.mxu0 %v422
      %442 = vmatprep.subr.mxu0 0.0
      %443 = vmatpush1.msra.mxu0 %v423
      %444 = vmatprep.subr.mxu0 0.0
      %445 = vmatpush1.msra.mxu0 %v424
      %446 = vmatprep.subr.mxu0 0.0
      %447 = vmatpush1.msra.mxu0 %v425
      %448 = vmatprep.subr.mxu0 0.0
      %449 = vmatpush1.msra.mxu0 %v426
      %450 = vmatprep.subr.mxu0 0.0
      %451 = vmatpush1.msra.mxu0 %v427
      %452 = vmatprep.subr.mxu0 0.0
      %453 = vmatpush1.msra.mxu0 %v428
      %454 = vmatprep.subr.mxu0 0.0
      %455 = vmatpush1.msra.mxu0 %v429
      %456 = vmatprep.subr.mxu0 0.0
      %457 = vmatpush1.msra.mxu0 %v430
      %458 = vmatprep.subr.mxu0 0.0
      %459 = vmatpush1.msra.mxu0 %v431
      %460 = vmatprep.subr.mxu0 0.0
      %461 = vmatpush1.msra.mxu0 %v432
      %462 = vmatprep.subr.mxu0 0.0
      %463 = vmatpush1.msra.mxu0 %v433
      %464 = vmatprep.subr.mxu0 0.0
      %465 = vmatpush1.msra.mxu0 %v434
      %466 = vmatprep.subr.mxu0 0.0
      %467 = vmatpush1.msra.mxu0 %v435
      %468 = vmatprep.subr.mxu0 0.0
      %469 = vmatpush1.msra.mxu0 0.0
      %470 = vmatprep.subr.mxu0 0.0
      %471 = vmatpush1.msra.mxu0 0.0
      %472 = vmatprep.subr.mxu0 0.0
      %473 = vmatpush1.msra.mxu0 0.0
      %474 = vmatprep.subr.mxu0 0.0
      %475 = vmatpush1.msra.mxu0 0.0
      %476 = vmatprep.subr.mxu0 0.0
      %477 = vmatpush1.msra.mxu0 0.0
      %478 = vmatprep.subr.mxu0 0.0
      %479 = vmatpush1.msra.mxu0 0.0
      %480 = vmatprep.subr.mxu0 0.0
      %481 = vmatpush1.msra.mxu0 0.0
      %482 = vmatprep.subr.mxu0 0.0
      %483 = vmatpush1.msra.mxu0 0.0
      %484 = vmatprep.subr.mxu0 0.0
      %485 = vmatpush1.msra.mxu0 0.0
      %486 = vmatprep.subr.mxu0 0.0
      %487 = vmatpush1.msra.mxu0 0.0
      %488 = vmatprep.subr.mxu0 0.0
      %489 = vmatpush1.msra.mxu0 0.0
      %490 = vmatprep.subr.mxu0 0.0
      %491 = vmatpush1.msra.mxu0 0.0
      %492 = vmatprep.subr.mxu0 0.0
      %493 = vmatpush1.msra.mxu0 0.0
      %494 = vmatprep.subr.mxu0 0.0
      %495 = vmatpush1.msra.mxu0 0.0
      %496 = vmatprep.subr.mxu0 0.0
      %497 = vmatpush1.msra.mxu0 0.0
      %498 = vmatprep.subr.mxu0 0.0
      %499 = vmatpush1.msra.mxu0 0.0
      %500 = vmatprep.mubr.f32.mxu0 0.0
      %501 = vmatmul.mubr.f32.gmra.mrb[0].mxu0 %v389
      %v502 = vpop.f32.mrb[0].mxu0
      %v503 = vadd.f32 0.0, %v502
      %v504 = vpop.f32.mrb[0].mxu0
      %505 = vmatprep.mubr.f32.mxu0 0.0
      %506 = vmatmul.mubr.f32.gmra.mrb[0].mxu0 %v392
      %v507 = vpop.f32.mrb[0].mxu0
      %v508 = vadd.f32 0.0, %v507
      %v509 = vpop.f32.mrb[0].mxu0
      %510 = vmatprep.mubr.f32.mxu0 0.0
      %511 = vmatmul.mubr.f32.gmra.mrb[0].mxu0 %v395
      %v512 = vpop.f32.mrb[0].mxu0
      %v513 = vadd.f32 0.0, %v512
      %v514 = vpop.f32.mrb[0].mxu0
      %515 = vmatprep.mubr.f32.mxu0 0.0
      %516 = vmatmul.mubr.f32.gmra.mrb[0].mxu0 %v398
      %v517 = vpop.f32.mrb[0].mxu0
      %v518 = vadd.f32 0.0, %v517
      %v519 = vpop.f32.mrb[0].mxu0
      %520 = vmatprep.mubr.f32.mxu0 0.0
      %521 = vmatmul.mubr.f32.gmra.mrb[0].mxu0 %v401
      %v522 = vpop.f32.mrb[0].mxu0
      %v523 = vadd.f32 0.0, %v522
      %v524 = vpop.f32.mrb[0].mxu0
      %525 = vmatprep.mubr.f32.mxu0 0.0
      %526 = vmatmul.mubr.f32.gmra.mrb[0].mxu0 %v404
      %v527 = vpop.f32.mrb[0].mxu0
      %v528 = vadd.f32 0.0, %v527
      %v529 = vpop.f32.mrb[0].mxu0
      %530 = vmatprep.mubr.f32.mxu0 0.0
      %531 = vmatmul.mubr.f32.gmra.mrb[0].mxu0 %v407
      %v532 = vpop.f32.mrb[0].mxu0
      %v533 = vadd.f32 0.0, %v532
      %v534 = vpop.f32.mrb[0].mxu0
      %535 = vmatprep.mubr.f32.mxu0 0.0
      %536 = vmatmul.mubr.f32.gmra.mrb[0].mxu0 %v410
      %v537 = vpop.f32.mrb[0].mxu0
      %v538 = vadd.f32 0.0, %v537
      %v539 = vpop.f32.mrb[0].mxu0
      %540 = vdwg.mxu0
      %541 = vmatprep.subr.mxu0 0.0
      %542 = vmatpush1.msra.mxu0 %v354
      %543 = vmatprep.subr.mxu0 0.0
      %544 = vmatpush1.msra.mxu0 %v355
      %545 = vmatprep.subr.mxu0 0.0
      %546 = vmatpush1.msra.mxu0 %v356
      %547 = vmatprep.subr.mxu0 0.0
      %548 = vmatpush1.msra.mxu0 %v357
      %549 = vmatprep.subr.mxu0 0.0
      %550 = vmatpush1.msra.mxu0 %v358
      %551 = vmatprep.subr.mxu0 0.0
      %552 = vmatpush1.msra.mxu0 %v359
      %553 = vmatprep.subr.mxu0 0.0
      %554 = vmatpush1.msra.mxu0 %v360
      %555 = vmatprep.subr.mxu0 0.0
      %556 = vmatpush1.msra.mxu0 %v361
      %557 = vmatprep.subr.mxu0 0.0
      %558 = vmatpush1.msra.mxu0 %v362
      %559 = vmatprep.subr.mxu0 0.0
      %560 = vmatpush1.msra.mxu0 %v363
      %561 = vmatprep.subr.mxu0 0.0
      %562 = vmatpush1.msra.mxu0 %v364
      %563 = vmatprep.subr.mxu0 0.0
      %564 = vmatpush1.msra.mxu0 %v365
      %565 = vmatprep.subr.mxu0 0.0
      %566 = vmatpush1.msra.mxu0 %v366
      %567 = vmatprep.subr.mxu0 0.0
      %568 = vmatpush1.msra.mxu0 %v367
      %569 = vmatprep.subr.mxu0 0.0
      %570 = vmatpush1.msra.mxu0 %v368
      %571 = vmatprep.subr.mxu0 0.0
      %572 = vmatpush1.msra.mxu0 %v369
      %573 = vmatprep.subr.mxu0 0.0
      %574 = vmatpush1.msra.mxu0 0.0
      %575 = vmatprep.subr.mxu0 0.0
      %576 = vmatpush1.msra.mxu0 0.0
      %577 = vmatprep.subr.mxu0 0.0
      %578 = vmatpush1.msra.mxu0 0.0
      %579 = vmatprep.subr.mxu0 0.0
      %580 = vmatpush1.msra.mxu0 0.0
      %581 = vmatprep.subr.mxu0 0.0
      %582 = vmatpush1.msra.mxu0 0.0
      %583 = vmatprep.subr.mxu0 0.0
      %584 = vmatpush1.msra.mxu0 0.0
      %585 = vmatprep.subr.mxu0 0.0
      %586 = vmatpush1.msra.mxu0 0.0
      %587 = vmatprep.subr.mxu0 0.0
      %588 = vmatpush1.msra.mxu0 0.0
      %589 = vmatprep.subr.mxu0 0.0
      %590 = vmatpush1.msra.mxu0 0.0
      %591 = vmatprep.subr.mxu0 0.0
      %592 = vmatpush1.msra.mxu0 0.0
      %593 = vmatprep.subr.mxu0 0.0
      %594 = vmatpush1.msra.mxu0 0.0
      %595 = vmatprep.subr.mxu0 0.0
      %596 = vmatpush1.msra.mxu0 0.0
      %597 = vmatprep.subr.mxu0 0.0
      %598 = vmatpush1.msra.mxu0 0.0
      %599 = vmatprep.subr.mxu0 0.0
      %600 = vmatpush1.msra.mxu0 0.0
      %601 = vmatprep.subr.mxu0 0.0
      %602 = vmatpush1.msra.mxu0 0.0
      %603 = vmatprep.subr.mxu0 0.0
      %604 = vmatpush1.msra.mxu0 0.0
      %605 = vmatprep.mubr.f32.mxu0 0.0
      %606 = vmatmul.mubr.f32.gmra.mrb[0].mxu0 %v334
      %v607 = vpop.f32.mrb[0].mxu0
      %v608 = vadd.f32 %v503, %v607
      %v609 = vpop.f32.mrb[0].mxu0
      %610 = vmatprep.mubr.f32.mxu0 0.0
      %611 = vmatmul.mubr.f32.gmra.mrb[0].mxu0 %v336
      %v612 = vpop.f32.mrb[0].mxu0
      %v613 = vadd.f32 %v508, %v612
      %v614 = vpop.f32.mrb[0].mxu0
      %615 = vmatprep.mubr.f32.mxu0 0.0
      %616 = vmatmul.mubr.f32.gmra.mrb[0].mxu0 %v338
      %v617 = vpop.f32.mrb[0].mxu0
      %v618 = vadd.f32 %v513, %v617
      %v619 = vpop.f32.mrb[0].mxu0
      %620 = vmatprep.mubr.f32.mxu0 0.0
      %621 = vmatmul.mubr.f32.gmra.mrb[0].mxu0 %v340
      %v622 = vpop.f32.mrb[0].mxu0
      %v623 = vadd.f32 %v518, %v622
      %v624 = vpop.f32.mrb[0].mxu0
      %625 = vmatprep.mubr.f32.mxu0 0.0
      %626 = vmatmul.mubr.f32.gmra.mrb[0].mxu0 %v342
      %v627 = vpop.f32.mrb[0].mxu0
      %v628 = vadd.f32 %v523, %v627
      %v629 = vpop.f32.mrb[0].mxu0
      %630 = vmatprep.mubr.f32.mxu0 0.0
      %631 = vmatmul.mubr.f32.gmra.mrb[0].mxu0 %v344
      %v632 = vpop.f32.mrb[0].mxu0
      %v633 = vadd.f32 %v528, %v632
      %v634 = vpop.f32.mrb[0].mxu0
      %635 = vmatprep.mubr.f32.mxu0 0.0
      %636 = vmatmul.mubr.f32.gmra.mrb[0].mxu0 %v346
      %v637 = vpop.f32.mrb[0].mxu0
      %v638 = vadd.f32 %v533, %v637
      %v639 = vpop.f32.mrb[0].mxu0
      %640 = vmatprep.mubr.f32.mxu0 0.0
      %641 = vmatmul.mubr.f32.gmra.mrb[0].mxu0 %v348
      %v642 = vpop.f32.mrb[0].mxu0
      %v643 = vadd.f32 %v538, %v642
      %v644 = vpop.f32.mrb[0].mxu0
      %645 = vdwg.mxu0
      %vm646 = vcmask 1045504
      %v647 = vrot.slane %v334, 2
      %v648 = vrot.slane %v335, 2
      %v649 = vsel %vm646, %v647, %v648
      %v650 = vrot.slane %v336, 2
      %v651 = vrot.slane %v337, 2
      %v652 = vsel %vm646, %v650, %v651
      %v653 = vrot.slane %v338, 2
      %v654 = vrot.slane %v339, 2
      %v655 = vsel %vm646, %v653, %v654
      %v656 = vrot.slane %v340, 2
      %v657 = vrot.slane %v341, 2
      %v658 = vsel %vm646, %v656, %v657
      %v659 = vrot.slane %v342, 2
      %v660 = vrot.slane %v343, 2
      %v661 = vsel %vm646, %v659, %v660
      %v662 = vrot.slane %v344, 2
      %v663 = vrot.slane %v345, 2
      %v664 = vsel %vm646, %v662, %v663
      %v665 = vrot.slane %v346, 2
      %v666 = vrot.slane %v347, 2
      %v667 = vsel %vm646, %v665, %v666
      %v668 = vrot.slane %v348, 2
      %v669 = vrot.slane %v349, 2
      %v670 = vsel %vm646, %v668, %v669
      %s679 = scalar_lea.vmem %s3, 256
      %v680 = vld [vmem:[%s679] sm:$0xff]
      %v681 = vld [vmem:[%s679 + $0x8] sm:$0xff]
      %v682 = vld [vmem:[%s679 + $0x10] sm:$0xff]
      %v683 = vld [vmem:[%s679 + $0x18] sm:$0xff]
      %v684 = vld [vmem:[%s679 + $0x20] sm:$0xff]
      %v685 = vld [vmem:[%s679 + $0x28] sm:$0xff]
      %v686 = vld [vmem:[%s679 + $0x30] sm:$0xff]
      %v687 = vld [vmem:[%s679 + $0x38] sm:$0xff]
      %v688 = vld [vmem:[%s679 + $0x40] sm:$0xff]
      %v689 = vld [vmem:[%s679 + $0x48] sm:$0xff]
      %v690 = vld [vmem:[%s679 + $0x50] sm:$0xff]
      %v691 = vld [vmem:[%s679 + $0x58] sm:$0xff]
      %v692 = vld [vmem:[%s679 + $0x60] sm:$0xff]
      %v693 = vld [vmem:[%s679 + $0x68] sm:$0xff]
      %v694 = vld [vmem:[%s679 + $0x70] sm:$0xff]
      %v695 = vld [vmem:[%s679 + $0x78] sm:$0xff]
      %696 = vmatprep.subr.mxu0 0.0
      %697 = vmatpush1.msra.mxu0 %v680
      %698 = vmatprep.subr.mxu0 0.0
      %699 = vmatpush1.msra.mxu0 %v681
      %700 = vmatprep.subr.mxu0 0.0
      %701 = vmatpush1.msra.mxu0 %v682
      %702 = vmatprep.subr.mxu0 0.0
      %703 = vmatpush1.msra.mxu0 %v683
      %704 = vmatprep.subr.mxu0 0.0
      %705 = vmatpush1.msra.mxu0 %v684
      %706 = vmatprep.subr.mxu0 0.0
      %707 = vmatpush1.msra.mxu0 %v685
      %708 = vmatprep.subr.mxu0 0.0
      %709 = vmatpush1.msra.mxu0 %v686
      %710 = vmatprep.subr.mxu0 0.0
      %711 = vmatpush1.msra.mxu0 %v687
      %712 = vmatprep.subr.mxu0 0.0
      %713 = vmatpush1.msra.mxu0 %v688
      %714 = vmatprep.subr.mxu0 0.0
      %715 = vmatpush1.msra.mxu0 %v689
      %716 = vmatprep.subr.mxu0 0.0
      %717 = vmatpush1.msra.mxu0 %v690
      %718 = vmatprep.subr.mxu0 0.0
      %719 = vmatpush1.msra.mxu0 %v691
      %720 = vmatprep.subr.mxu0 0.0
      %721 = vmatpush1.msra.mxu0 %v692
      %722 = vmatprep.subr.mxu0 0.0
      %723 = vmatpush1.msra.mxu0 %v693
      %724 = vmatprep.subr.mxu0 0.0
      %725 = vmatpush1.msra.mxu0 %v694
      %726 = vmatprep.subr.mxu0 0.0
      %727 = vmatpush1.msra.mxu0 %v695
      %728 = vmatprep.subr.mxu0 0.0
      %729 = vmatpush1.msra.mxu0 0.0
      %730 = vmatprep.subr.mxu0 0.0
      %731 = vmatpush1.msra.mxu0 0.0
      %732 = vmatprep.subr.mxu0 0.0
      %733 = vmatpush1.msra.mxu0 0.0
      %734 = vmatprep.subr.mxu0 0.0
      %735 = vmatpush1.msra.mxu0 0.0
      %736 = vmatprep.subr.mxu0 0.0
      %737 = vmatpush1.msra.mxu0 0.0
      %738 = vmatprep.subr.mxu0 0.0
      %739 = vmatpush1.msra.mxu0 0.0
      %740 = vmatprep.subr.mxu0 0.0
      %741 = vmatpush1.msra.mxu0 0.0
      %742 = vmatprep.subr.mxu0 0.0
      %743 = vmatpush1.msra.mxu0 0.0
      %744 = vmatprep.subr.mxu0 0.0
      %745 = vmatpush1.msra.mxu0 0.0
      %746 = vmatprep.subr.mxu0 0.0
      %747 = vmatpush1.msra.mxu0 0.0
      %748 = vmatprep.subr.mxu0 0.0
      %749 = vmatpush1.msra.mxu0 0.0
      %750 = vmatprep.subr.mxu0 0.0
      %751 = vmatpush1.msra.mxu0 0.0
      %752 = vmatprep.subr.mxu0 0.0
      %753 = vmatpush1.msra.mxu0 0.0
      %754 = vmatprep.subr.mxu0 0.0
      %755 = vmatpush1.msra.mxu0 0.0
      %756 = vmatprep.subr.mxu0 0.0
      %757 = vmatpush1.msra.mxu0 0.0
      %758 = vmatprep.subr.mxu0 0.0
      %759 = vmatpush1.msra.mxu0 0.0
      %760 = vmatprep.mubr.f32.mxu0 0.0
      %761 = vmatmul.mubr.f32.gmra.mrb[0].mxu0 %v649
      %v762 = vpop.f32.mrb[0].mxu0
      %v763 = vadd.f32 0.0, %v762
      %v764 = vpop.f32.mrb[0].mxu0
      %765 = vmatprep.mubr.f32.mxu0 0.0
      %766 = vmatmul.mubr.f32.gmra.mrb[0].mxu0 %v652
      %v767 = vpop.f32.mrb[0].mxu0
      %v768 = vadd.f32 0.0, %v767
      %v769 = vpop.f32.mrb[0].mxu0
      %770 = vmatprep.mubr.f32.mxu0 0.0
      %771 = vmatmul.mubr.f32.gmra.mrb[0].mxu0 %v655
      %v772 = vpop.f32.mrb[0].mxu0
      %v773 = vadd.f32 0.0, %v772
      %v774 = vpop.f32.mrb[0].mxu0
      %775 = vmatprep.mubr.f32.mxu0 0.0
      %776 = vmatmul.mubr.f32.gmra.mrb[0].mxu0 %v658
      %v777 = vpop.f32.mrb[0].mxu0
      %v778 = vadd.f32 0.0, %v777
      %v779 = vpop.f32.mrb[0].mxu0
      %780 = vmatprep.mubr.f32.mxu0 0.0
      %781 = vmatmul.mubr.f32.gmra.mrb[0].mxu0 %v661
      %v782 = vpop.f32.mrb[0].mxu0
      %v783 = vadd.f32 0.0, %v782
      %v784 = vpop.f32.mrb[0].mxu0
      %785 = vmatprep.mubr.f32.mxu0 0.0
      %786 = vmatmul.mubr.f32.gmra.mrb[0].mxu0 %v664
      %v787 = vpop.f32.mrb[0].mxu0
      %v788 = vadd.f32 0.0, %v787
      %v789 = vpop.f32.mrb[0].mxu0
      %790 = vmatprep.mubr.f32.mxu0 0.0
      %791 = vmatmul.mubr.f32.gmra.mrb[0].mxu0 %v667
      %v792 = vpop.f32.mrb[0].mxu0
      %v793 = vadd.f32 0.0, %v792
      %v794 = vpop.f32.mrb[0].mxu0
      %795 = vmatprep.mubr.f32.mxu0 0.0
      %796 = vmatmul.mubr.f32.gmra.mrb[0].mxu0 %v670
      %v797 = vpop.f32.mrb[0].mxu0
      %v798 = vadd.f32 0.0, %v797
      %v799 = vpop.f32.mrb[0].mxu0
      %800 = vdwg.mxu0
      %v801 = vadd.f32 %v608, %v763
      %v802 = vadd.f32 %v613, %v768
      %v803 = vadd.f32 %v618, %v773
      %v804 = vadd.f32 %v623, %v778
      %v805 = vadd.f32 %v628, %v783
      %v806 = vadd.f32 %v633, %v788
      %v807 = vadd.f32 %v638, %v793
      %v808 = vadd.f32 %v643, %v798
      %s809 = scalar_lea.vmem %s3, 384
      %v810 = vld [vmem:[%s809] sm:$0xff]
      %v811 = vld [vmem:[%s809 + $0x8] sm:$0xff]
      %v812 = vld [vmem:[%s809 + $0x10] sm:$0xff]
      %v813 = vld [vmem:[%s809 + $0x18] sm:$0xff]
      %v814 = vld [vmem:[%s809 + $0x20] sm:$0xff]
      %v815 = vld [vmem:[%s809 + $0x28] sm:$0xff]
      %v816 = vld [vmem:[%s809 + $0x30] sm:$0xff]
      %v817 = vld [vmem:[%s809 + $0x38] sm:$0xff]
      %v818 = vld [vmem:[%s809 + $0x40] sm:$0xff]
      %v819 = vld [vmem:[%s809 + $0x48] sm:$0xff]
      %v820 = vld [vmem:[%s809 + $0x50] sm:$0xff]
      %v821 = vld [vmem:[%s809 + $0x58] sm:$0xff]
      %v822 = vld [vmem:[%s809 + $0x60] sm:$0xff]
      %v823 = vld [vmem:[%s809 + $0x68] sm:$0xff]
      %v824 = vld [vmem:[%s809 + $0x70] sm:$0xff]
      %v825 = vld [vmem:[%s809 + $0x78] sm:$0xff]
      %826 = vmatprep.subr.mxu0 0.0
      %827 = vmatpush1.msra.mxu0 %v810
      %828 = vmatprep.subr.mxu0 0.0
      %829 = vmatpush1.msra.mxu0 %v811
      %830 = vmatprep.subr.mxu0 0.0
      %831 = vmatpush1.msra.mxu0 %v812
      %832 = vmatprep.subr.mxu0 0.0
      %833 = vmatpush1.msra.mxu0 %v813
      %834 = vmatprep.subr.mxu0 0.0
      %835 = vmatpush1.msra.mxu0 %v814
      %836 = vmatprep.subr.mxu0 0.0
      %837 = vmatpush1.msra.mxu0 %v815
      %838 = vmatprep.subr.mxu0 0.0
      %839 = vmatpush1.msra.mxu0 %v816
      %840 = vmatprep.subr.mxu0 0.0
      %841 = vmatpush1.msra.mxu0 %v817
      %842 = vmatprep.subr.mxu0 0.0
      %843 = vmatpush1.msra.mxu0 %v818
      %844 = vmatprep.subr.mxu0 0.0
      %845 = vmatpush1.msra.mxu0 %v819
      %846 = vmatprep.subr.mxu0 0.0
      %847 = vmatpush1.msra.mxu0 %v820
      %848 = vmatprep.subr.mxu0 0.0
      %849 = vmatpush1.msra.mxu0 %v821
      %850 = vmatprep.subr.mxu0 0.0
      %851 = vmatpush1.msra.mxu0 %v822
      %852 = vmatprep.subr.mxu0 0.0
      %853 = vmatpush1.msra.mxu0 %v823
      %854 = vmatprep.subr.mxu0 0.0
      %855 = vmatpush1.msra.mxu0 %v824
      %856 = vmatprep.subr.mxu0 0.0
      %857 = vmatpush1.msra.mxu0 %v825
      %858 = vmatprep.subr.mxu0 0.0
      %859 = vmatpush1.msra.mxu0 0.0
      %860 = vmatprep.subr.mxu0 0.0
      %861 = vmatpush1.msra.mxu0 0.0
      %862 = vmatprep.subr.mxu0 0.0
      %863 = vmatpush1.msra.mxu0 0.0
      %864 = vmatprep.subr.mxu0 0.0
      %865 = vmatpush1.msra.mxu0 0.0
      %866 = vmatprep.subr.mxu0 0.0
      %867 = vmatpush1.msra.mxu0 0.0
      %868 = vmatprep.subr.mxu0 0.0
      %869 = vmatpush1.msra.mxu0 0.0
      %870 = vmatprep.subr.mxu0 0.0
      %871 = vmatpush1.msra.mxu0 0.0
      %872 = vmatprep.subr.mxu0 0.0
      %873 = vmatpush1.msra.mxu0 0.0
      %874 = vmatprep.subr.mxu0 0.0
      %875 = vmatpush1.msra.mxu0 0.0
      %876 = vmatprep.subr.mxu0 0.0
      %877 = vmatpush1.msra.mxu0 0.0
      %878 = vmatprep.subr.mxu0 0.0
      %879 = vmatpush1.msra.mxu0 0.0
      %880 = vmatprep.subr.mxu0 0.0
      %881 = vmatpush1.msra.mxu0 0.0
      %882 = vmatprep.subr.mxu0 0.0
      %883 = vmatpush1.msra.mxu0 0.0
      %884 = vmatprep.subr.mxu0 0.0
      %885 = vmatpush1.msra.mxu0 0.0
      %886 = vmatprep.subr.mxu0 0.0
      %887 = vmatpush1.msra.mxu0 0.0
      %888 = vmatprep.subr.mxu0 0.0
      %889 = vmatpush1.msra.mxu0 0.0
      %890 = vmatprep.mubr.f32.mxu0 0.0
      %891 = vmatmul.mubr.f32.gmra.mrb[0].mxu0 %v336
      %v892 = vpop.f32.mrb[0].mxu0
      %v893 = vadd.f32 0.0, %v892
      %v894 = vpop.f32.mrb[0].mxu0
      %895 = vmatprep.mubr.f32.mxu0 0.0
      %896 = vmatmul.mubr.f32.gmra.mrb[0].mxu0 %v338
      %v897 = vpop.f32.mrb[0].mxu0
      %v898 = vadd.f32 0.0, %v897
      %v899 = vpop.f32.mrb[0].mxu0
      %900 = vmatprep.mubr.f32.mxu0 0.0
      %901 = vmatmul.mubr.f32.gmra.mrb[0].mxu0 %v340
      %v902 = vpop.f32.mrb[0].mxu0
      %v903 = vadd.f32 0.0, %v902
      %v904 = vpop.f32.mrb[0].mxu0
      %905 = vmatprep.mubr.f32.mxu0 0.0
      %906 = vmatmul.mubr.f32.gmra.mrb[0].mxu0 %v342
      %v907 = vpop.f32.mrb[0].mxu0
      %v908 = vadd.f32 0.0, %v907
      %v909 = vpop.f32.mrb[0].mxu0
      %910 = vmatprep.mubr.f32.mxu0 0.0
      %911 = vmatmul.mubr.f32.gmra.mrb[0].mxu0 %v344
      %v912 = vpop.f32.mrb[0].mxu0
      %v913 = vadd.f32 0.0, %v912
      %v914 = vpop.f32.mrb[0].mxu0
      %915 = vmatprep.mubr.f32.mxu0 0.0
      %916 = vmatmul.mubr.f32.gmra.mrb[0].mxu0 %v346
      %v917 = vpop.f32.mrb[0].mxu0
      %v918 = vadd.f32 0.0, %v917
      %v919 = vpop.f32.mrb[0].mxu0
      %920 = vmatprep.mubr.f32.mxu0 0.0
      %921 = vmatmul.mubr.f32.gmra.mrb[0].mxu0 %v348
      %v922 = vpop.f32.mrb[0].mxu0
      %v923 = vadd.f32 0.0, %v922
      %v924 = vpop.f32.mrb[0].mxu0
      %925 = vmatprep.mubr.f32.mxu0 0.0
      %926 = vmatmul.mubr.f32.gmra.mrb[0].mxu0 %v350
      %v927 = vpop.f32.mrb[0].mxu0
      %v928 = vadd.f32 0.0, %v927
      %v929 = vpop.f32.mrb[0].mxu0
      %930 = vdwg.mxu0
      %v931 = vadd.f32 %v801, %v893
      %v932 = vadd.f32 %v802, %v898
      %v933 = vadd.f32 %v803, %v903
      %v934 = vadd.f32 %v804, %v908
      %v935 = vadd.f32 %v805, %v913
      %v936 = vadd.f32 %v806, %v918
      %v937 = vadd.f32 %v807, %v923
      %v938 = vadd.f32 %v808, %v928
      %v941 = vrot.slane %v350, 1
      %v942 = vrot.slane %v351, 1
      %v943 = vsel %vm386, %v941, %v942
      %s945 = scalar_lea.vmem %s3, 512
      %v946 = vld [vmem:[%s945] sm:$0xff]
      %v947 = vld [vmem:[%s945 + $0x8] sm:$0xff]
      %v948 = vld [vmem:[%s945 + $0x10] sm:$0xff]
      %v949 = vld [vmem:[%s945 + $0x18] sm:$0xff]
      %v950 = vld [vmem:[%s945 + $0x20] sm:$0xff]
      %v951 = vld [vmem:[%s945 + $0x28] sm:$0xff]
      %v952 = vld [vmem:[%s945 + $0x30] sm:$0xff]
      %v953 = vld [vmem:[%s945 + $0x38] sm:$0xff]
      %v954 = vld [vmem:[%s945 + $0x40] sm:$0xff]
      %v955 = vld [vmem:[%s945 + $0x48] sm:$0xff]
      %v956 = vld [vmem:[%s945 + $0x50] sm:$0xff]
      %v957 = vld [vmem:[%s945 + $0x58] sm:$0xff]
      %v958 = vld [vmem:[%s945 + $0x60] sm:$0xff]
      %v959 = vld [vmem:[%s945 + $0x68] sm:$0xff]
      %v960 = vld [vmem:[%s945 + $0x70] sm:$0xff]
      %v961 = vld [vmem:[%s945 + $0x78] sm:$0xff]
      %962 = vmatprep.subr.mxu0 0.0
      %963 = vmatpush1.msra.mxu0 %v946
      %964 = vmatprep.subr.mxu0 0.0
      %965 = vmatpush1.msra.mxu0 %v947
      %966 = vmatprep.subr.mxu0 0.0
      %967 = vmatpush1.msra.mxu0 %v948
      %968 = vmatprep.subr.mxu0 0.0
      %969 = vmatpush1.msra.mxu0 %v949
      %970 = vmatprep.subr.mxu0 0.0
      %971 = vmatpush1.msra.mxu0 %v950
      %972 = vmatprep.subr.mxu0 0.0
      %973 = vmatpush1.msra.mxu0 %v951
      %974 = vmatprep.subr.mxu0 0.0
      %975 = vmatpush1.msra.mxu0 %v952
      %976 = vmatprep.subr.mxu0 0.0
      %977 = vmatpush1.msra.mxu0 %v953
      %978 = vmatprep.subr.mxu0 0.0
      %979 = vmatpush1.msra.mxu0 %v954
      %980 = vmatprep.subr.mxu0 0.0
      %981 = vmatpush1.msra.mxu0 %v955
      %982 = vmatprep.subr.mxu0 0.0
      %983 = vmatpush1.msra.mxu0 %v956
      %984 = vmatprep.subr.mxu0 0.0
      %985 = vmatpush1.msra.mxu0 %v957
      %986 = vmatprep.subr.mxu0 0.0
      %987 = vmatpush1.msra.mxu0 %v958
      %988 = vmatprep.subr.mxu0 0.0
      %989 = vmatpush1.msra.mxu0 %v959
      %990 = vmatprep.subr.mxu0 0.0
      %991 = vmatpush1.msra.mxu0 %v960
      %992 = vmatprep.subr.mxu0 0.0
      %993 = vmatpush1.msra.mxu0 %v961
      %994 = vmatprep.subr.mxu0 0.0
      %995 = vmatpush1.msra.mxu0 0.0
      %996 = vmatprep.subr.mxu0 0.0
      %997 = vmatpush1.msra.mxu0 0.0
      %998 = vmatprep.subr.mxu0 0.0
      %999 = vmatpush1.msra.mxu0 0.0
      %1000 = vmatprep.subr.mxu0 0.0
      %1001 = vmatpush1.msra.mxu0 0.0
      %1002 = vmatprep.subr.mxu0 0.0
      %1003 = vmatpush1.msra.mxu0 0.0
      %1004 = vmatprep.subr.mxu0 0.0
      %1005 = vmatpush1.msra.mxu0 0.0
      %1006 = vmatprep.subr.mxu0 0.0
      %1007 = vmatpush1.msra.mxu0 0.0
      %1008 = vmatprep.subr.mxu0 0.0
      %1009 = vmatpush1.msra.mxu0 0.0
      %1010 = vmatprep.subr.mxu0 0.0
      %1011 = vmatpush1.msra.mxu0 0.0
      %1012 = vmatprep.subr.mxu0 0.0
      %1013 = vmatpush1.msra.mxu0 0.0
      %1014 = vmatprep.subr.mxu0 0.0
      %1015 = vmatpush1.msra.mxu0 0.0
      %1016 = vmatprep.subr.mxu0 0.0
      %1017 = vmatpush1.msra.mxu0 0.0
      %1018 = vmatprep.subr.mxu0 0.0
      %1019 = vmatpush1.msra.mxu0 0.0
      %1020 = vmatprep.subr.mxu0 0.0
      %1021 = vmatpush1.msra.mxu0 0.0
      %1022 = vmatprep.subr.mxu0 0.0
      %1023 = vmatpush1.msra.mxu0 0.0
      %1024 = vmatprep.subr.mxu0 0.0
      %1025 = vmatpush1.msra.mxu0 0.0
      %1026 = vmatprep.mubr.f32.mxu0 0.0
      %1027 = vmatmul.mubr.f32.gmra.mrb[0].mxu0 %v392
      %v1028 = vpop.f32.mrb[0].mxu0
      %v1029 = vadd.f32 0.0, %v1028
      %v1030 = vpop.f32.mrb[0].mxu0
      %1031 = vmatprep.mubr.f32.mxu0 0.0
      %1032 = vmatmul.mubr.f32.gmra.mrb[0].mxu0 %v395
      %v1033 = vpop.f32.mrb[0].mxu0
      %v1034 = vadd.f32 0.0, %v1033
      %v1035 = vpop.f32.mrb[0].mxu0
      %1036 = vmatprep.mubr.f32.mxu0 0.0
      %1037 = vmatmul.mubr.f32.gmra.mrb[0].mxu0 %v398
      %v1038 = vpop.f32.mrb[0].mxu0
      %v1039 = vadd.f32 0.0, %v1038
      %v1040 = vpop.f32.mrb[0].mxu0
      %1041 = vmatprep.mubr.f32.mxu0 0.0
      %1042 = vmatmul.mubr.f32.gmra.mrb[0].mxu0 %v401
      %v1043 = vpop.f32.mrb[0].mxu0
      %v1044 = vadd.f32 0.0, %v1043
      %v1045 = vpop.f32.mrb[0].mxu0
      %1046 = vmatprep.mubr.f32.mxu0 0.0
      %1047 = vmatmul.mubr.f32.gmra.mrb[0].mxu0 %v404
      %v1048 = vpop.f32.mrb[0].mxu0
      %v1049 = vadd.f32 0.0, %v1048
      %v1050 = vpop.f32.mrb[0].mxu0
      %1051 = vmatprep.mubr.f32.mxu0 0.0
      %1052 = vmatmul.mubr.f32.gmra.mrb[0].mxu0 %v407
      %v1053 = vpop.f32.mrb[0].mxu0
      %v1054 = vadd.f32 0.0, %v1053
      %v1055 = vpop.f32.mrb[0].mxu0
      %1056 = vmatprep.mubr.f32.mxu0 0.0
      %1057 = vmatmul.mubr.f32.gmra.mrb[0].mxu0 %v410
      %v1058 = vpop.f32.mrb[0].mxu0
      %v1059 = vadd.f32 0.0, %v1058
      %v1060 = vpop.f32.mrb[0].mxu0
      %1061 = vmatprep.mubr.f32.mxu0 0.0
      %1062 = vmatmul.mubr.f32.gmra.mrb[0].mxu0 %v943
      %v1063 = vpop.f32.mrb[0].mxu0
      %v1064 = vadd.f32 0.0, %v1063
      %v1065 = vpop.f32.mrb[0].mxu0
      %1066 = vdwg.mxu0
      %v1067 = vadd.f32 %v931, %v1029
      %v1068 = vadd.f32 %v932, %v1034
      %v1069 = vadd.f32 %v933, %v1039
      %v1070 = vadd.f32 %v934, %v1044
      %v1071 = vadd.f32 %v935, %v1049
      %v1072 = vadd.f32 %v936, %v1054
      %v1073 = vadd.f32 %v937, %v1059
      %v1074 = vadd.f32 %v938, %v1064
      %v1075 = vrot.slane %v350, 2
      %v1076 = vrot.slane %v351, 2
      %v1077 = vsel %vm646, %v1075, %v1076
      %s1079 = scalar_lea.vmem %s3, 640
      %v1080 = vld [vmem:[%s1079] sm:$0xff]
      %v1081 = vld [vmem:[%s1079 + $0x8] sm:$0xff]
      %v1082 = vld [vmem:[%s1079 + $0x10] sm:$0xff]
      %v1083 = vld [vmem:[%s1079 + $0x18] sm:$0xff]
      %v1084 = vld [vmem:[%s1079 + $0x20] sm:$0xff]
      %v1085 = vld [vmem:[%s1079 + $0x28] sm:$0xff]
      %v1086 = vld [vmem:[%s1079 + $0x30] sm:$0xff]
      %v1087 = vld [vmem:[%s1079 + $0x38] sm:$0xff]
      %v1088 = vld [vmem:[%s1079 + $0x40] sm:$0xff]
      %v1089 = vld [vmem:[%s1079 + $0x48] sm:$0xff]
      %v1090 = vld [vmem:[%s1079 + $0x50] sm:$0xff]
      %v1091 = vld [vmem:[%s1079 + $0x58] sm:$0xff]
      %v1092 = vld [vmem:[%s1079 + $0x60] sm:$0xff]
      %v1093 = vld [vmem:[%s1079 + $0x68] sm:$0xff]
      %v1094 = vld [vmem:[%s1079 + $0x70] sm:$0xff]
      %v1095 = vld [vmem:[%s1079 + $0x78] sm:$0xff]
      %1096 = vmatprep.subr.mxu0 0.0
      %1097 = vmatpush1.msra.mxu0 %v1080
      %1098 = vmatprep.subr.mxu0 0.0
      %1099 = vmatpush1.msra.mxu0 %v1081
      %1100 = vmatprep.subr.mxu0 0.0
      %1101 = vmatpush1.msra.mxu0 %v1082
      %1102 = vmatprep.subr.mxu0 0.0
      %1103 = vmatpush1.msra.mxu0 %v1083
      %1104 = vmatprep.subr.mxu0 0.0
      %1105 = vmatpush1.msra.mxu0 %v1084
      %1106 = vmatprep.subr.mxu0 0.0
      %1107 = vmatpush1.msra.mxu0 %v1085
      %1108 = vmatprep.subr.mxu0 0.0
      %1109 = vmatpush1.msra.mxu0 %v1086
      %1110 = vmatprep.subr.mxu0 0.0
      %1111 = vmatpush1.msra.mxu0 %v1087
      %1112 = vmatprep.subr.mxu0 0.0
      %1113 = vmatpush1.msra.mxu0 %v1088
      %1114 = vmatprep.subr.mxu0 0.0
      %1115 = vmatpush1.msra.mxu0 %v1089
      %1116 = vmatprep.subr.mxu0 0.0
      %1117 = vmatpush1.msra.mxu0 %v1090
      %1118 = vmatprep.subr.mxu0 0.0
      %1119 = vmatpush1.msra.mxu0 %v1091
      %1120 = vmatprep.subr.mxu0 0.0
      %1121 = vmatpush1.msra.mxu0 %v1092
      %1122 = vmatprep.subr.mxu0 0.0
      %1123 = vmatpush1.msra.mxu0 %v1093
      %1124 = vmatprep.subr.mxu0 0.0
      %1125 = vmatpush1.msra.mxu0 %v1094
      %1126 = vmatprep.subr.mxu0 0.0
      %1127 = vmatpush1.msra.mxu0 %v1095
      %1128 = vmatprep.subr.mxu0 0.0
      %1129 = vmatpush1.msra.mxu0 0.0
      %1130 = vmatprep.subr.mxu0 0.0
      %1131 = vmatpush1.msra.mxu0 0.0
      %1132 = vmatprep.subr.mxu0 0.0
      %1133 = vmatpush1.msra.mxu0 0.0
      %1134 = vmatprep.subr.mxu0 0.0
      %1135 = vmatpush1.msra.mxu0 0.0
      %1136 = vmatprep.subr.mxu0 0.0
      %1137 = vmatpush1.msra.mxu0 0.0
      %1138 = vmatprep.subr.mxu0 0.0
      %1139 = vmatpush1.msra.mxu0 0.0
      %1140 = vmatprep.subr.mxu0 0.0
      %1141 = vmatpush1.msra.mxu0 0.0
      %1142 = vmatprep.subr.mxu0 0.0
      %1143 = vmatpush1.msra.mxu0 0.0
      %1144 = vmatprep.subr.mxu0 0.0
      %1145 = vmatpush1.msra.mxu0 0.0
      %1146 = vmatprep.subr.mxu0 0.0
      %1147 = vmatpush1.msra.mxu0 0.0
      %1148 = vmatprep.subr.mxu0 0.0
      %1149 = vmatpush1.msra.mxu0 0.0
      %1150 = vmatprep.subr.mxu0 0.0
      %1151 = vmatpush1.msra.mxu0 0.0
      %1152 = vmatprep.subr.mxu0 0.0
      %1153 = vmatpush1.msra.mxu0 0.0
      %1154 = vmatprep.subr.mxu0 0.0
      %1155 = vmatpush1.msra.mxu0 0.0
      %1156 = vmatprep.subr.mxu0 0.0
      %1157 = vmatpush1.msra.mxu0 0.0
      %1158 = vmatprep.subr.mxu0 0.0
      %1159 = vmatpush1.msra.mxu0 0.0
      %1160 = vmatprep.mubr.f32.mxu0 0.0
      %1161 = vmatmul.mubr.f32.gmra.mrb[0].mxu0 %v652
      %v1162 = vpop.f32.mrb[0].mxu0
      %v1163 = vadd.f32 0.0, %v1162
      %v1164 = vpop.f32.mrb[0].mxu0
      %1165 = vmatprep.mubr.f32.mxu0 0.0
      %1166 = vmatmul.mubr.f32.gmra.mrb[0].mxu0 %v655
      %v1167 = vpop.f32.mrb[0].mxu0
      %v1168 = vadd.f32 0.0, %v1167
      %v1169 = vpop.f32.mrb[0].mxu0
      %1170 = vmatprep.mubr.f32.mxu0 0.0
      %1171 = vmatmul.mubr.f32.gmra.mrb[0].mxu0 %v658
      %v1172 = vpop.f32.mrb[0].mxu0
      %v1173 = vadd.f32 0.0, %v1172
      %v1174 = vpop.f32.mrb[0].mxu0
      %1175 = vmatprep.mubr.f32.mxu0 0.0
      %1176 = vmatmul.mubr.f32.gmra.mrb[0].mxu0 %v661
      %v1177 = vpop.f32.mrb[0].mxu0
      %v1178 = vadd.f32 0.0, %v1177
      %v1179 = vpop.f32.mrb[0].mxu0
      %1180 = vmatprep.mubr.f32.mxu0 0.0
      %1181 = vmatmul.mubr.f32.gmra.mrb[0].mxu0 %v664
      %v1182 = vpop.f32.mrb[0].mxu0
      %v1183 = vadd.f32 0.0, %v1182
      %v1184 = vpop.f32.mrb[0].mxu0
      %1185 = vmatprep.mubr.f32.mxu0 0.0
      %1186 = vmatmul.mubr.f32.gmra.mrb[0].mxu0 %v667
      %v1187 = vpop.f32.mrb[0].mxu0
      %v1188 = vadd.f32 0.0, %v1187
      %v1189 = vpop.f32.mrb[0].mxu0
      %1190 = vmatprep.mubr.f32.mxu0 0.0
      %1191 = vmatmul.mubr.f32.gmra.mrb[0].mxu0 %v670
      %v1192 = vpop.f32.mrb[0].mxu0
      %v1193 = vadd.f32 0.0, %v1192
      %v1194 = vpop.f32.mrb[0].mxu0
      %1195 = vmatprep.mubr.f32.mxu0 0.0
      %1196 = vmatmul.mubr.f32.gmra.mrb[0].mxu0 %v1077
      %v1197 = vpop.f32.mrb[0].mxu0
      %v1198 = vadd.f32 0.0, %v1197
      %v1199 = vpop.f32.mrb[0].mxu0
      %1200 = vdwg.mxu0
      %v1201 = vadd.f32 %v1067, %v1163
      %v1202 = vadd.f32 %v1068, %v1168
      %v1203 = vadd.f32 %v1069, %v1173
      %v1204 = vadd.f32 %v1070, %v1178
      %v1205 = vadd.f32 %v1071, %v1183
      %v1206 = vadd.f32 %v1072, %v1188
      %v1207 = vadd.f32 %v1073, %v1193
      %v1208 = vadd.f32 %v1074, %v1198
      %s1209 = scalar_lea.vmem %s3, 768
      %v1210 = vld [vmem:[%s1209] sm:$0xff]
      %v1211 = vld [vmem:[%s1209 + $0x8] sm:$0xff]
      %v1212 = vld [vmem:[%s1209 + $0x10] sm:$0xff]
      %v1213 = vld [vmem:[%s1209 + $0x18] sm:$0xff]
      %v1214 = vld [vmem:[%s1209 + $0x20] sm:$0xff]
      %v1215 = vld [vmem:[%s1209 + $0x28] sm:$0xff]
      %v1216 = vld [vmem:[%s1209 + $0x30] sm:$0xff]
      %v1217 = vld [vmem:[%s1209 + $0x38] sm:$0xff]
      %v1218 = vld [vmem:[%s1209 + $0x40] sm:$0xff]
      %v1219 = vld [vmem:[%s1209 + $0x48] sm:$0xff]
      %v1220 = vld [vmem:[%s1209 + $0x50] sm:$0xff]
      %v1221 = vld [vmem:[%s1209 + $0x58] sm:$0xff]
      %v1222 = vld [vmem:[%s1209 + $0x60] sm:$0xff]
      %v1223 = vld [vmem:[%s1209 + $0x68] sm:$0xff]
      %v1224 = vld [vmem:[%s1209 + $0x70] sm:$0xff]
      %v1225 = vld [vmem:[%s1209 + $0x78] sm:$0xff]
      %1226 = vmatprep.subr.mxu0 0.0
      %1227 = vmatpush1.msra.mxu0 %v1210
      %1228 = vmatprep.subr.mxu0 0.0
      %1229 = vmatpush1.msra.mxu0 %v1211
      %1230 = vmatprep.subr.mxu0 0.0
      %1231 = vmatpush1.msra.mxu0 %v1212
      %1232 = vmatprep.subr.mxu0 0.0
      %1233 = vmatpush1.msra.mxu0 %v1213
      %1234 = vmatprep.subr.mxu0 0.0
      %1235 = vmatpush1.msra.mxu0 %v1214
      %1236 = vmatprep.subr.mxu0 0.0
      %1237 = vmatpush1.msra.mxu0 %v1215
      %1238 = vmatprep.subr.mxu0 0.0
      %1239 = vmatpush1.msra.mxu0 %v1216
      %1240 = vmatprep.subr.mxu0 0.0
      %1241 = vmatpush1.msra.mxu0 %v1217
      %1242 = vmatprep.subr.mxu0 0.0
      %1243 = vmatpush1.msra.mxu0 %v1218
      %1244 = vmatprep.subr.mxu0 0.0
      %1245 = vmatpush1.msra.mxu0 %v1219
      %1246 = vmatprep.subr.mxu0 0.0
      %1247 = vmatpush1.msra.mxu0 %v1220
      %1248 = vmatprep.subr.mxu0 0.0
      %1249 = vmatpush1.msra.mxu0 %v1221
      %1250 = vmatprep.subr.mxu0 0.0
      %1251 = vmatpush1.msra.mxu0 %v1222
      %1252 = vmatprep.subr.mxu0 0.0
      %1253 = vmatpush1.msra.mxu0 %v1223
      %1254 = vmatprep.subr.mxu0 0.0
      %1255 = vmatpush1.msra.mxu0 %v1224
      %1256 = vmatprep.subr.mxu0 0.0
      %1257 = vmatpush1.msra.mxu0 %v1225
      %1258 = vmatprep.subr.mxu0 0.0
      %1259 = vmatpush1.msra.mxu0 0.0
      %1260 = vmatprep.subr.mxu0 0.0
      %1261 = vmatpush1.msra.mxu0 0.0
      %1262 = vmatprep.subr.mxu0 0.0
      %1263 = vmatpush1.msra.mxu0 0.0
      %1264 = vmatprep.subr.mxu0 0.0
      %1265 = vmatpush1.msra.mxu0 0.0
      %1266 = vmatprep.subr.mxu0 0.0
      %1267 = vmatpush1.msra.mxu0 0.0
      %1268 = vmatprep.subr.mxu0 0.0
      %1269 = vmatpush1.msra.mxu0 0.0
      %1270 = vmatprep.subr.mxu0 0.0
      %1271 = vmatpush1.msra.mxu0 0.0
      %1272 = vmatprep.subr.mxu0 0.0
      %1273 = vmatpush1.msra.mxu0 0.0
      %1274 = vmatprep.subr.mxu0 0.0
      %1275 = vmatpush1.msra.mxu0 0.0
      %1276 = vmatprep.subr.mxu0 0.0
      %1277 = vmatpush1.msra.mxu0 0.0
      %1278 = vmatprep.subr.mxu0 0.0
      %1279 = vmatpush1.msra.mxu0 0.0
      %1280 = vmatprep.subr.mxu0 0.0
      %1281 = vmatpush1.msra.mxu0 0.0
      %1282 = vmatprep.subr.mxu0 0.0
      %1283 = vmatpush1.msra.mxu0 0.0
      %1284 = vmatprep.subr.mxu0 0.0
      %1285 = vmatpush1.msra.mxu0 0.0
      %1286 = vmatprep.subr.mxu0 0.0
      %1287 = vmatpush1.msra.mxu0 0.0
      %1288 = vmatprep.subr.mxu0 0.0
      %1289 = vmatpush1.msra.mxu0 0.0
      %1290 = vmatprep.mubr.f32.mxu0 0.0
      %1291 = vmatmul.mubr.f32.gmra.mrb[0].mxu0 %v338
      %v1292 = vpop.f32.mrb[0].mxu0
      %v1293 = vadd.f32 0.0, %v1292
      %v1294 = vpop.f32.mrb[0].mxu0
      %1295 = vmatprep.mubr.f32.mxu0 0.0
      %1296 = vmatmul.mubr.f32.gmra.mrb[0].mxu0 %v340
      %v1297 = vpop.f32.mrb[0].mxu0
      %v1298 = vadd.f32 0.0, %v1297
      %v1299 = vpop.f32.mrb[0].mxu0
      %1300 = vmatprep.mubr.f32.mxu0 0.0
      %1301 = vmatmul.mubr.f32.gmra.mrb[0].mxu0 %v342
      %v1302 = vpop.f32.mrb[0].mxu0
      %v1303 = vadd.f32 0.0, %v1302
      %v1304 = vpop.f32.mrb[0].mxu0
      %1305 = vmatprep.mubr.f32.mxu0 0.0
      %1306 = vmatmul.mubr.f32.gmra.mrb[0].mxu0 %v344
      %v1307 = vpop.f32.mrb[0].mxu0
      %v1308 = vadd.f32 0.0, %v1307
      %v1309 = vpop.f32.mrb[0].mxu0
      %1310 = vmatprep.mubr.f32.mxu0 0.0
      %1311 = vmatmul.mubr.f32.gmra.mrb[0].mxu0 %v346
      %v1312 = vpop.f32.mrb[0].mxu0
      %v1313 = vadd.f32 0.0, %v1312
      %v1314 = vpop.f32.mrb[0].mxu0
      %1315 = vmatprep.mubr.f32.mxu0 0.0
      %1316 = vmatmul.mubr.f32.gmra.mrb[0].mxu0 %v348
      %v1317 = vpop.f32.mrb[0].mxu0
      %v1318 = vadd.f32 0.0, %v1317
      %v1319 = vpop.f32.mrb[0].mxu0
      %1320 = vmatprep.mubr.f32.mxu0 0.0
      %1321 = vmatmul.mubr.f32.gmra.mrb[0].mxu0 %v350
      %v1322 = vpop.f32.mrb[0].mxu0
      %v1323 = vadd.f32 0.0, %v1322
      %v1324 = vpop.f32.mrb[0].mxu0
      %1325 = vmatprep.mubr.f32.mxu0 0.0
      %1326 = vmatmul.mubr.f32.gmra.mrb[0].mxu0 %v352
      %v1327 = vpop.f32.mrb[0].mxu0
      %v1328 = vadd.f32 0.0, %v1327
      %v1329 = vpop.f32.mrb[0].mxu0
      %1330 = vdwg.mxu0
      %v1331 = vadd.f32 %v1201, %v1293
      %v1332 = vadd.f32 %v1202, %v1298
      %v1333 = vadd.f32 %v1203, %v1303
      %v1334 = vadd.f32 %v1204, %v1308
      %v1335 = vadd.f32 %v1205, %v1313
      %v1336 = vadd.f32 %v1206, %v1318
      %v1337 = vadd.f32 %v1207, %v1323
      %v1338 = vadd.f32 %v1208, %v1328
      %v1341 = vrot.slane %v352, 1
      %v1342 = vrot.slane %v353, 1
      %v1343 = vsel %vm386, %v1341, %v1342
      %s1345 = scalar_lea.vmem %s3, 896
      %v1346 = vld [vmem:[%s1345] sm:$0xff]
      %v1347 = vld [vmem:[%s1345 + $0x8] sm:$0xff]
      %v1348 = vld [vmem:[%s1345 + $0x10] sm:$0xff]
      %v1349 = vld [vmem:[%s1345 + $0x18] sm:$0xff]
      %v1350 = vld [vmem:[%s1345 + $0x20] sm:$0xff]
      %v1351 = vld [vmem:[%s1345 + $0x28] sm:$0xff]
      %v1352 = vld [vmem:[%s1345 + $0x30] sm:$0xff]
      %v1353 = vld [vmem:[%s1345 + $0x38] sm:$0xff]
      %v1354 = vld [vmem:[%s1345 + $0x40] sm:$0xff]
      %v1355 = vld [vmem:[%s1345 + $0x48] sm:$0xff]
      %v1356 = vld [vmem:[%s1345 + $0x50] sm:$0xff]
      %v1357 = vld [vmem:[%s1345 + $0x58] sm:$0xff]
      %v1358 = vld [vmem:[%s1345 + $0x60] sm:$0xff]
      %v1359 = vld [vmem:[%s1345 + $0x68] sm:$0xff]
      %v1360 = vld [vmem:[%s1345 + $0x70] sm:$0xff]
      %v1361 = vld [vmem:[%s1345 + $0x78] sm:$0xff]
      %1362 = vmatprep.subr.mxu0 0.0
      %1363 = vmatpush1.msra.mxu0 %v1346
      %1364 = vmatprep.subr.mxu0 0.0
      %1365 = vmatpush1.msra.mxu0 %v1347
      %1366 = vmatprep.subr.mxu0 0.0
      %1367 = vmatpush1.msra.mxu0 %v1348
      %1368 = vmatprep.subr.mxu0 0.0
      %1369 = vmatpush1.msra.mxu0 %v1349
      %1370 = vmatprep.subr.mxu0 0.0
      %1371 = vmatpush1.msra.mxu0 %v1350
      %1372 = vmatprep.subr.mxu0 0.0
      %1373 = vmatpush1.msra.mxu0 %v1351
      %1374 = vmatprep.subr.mxu0 0.0
      %1375 = vmatpush1.msra.mxu0 %v1352
      %1376 = vmatprep.subr.mxu0 0.0
      %1377 = vmatpush1.msra.mxu0 %v1353
      %1378 = vmatprep.subr.mxu0 0.0
      %1379 = vmatpush1.msra.mxu0 %v1354
      %1380 = vmatprep.subr.mxu0 0.0
      %1381 = vmatpush1.msra.mxu0 %v1355
      %1382 = vmatprep.subr.mxu0 0.0
      %1383 = vmatpush1.msra.mxu0 %v1356
      %1384 = vmatprep.subr.mxu0 0.0
      %1385 = vmatpush1.msra.mxu0 %v1357
      %1386 = vmatprep.subr.mxu0 0.0
      %1387 = vmatpush1.msra.mxu0 %v1358
      %1388 = vmatprep.subr.mxu0 0.0
      %1389 = vmatpush1.msra.mxu0 %v1359
      %1390 = vmatprep.subr.mxu0 0.0
      %1391 = vmatpush1.msra.mxu0 %v1360
      %1392 = vmatprep.subr.mxu0 0.0
      %1393 = vmatpush1.msra.mxu0 %v1361
      %1394 = vmatprep.subr.mxu0 0.0
      %1395 = vmatpush1.msra.mxu0 0.0
      %1396 = vmatprep.subr.mxu0 0.0
      %1397 = vmatpush1.msra.mxu0 0.0
      %1398 = vmatprep.subr.mxu0 0.0
      %1399 = vmatpush1.msra.mxu0 0.0
      %1400 = vmatprep.subr.mxu0 0.0
      %1401 = vmatpush1.msra.mxu0 0.0
      %1402 = vmatprep.subr.mxu0 0.0
      %1403 = vmatpush1.msra.mxu0 0.0
      %1404 = vmatprep.subr.mxu0 0.0
      %1405 = vmatpush1.msra.mxu0 0.0
      %1406 = vmatprep.subr.mxu0 0.0
      %1407 = vmatpush1.msra.mxu0 0.0
      %1408 = vmatprep.subr.mxu0 0.0
      %1409 = vmatpush1.msra.mxu0 0.0
      %1410 = vmatprep.subr.mxu0 0.0
      %1411 = vmatpush1.msra.mxu0 0.0
      %1412 = vmatprep.subr.mxu0 0.0
      %1413 = vmatpush1.msra.mxu0 0.0
      %1414 = vmatprep.subr.mxu0 0.0
      %1415 = vmatpush1.msra.mxu0 0.0
      %1416 = vmatprep.subr.mxu0 0.0
      %1417 = vmatpush1.msra.mxu0 0.0
      %1418 = vmatprep.subr.mxu0 0.0
      %1419 = vmatpush1.msra.mxu0 0.0
      %1420 = vmatprep.subr.mxu0 0.0
      %1421 = vmatpush1.msra.mxu0 0.0
      %1422 = vmatprep.subr.mxu0 0.0
      %1423 = vmatpush1.msra.mxu0 0.0
      %1424 = vmatprep.subr.mxu0 0.0
      %1425 = vmatpush1.msra.mxu0 0.0
      %1426 = vmatprep.mubr.f32.mxu0 0.0
      %1427 = vmatmul.mubr.f32.gmra.mrb[0].mxu0 %v395
      %v1428 = vpop.f32.mrb[0].mxu0
      %v1429 = vadd.f32 0.0, %v1428
      %v1430 = vpop.f32.mrb[0].mxu0
      %1431 = vmatprep.mubr.f32.mxu0 0.0
      %1432 = vmatmul.mubr.f32.gmra.mrb[0].mxu0 %v398
      %v1433 = vpop.f32.mrb[0].mxu0
      %v1434 = vadd.f32 0.0, %v1433
      %v1435 = vpop.f32.mrb[0].mxu0
      %1436 = vmatprep.mubr.f32.mxu0 0.0
      %1437 = vmatmul.mubr.f32.gmra.mrb[0].mxu0 %v401
      %v1438 = vpop.f32.mrb[0].mxu0
      %v1439 = vadd.f32 0.0, %v1438
      %v1440 = vpop.f32.mrb[0].mxu0
      %1441 = vmatprep.mubr.f32.mxu0 0.0
      %1442 = vmatmul.mubr.f32.gmra.mrb[0].mxu0 %v404
      %v1443 = vpop.f32.mrb[0].mxu0
      %v1444 = vadd.f32 0.0, %v1443
      %v1445 = vpop.f32.mrb[0].mxu0
      %1446 = vmatprep.mubr.f32.mxu0 0.0
      %1447 = vmatmul.mubr.f32.gmra.mrb[0].mxu0 %v407
      %v1448 = vpop.f32.mrb[0].mxu0
      %v1449 = vadd.f32 0.0, %v1448
      %v1450 = vpop.f32.mrb[0].mxu0
      %1451 = vmatprep.mubr.f32.mxu0 0.0
      %1452 = vmatmul.mubr.f32.gmra.mrb[0].mxu0 %v410
      %v1453 = vpop.f32.mrb[0].mxu0
      %v1454 = vadd.f32 0.0, %v1453
      %v1455 = vpop.f32.mrb[0].mxu0
      %1456 = vmatprep.mubr.f32.mxu0 0.0
      %1457 = vmatmul.mubr.f32.gmra.mrb[0].mxu0 %v943
      %v1458 = vpop.f32.mrb[0].mxu0
      %v1459 = vadd.f32 0.0, %v1458
      %v1460 = vpop.f32.mrb[0].mxu0
      %1461 = vmatprep.mubr.f32.mxu0 0.0
      %1462 = vmatmul.mubr.f32.gmra.mrb[0].mxu0 %v1343
      %v1463 = vpop.f32.mrb[0].mxu0
      %v1464 = vadd.f32 0.0, %v1463
      %v1465 = vpop.f32.mrb[0].mxu0
      %1466 = vdwg.mxu0
      %v1467 = vadd.f32 %v1331, %v1429
      %v1468 = vadd.f32 %v1332, %v1434
      %v1469 = vadd.f32 %v1333, %v1439
      %v1470 = vadd.f32 %v1334, %v1444
      %v1471 = vadd.f32 %v1335, %v1449
      %v1472 = vadd.f32 %v1336, %v1454
      %v1473 = vadd.f32 %v1337, %v1459
      %v1474 = vadd.f32 %v1338, %v1464
      %v1475 = vrot.slane %v352, 2
      %v1476 = vrot.slane %v353, 2
      %v1477 = vsel %vm646, %v1475, %v1476
      %s1479 = scalar_lea.vmem %s3, 1024
      %v1480 = vld [vmem:[%s1479] sm:$0xff]
      %v1481 = vld [vmem:[%s1479 + $0x8] sm:$0xff]
      %v1482 = vld [vmem:[%s1479 + $0x10] sm:$0xff]
      %v1483 = vld [vmem:[%s1479 + $0x18] sm:$0xff]
      %v1484 = vld [vmem:[%s1479 + $0x20] sm:$0xff]
      %v1485 = vld [vmem:[%s1479 + $0x28] sm:$0xff]
      %v1486 = vld [vmem:[%s1479 + $0x30] sm:$0xff]
      %v1487 = vld [vmem:[%s1479 + $0x38] sm:$0xff]
      %v1488 = vld [vmem:[%s1479 + $0x40] sm:$0xff]
      %v1489 = vld [vmem:[%s1479 + $0x48] sm:$0xff]
      %v1490 = vld [vmem:[%s1479 + $0x50] sm:$0xff]
      %v1491 = vld [vmem:[%s1479 + $0x58] sm:$0xff]
      %v1492 = vld [vmem:[%s1479 + $0x60] sm:$0xff]
      %v1493 = vld [vmem:[%s1479 + $0x68] sm:$0xff]
      %v1494 = vld [vmem:[%s1479 + $0x70] sm:$0xff]
      %v1495 = vld [vmem:[%s1479 + $0x78] sm:$0xff]
      %1496 = vmatprep.subr.mxu0 0.0
      %1497 = vmatpush1.msra.mxu0 %v1480
      %1498 = vmatprep.subr.mxu0 0.0
      %1499 = vmatpush1.msra.mxu0 %v1481
      %1500 = vmatprep.subr.mxu0 0.0
      %1501 = vmatpush1.msra.mxu0 %v1482
      %1502 = vmatprep.subr.mxu0 0.0
      %1503 = vmatpush1.msra.mxu0 %v1483
      %1504 = vmatprep.subr.mxu0 0.0
      %1505 = vmatpush1.msra.mxu0 %v1484
      %1506 = vmatprep.subr.mxu0 0.0
      %1507 = vmatpush1.msra.mxu0 %v1485
      %1508 = vmatprep.subr.mxu0 0.0
      %1509 = vmatpush1.msra.mxu0 %v1486
      %1510 = vmatprep.subr.mxu0 0.0
      %1511 = vmatpush1.msra.mxu0 %v1487
      %1512 = vmatprep.subr.mxu0 0.0
      %1513 = vmatpush1.msra.mxu0 %v1488
      %1514 = vmatprep.subr.mxu0 0.0
      %1515 = vmatpush1.msra.mxu0 %v1489
      %1516 = vmatprep.subr.mxu0 0.0
      %1517 = vmatpush1.msra.mxu0 %v1490
      %1518 = vmatprep.subr.mxu0 0.0
      %1519 = vmatpush1.msra.mxu0 %v1491
      %1520 = vmatprep.subr.mxu0 0.0
      %1521 = vmatpush1.msra.mxu0 %v1492
      %1522 = vmatprep.subr.mxu0 0.0
      %1523 = vmatpush1.msra.mxu0 %v1493
      %1524 = vmatprep.subr.mxu0 0.0
      %1525 = vmatpush1.msra.mxu0 %v1494
      %1526 = vmatprep.subr.mxu0 0.0
      %1527 = vmatpush1.msra.mxu0 %v1495
      %1528 = vmatprep.subr.mxu0 0.0
      %1529 = vmatpush1.msra.mxu0 0.0
      %1530 = vmatprep.subr.mxu0 0.0
      %1531 = vmatpush1.msra.mxu0 0.0
      %1532 = vmatprep.subr.mxu0 0.0
      %1533 = vmatpush1.msra.mxu0 0.0
      %1534 = vmatprep.subr.mxu0 0.0
      %1535 = vmatpush1.msra.mxu0 0.0
      %1536 = vmatprep.subr.mxu0 0.0
      %1537 = vmatpush1.msra.mxu0 0.0
      %1538 = vmatprep.subr.mxu0 0.0
      %1539 = vmatpush1.msra.mxu0 0.0
      %1540 = vmatprep.subr.mxu0 0.0
      %1541 = vmatpush1.msra.mxu0 0.0
      %1542 = vmatprep.subr.mxu0 0.0
      %1543 = vmatpush1.msra.mxu0 0.0
      %1544 = vmatprep.subr.mxu0 0.0
      %1545 = vmatpush1.msra.mxu0 0.0
      %1546 = vmatprep.subr.mxu0 0.0
      %1547 = vmatpush1.msra.mxu0 0.0
      %1548 = vmatprep.subr.mxu0 0.0
      %1549 = vmatpush1.msra.mxu0 0.0
      %1550 = vmatprep.subr.mxu0 0.0
      %1551 = vmatpush1.msra.mxu0 0.0
      %1552 = vmatprep.subr.mxu0 0.0
      %1553 = vmatpush1.msra.mxu0 0.0
      %1554 = vmatprep.subr.mxu0 0.0
      %1555 = vmatpush1.msra.mxu0 0.0
      %1556 = vmatprep.subr.mxu0 0.0
      %1557 = vmatpush1.msra.mxu0 0.0
      %1558 = vmatprep.subr.mxu0 0.0
      %1559 = vmatpush1.msra.mxu0 0.0
      %1560 = vmatprep.mubr.f32.mxu0 0.0
      %1561 = vmatmul.mubr.f32.gmra.mrb[0].mxu0 %v655
      %v1562 = vpop.f32.mrb[0].mxu0
      %v1563 = vadd.f32 0.0, %v1562
      %v1564 = vpop.f32.mrb[0].mxu0
      %1565 = vmatprep.mubr.f32.mxu0 0.0
      %1566 = vmatmul.mubr.f32.gmra.mrb[0].mxu0 %v658
      %v1567 = vpop.f32.mrb[0].mxu0
      %v1568 = vadd.f32 0.0, %v1567
      %v1569 = vpop.f32.mrb[0].mxu0
      %1570 = vmatprep.mubr.f32.mxu0 0.0
      %1571 = vmatmul.mubr.f32.gmra.mrb[0].mxu0 %v661
      %v1572 = vpop.f32.mrb[0].mxu0
      %v1573 = vadd.f32 0.0, %v1572
      %v1574 = vpop.f32.mrb[0].mxu0
      %1575 = vmatprep.mubr.f32.mxu0 0.0
      %1576 = vmatmul.mubr.f32.gmra.mrb[0].mxu0 %v664
      %v1577 = vpop.f32.mrb[0].mxu0
      %v1578 = vadd.f32 0.0, %v1577
      %v1579 = vpop.f32.mrb[0].mxu0
      %1580 = vmatprep.mubr.f32.mxu0 0.0
      %1581 = vmatmul.mubr.f32.gmra.mrb[0].mxu0 %v667
      %v1582 = vpop.f32.mrb[0].mxu0
      %v1583 = vadd.f32 0.0, %v1582
      %v1584 = vpop.f32.mrb[0].mxu0
      %1585 = vmatprep.mubr.f32.mxu0 0.0
      %1586 = vmatmul.mubr.f32.gmra.mrb[0].mxu0 %v670
      %v1587 = vpop.f32.mrb[0].mxu0
      %v1588 = vadd.f32 0.0, %v1587
      %v1589 = vpop.f32.mrb[0].mxu0
      %1590 = vmatprep.mubr.f32.mxu0 0.0
      %1591 = vmatmul.mubr.f32.gmra.mrb[0].mxu0 %v1077
      %v1592 = vpop.f32.mrb[0].mxu0
      %v1593 = vadd.f32 0.0, %v1592
      %v1594 = vpop.f32.mrb[0].mxu0
      %1595 = vmatprep.mubr.f32.mxu0 0.0
      %1596 = vmatmul.mubr.f32.gmra.mrb[0].mxu0 %v1477
      %v1597 = vpop.f32.mrb[0].mxu0
      %v1598 = vadd.f32 0.0, %v1597
      %v1599 = vpop.f32.mrb[0].mxu0
      %1600 = vdwg.mxu0
      %v1601 = vadd.f32 %v1467, %v1563
      %v1602 = vadd.f32 %v1468, %v1568
      %v1603 = vadd.f32 %v1469, %v1573
      %v1604 = vadd.f32 %v1470, %v1578
      %v1605 = vadd.f32 %v1471, %v1583
      %v1606 = vadd.f32 %v1472, %v1588
      %v1607 = vadd.f32 %v1473, %v1593
      %v1608 = vadd.f32 %v1474, %v1598
      %1609 = vst [vmem:[%s246] sm:$0xff] %v1601
      %1610 = vst [vmem:[%s246 + $0x8] sm:$0xff] %v1602
      %1611 = vst [vmem:[%s246 + $0x10] sm:$0xff] %v1603
      %1612 = vst [vmem:[%s246 + $0x18] sm:$0xff] %v1604
      %1613 = vst [vmem:[%s246 + $0x20] sm:$0xff] %v1605
      %1614 = vst [vmem:[%s246 + $0x28] sm:$0xff] %v1606
      %1615 = vst [vmem:[%s246 + $0x30] sm:$0xff] %v1607
      %1616 = vst [vmem:[%s246 + $0x38] sm:$0xff] %v1608
      %v1617 = vld [vmem:[%s5] sm:$0x1]
      %v1618 = vadd.f32 %v1601, %v1602
      %v1619 = vadd.f32 %v1618, %v1603
      %v1620 = vadd.f32 %v1619, %v1604
      %v1621 = vadd.f32 %v1620, %v1605
      %v1622 = vadd.f32 %v1621, %v1606
      %v1623 = vadd.f32 %v1622, %v1607
      %v1624 = vadd.f32 %v1623, %v1608
      %v1625 = vrot.slane %v1624, 4
      %v1626 = vadd.f32 %v1624, %v1625
      %v1627 = vrot.slane %v1626, 2
      %v1628 = vadd.f32 %v1626, %v1627
      %v1629 = vrot.slane %v1628, 1
      %v1630 = vadd.f32 %v1628, %v1629
      %v1631 = vadd.f32 %v1617, %v1630
      %1632 = vst [vmem:[%s5] sm:$0x1] %v1631
      %v1633 = vld [vmem:[%s6] sm:$0x1]
      %v1634 = vmul.f32 %v1601, %v1601
      %v1635 = vmul.f32 %v1602, %v1602
      %v1636 = vmul.f32 %v1603, %v1603
      %v1637 = vmul.f32 %v1604, %v1604
      %v1638 = vmul.f32 %v1605, %v1605
      %v1639 = vmul.f32 %v1606, %v1606
      %v1640 = vmul.f32 %v1607, %v1607
      %v1641 = vmul.f32 %v1608, %v1608
      %v1642 = vadd.f32 %v1634, %v1635
      %v1643 = vadd.f32 %v1642, %v1636
      %v1644 = vadd.f32 %v1643, %v1637
      %v1645 = vadd.f32 %v1644, %v1638
      %v1646 = vadd.f32 %v1645, %v1639
      %v1647 = vadd.f32 %v1646, %v1640
      %v1648 = vadd.f32 %v1647, %v1641
      %v1649 = vrot.slane %v1648, 4
      %v1650 = vadd.f32 %v1648, %v1649
      %v1651 = vrot.slane %v1650, 2
      %v1652 = vadd.f32 %v1650, %v1651
      %v1653 = vrot.slane %v1652, 1
      %v1654 = vadd.f32 %v1652, %v1653
      %v1655 = vadd.f32 %v1633, %v1654
      %1656 = vst [vmem:[%s6] sm:$0x1] %v1655
      %p1657 = scmp.lt.s32.totalorder %s18, 1
      %s1658 = scalar_select %p1657, %s18, 1
      %s1659 = smul.addr %s1658, 8
      %s1660 = smul.addr %s1659, 8
      %s1661 = scalar_lea.vmem %s4, %s1660
      // Predicated region
      $region41: #{residual_block.4} parent=35 // pred_check
        %p1662 = pneg %p125
      $region42: #{residual_block.4} parent=35 // pred_check_branch
        %1664 = sbr.rel (%p1662) target = $region44
      $region43: #{residual_block.4} parent=35 // pred_region
        _
      $region44: #{residual_block.4} parent=35 // pred_fallthru
        _
      // Predicated region
      $region45: #{residual_block.4} parent=35 // pred_check
        %p1665 = pneg %p146
      $region46: #{residual_block.4} parent=35 // pred_check_branch
        %1667 = sbr.rel (%p1665) target = $region48
      $region47: #{residual_block.4} parent=35 // pred_region
        _
      $region48: #{residual_block.4} parent=35 // pred_fallthru
        _
      // Predicated region
      $region49: #{residual_block.4} parent=35 // pred_check
        %p1668 = pneg %p167
      $region50: #{residual_block.4} parent=35 // pred_check_branch
        %1670 = sbr.rel (%p1668) target = $region52
      $region51: #{residual_block.4} parent=35 // pred_region
        _
      $region52: #{residual_block.4} parent=35 // pred_fallthru
        _
      // Predicated region
      $region53: #{residual_block.4} parent=35 // pred_check
        %p1671 = pneg %p146
      $region54: #{residual_block.4} parent=35 // pred_check_branch
        %1673 = sbr.rel (%p1671) target = $region56
      $region55: #{residual_block.4} parent=35 // pred_region
        _
      $region56: #{residual_block.4} parent=35 // pred_fallthru
        _
      // Predicated region
      $region57: #{residual_block.4} parent=35 // pred_check
        %p1674 = pneg %p167
      $region58: #{residual_block.4} parent=35 // pred_check_branch
        %1676 = sbr.rel (%p1674) target = $region60
      $region59: #{residual_block.4} parent=35 // pred_region
        _
      $region60: #{residual_block.4} parent=35 // pred_fallthru
        _
    $region36: #{residual_block.4} parent=5 // pred_fallthru
      _
    %p1677 = scmp.le.s32.totalorder 2, %s13
    // Predicated region
    $region61: #{residual_block.4} parent=5 // pred_check
      %p1678 = pneg %p1677
    $region62: #{residual_block.4} parent=5 // pred_check_branch
      %1680 = sbr.rel (%p1678) target = $region64
    $region63: #{residual_block.4} parent=5 // pred_region
      %s1681 = ssub.s32 %s13, 2
      // Predicated region
      $region65: #{residual_block.4} parent=63 // pred_check
        %p1682 = pneg %p131
      $region66: #{residual_block.4} parent=63 // pred_check_branch
        %1684 = sbr.rel (%p1682) target = $region68
      $region67: #{residual_block.4} parent=63 // pred_region
        %p1685 = scmp.lt.s32.totalorder %s19, 1
        %s1686 = scalar_select %p1685, %s19, 1
        %s1687 = smul.addr %s1686, 8
        %s1688 = smul.addr %s1687, 8
        %s1689 = scalar_lea.vmem %s4, %s1688
      $region68: #{residual_block.4} parent=63 // pred_fallthru
        _
    $region64: #{residual_block.4} parent=5 // pred_fallthru
      _
  $region6: #{residual_block.4} parent=0 // loop_footer
    %s17 = sadd.s32 1, %s13
  $region7: #{residual_block.4} parent=0 // loop_footer_branch
    %12 = sbr.rel target = $region3
  $region8: #{residual_block.4} parent=0 // loop_exit
    _

</llo_original>
